<compile_context>
chip_gen: v7x
topology: tpu7x:2x2x1
jax: 0.10.0
libtpu: 0.0.40
codegen_flags: <defaults>
</compile_context>

<pallas_src>
import functools

import jax
import jax.numpy as jnp
from jax import lax
from jax.experimental import pallas as pl
from jax.experimental.pallas import tpu as pltpu

_SELU_ALPHA = 1.6732632423543772848170429916717
_SELU_SCALE = 1.0507009873554804934193349852946
_NEG = -1e30  # "-inf" substitute; exp underflows to exactly 0 after max-sub


def _selu(x):
    # exp only evaluated on the clamped branch to stay numerically safe
    return _SELU_SCALE * jnp.where(
        x > 0, x, _SELU_ALPHA * (jnp.exp(jnp.minimum(x, 0.0)) - 1.0))


# ----------------------------------------------------------------------------
# fused encoder kernel: one grid step = one batch group; layers loop in-kernel
# ----------------------------------------------------------------------------
def _encoder_kernel(node_ref, edge_ref, emask_ref, nmask_ref, bias_ref,
                    noise_ref, hmask_ref,
                    emb_ref, wf_ref, bf_ref, wwh_ref, wwh1_ref, bw_ref,
                    wqkv_ref, wmusig_ref,
                    z_ref,
                    *, n_batch, n_atom, channel, num_head, n_layer,
                    temperature):
    rows = n_batch * n_atom
    inv_t = jnp.float32(1.0 / temperature)

    # batch-group tensors, loaded once for the whole layer sweep
    edge = edge_ref[...]                     # (rows*n_a, n_e_pad)
    emask = emask_ref[...]                   # (rows*n_a, c)
    nmask = nmask_ref[...]                   # (rows, c)
    bias = bias_ref[0]                       # (rows, rows) additive
    hm = hmask_ref[...]                      # (H, c) 0/1 per-head column masks

    # ---- embedding (f32 matmul, f32 accumulation)
    h0 = jnp.dot(node_ref[...], emb_ref[...],
                 preferred_element_type=jnp.float32)          # (rows, c)

    def layer_body(l, h):
        # ---- GraphEncoder: ef = SELU(e @ Wf + bf) * edge_mask (flat matmul)
        ef = jnp.dot(edge, wf_ref[l],
                     preferred_element_type=jnp.float32) + bf_ref[l]
        ef = _selu(ef) * emask                                # (rows*n_a, c)
        ef4 = ef.reshape(n_batch, n_atom, n_atom, channel)
        h3 = h.reshape(n_batch, n_atom, channel)
        # h1[b,i,f] = sum_j h[b,j,f] * ef[b,i,j,f]
        h1 = jnp.sum(ef4 * h3[:, None, :, :], axis=2).reshape(rows, channel)

        # cat([h, h1]) @ Ww  ==  h @ Ww_h + h1 @ Ww_h1  (no lane concat)
        pre = (jnp.dot(h, wwh_ref[l], preferred_element_type=jnp.float32)
               + jnp.dot(h1, wwh1_ref[l], preferred_element_type=jnp.float32)
               + bw_ref[l])
        hg = _selu(pre) * nmask + h                           # (rows, c)

        # ---- EncoderAttention: fused QKV matmul, per-head masked operands
        qkv = jnp.dot(hg, wqkv_ref[l], preferred_element_type=jnp.float32)
        q = qkv[:, :channel]
        k = qkv[:, channel:2 * channel]
        v = qkv[:, 2 * channel:]

        out = jnp.zeros((rows, channel), jnp.float32)
        for hh in range(num_head):                            # H is small
            m = hm[hh:hh + 1, :]                              # (1, c)
            # (q*m) @ k^T without an explicit transpose (contract dim 1 x 1)
            s = lax.dot_general(q * m, k, (((1,), (1,)), ((), ())),
                                preferred_element_type=jnp.float32)
            s = s * inv_t + bias
            p = jnp.exp(s - jnp.max(s, axis=-1, keepdims=True))
            alpha = p / jnp.sum(p, axis=-1, keepdims=True)
            out = out + jnp.dot(alpha, v * m,
                                preferred_element_type=jnp.float32)
        return out + hg                                       # residual

    h = lax.fori_loop(0, n_layer, layer_body, h0, unroll=True)

    # ---- latent head (fused mu|log-sigma matmul)
    musig = jnp.dot(h, wmusig_ref[...], preferred_element_type=jnp.float32)
    mu = musig[:, :channel]
    sigma = jnp.exp(musig[:, channel:])
    z_ref[...] = (mu + sigma * noise_ref[...]) * nmask
    # TODO(synk): training-time KL statistic (self.kl) is a module side effect,
    # not a forward output; not reproduced (inference semantics).


# ----------------------------------------------------------------------------
# wrapper: mask construction + layout prep (cheap JAX glue) + one pallas_call
# ----------------------------------------------------------------------------
def encoder_forward(params, node, edge, noise, *, num_head, temperature_coeff,
                    batch_block=None):
    n_b, n_a, node_feat = node.shape
    n_e = edge.shape[-1]
    channel = params["embedding"].shape[1]
    n_layer = params["wf"].shape[0]
    assert channel % num_head == 0
    d = channel // num_head
    temperature = float((temperature_coeff * d) ** 0.5)

    # fold as many batches as fit rows = B*n_a <= 128 (lane/sublane-dense work)
    if batch_block is None:
        batch_block = 1
        for cand in range(1, n_b + 1):
            if n_b % cand == 0 and cand * n_a <= 128:
                batch_block = cand
    B = batch_block
    assert n_b % B == 0, "n_b must be divisible by batch_block"
    G = n_b // B
    rows = B * n_a

    # masks from the raw f32 inputs (matches the PyTorch module exactly)
    node_mask = (jnp.sum(node, -1) != 0).astype(jnp.float32)[:, :, None]
    edge_mask = (jnp.sum(edge, -1) != 0).astype(jnp.float32)[:, :, :, None]
    attn_mask = (node_mask + jnp.swapaxes(node_mask, 1, 2)) == 1.0
    adjacency = edge_mask[..., 0]

    # additive attention bias: adjacency + (-1e30 where masked), arranged as a
    # block-diagonal (rows x rows) matrix per batch group (off-diag = -1e30,
    # so folded batches never attend to each other).
    bias = adjacency + jnp.where(attn_mask, jnp.float32(_NEG), jnp.float32(0.0))
    bias_g = bias.reshape(G, B, n_a, n_a)
    same_b = (jnp.arange(B)[:, None, None, None]
              == jnp.arange(B)[None, None, :, None])          # (B,1,B,1)
    bias_big = jnp.where(same_b, bias_g[:, :, :, None, :], jnp.float32(_NEG))
    bias_big = bias_big.reshape(G, rows, rows)

    # per-head 0/1 column masks (H, c)
    head_mask = (jnp.arange(channel)[None, :] // d
                 == jnp.arange(num_head)[:, None]).astype(jnp.float32)

    # pad feature dims (62->64, 30->32); matching weight rows zero-padded so
    # results are unchanged.  Masks pre-broadcast to channel width.
    nf_pad = -(-node_feat // 8) * 8
    ne_pad = -(-n_e // 8) * 8
    node_f = jnp.pad(node, ((0, 0), (0, 0), (0, nf_pad - node_feat)))
    node_f = node_f.reshape(n_b * n_a, nf_pad).astype(jnp.float32)
    edge_f = jnp.pad(edge, ((0, 0), (0, 0), (0, 0), (0, ne_pad - n_e)))
    edge_f = edge_f.reshape(n_b * n_a * n_a, ne_pad).astype(jnp.float32)
    emb_p = jnp.pad(params["embedding"], ((0, nf_pad - node_feat), (0, 0)))
    wf_p = jnp.pad(params["wf"], ((0, 0), (0, ne_pad - n_e), (0, 0)))

    emask_f = jnp.broadcast_to(edge_mask, (n_b, n_a, n_a, channel)
                               ).reshape(n_b * n_a * n_a, channel)
    nmask_f = jnp.broadcast_to(node_mask, (n_b, n_a, channel)
                               ).reshape(n_b * n_a, channel)
    noise_f = noise.reshape(n_b * n_a, channel).astype(jnp.float32)

    kern = functools.partial(
        _encoder_kernel, n_batch=B, n_atom=n_a, channel=channel,
        num_head=num_head, n_layer=n_layer, temperature=temperature)

    grp2 = lambda g: (g, 0)
    grp3 = lambda g: (g, 0, 0)
    one2 = lambda g: (0, 0)
    one3 = lambda g: (0, 0, 0)

    z_flat = pl.pallas_call(
        kern,
        out_shape=jax.ShapeDtypeStruct((n_b * n_a, channel), jnp.float32),
        grid_spec=pltpu.PrefetchScalarGridSpec(
            num_scalar_prefetch=0,
            grid=(G,),
            in_specs=[
                pl.BlockSpec((rows, nf_pad), grp2),                 # node
                pl.BlockSpec((rows * n_a, ne_pad), grp2),           # edge
                pl.BlockSpec((rows * n_a, channel), grp2),          # edge mask
                pl.BlockSpec((rows, channel), grp2),                # node mask
                pl.BlockSpec((1, rows, rows), grp3),                # attn bias
                pl.BlockSpec((rows, channel), grp2),                # noise
                pl.BlockSpec((num_head, channel), one2),            # head masks
                pl.BlockSpec((nf_pad, channel), one2),              # embedding
                pl.BlockSpec((n_layer, ne_pad, channel), one3),     # wf
                pl.BlockSpec((n_layer, 1, channel), one3),          # bf
                pl.BlockSpec((n_layer, channel, channel), one3),    # ww (h)
                pl.BlockSpec((n_layer, channel, channel), one3),    # ww (h1)
                pl.BlockSpec((n_layer, 1, channel), one3),          # bw
                pl.BlockSpec((n_layer, channel, 3 * channel), one3),  # wqkv
                pl.BlockSpec((channel, 2 * channel), one2),         # wmu|wsig
            ],
            out_specs=pl.BlockSpec((rows, channel), grp2),
        ),
        compiler_params=pltpu.CompilerParams(
            dimension_semantics=("parallel",),
            vmem_limit_bytes=32 * 1024 * 1024),
    )(node_f, edge_f, emask_f, nmask_f, bias_big, noise_f, head_mask,
      emb_p, wf_p, params["bf"], params["ww_h"], params["ww_h1"],
      params["bw"], params["wqkv"], params["wmusig"])

    return z_flat.reshape(n_b, n_a, channel), node_mask


# ----------------------------------------------------------------------------
# deterministic synthetic parameters.  PyTorch Linear weights are (out, in);
# here they are stored pre-transposed as (in, out), stacked over layers; the
# (2c, c) graph weight is pre-split into h / h1 halves, q/k/v are pre-fused
# into one (c, 3c) matrix, and mu/sigma into one (c, 2c) matrix.  All f32.
# ----------------------------------------------------------------------------
def init_params(key, channel, n_layer, node_feat=62, edge_feat=30):
    ks = jax.random.split(key, 6)

    def w(k, shape, fan_in):
        return jax.random.normal(k, shape, jnp.float32) / jnp.sqrt(fan_in)

    return {
        "embedding": w(ks[0], (node_feat, channel), node_feat),
        "wf": w(ks[1], (n_layer, edge_feat, channel), edge_feat),
        "bf": jnp.full((n_layer, 1, channel), 0.01, jnp.float32),
        "ww_h": w(ks[2], (n_layer, channel, channel), 2 * channel),
        "ww_h1": w(ks[3], (n_layer, channel, channel), 2 * channel),
        "bw": jnp.full((n_layer, 1, channel), 0.01, jnp.float32),
        "wqkv": w(ks[4], (n_layer, channel, 3 * channel), channel),
        "wmusig": w(ks[5], (channel, 2 * channel), channel),
    }


if __name__ == "__main__":
    key = jax.random.PRNGKey(0)
    n_b, n_a, channel, num_head, n_layer = 4, 8, 32, 4, 2
    k_node, k_edge, k_noise, k_param = jax.random.split(key, 4)

    node = jax.random.normal(k_node, (n_b, n_a, 62), jnp.float32)
    edge = jax.random.normal(k_edge, (n_b, n_a, n_a, 30), jnp.float32)
    # introduce padded atoms (zero rows/cols) so the masks are non-trivial
    for b, v in enumerate([6, 7, 5, 8]):
        node = node.at[b, v:].set(0.0)
        edge = edge.at[b, v:].set(0.0)
        edge = edge.at[b, :, v:].set(0.0)

    noise = jax.random.normal(k_noise, (n_b, n_a, channel), jnp.float32)
    params = init_params(k_param, channel, n_layer)

    fwd = jax.jit(functools.partial(
        encoder_forward, num_head=num_head, temperature_coeff=2.0))
    z, node_mask = fwd(params, node, edge, noise)
    jax.block_until_ready((z, node_mask))

    assert z.shape == (n_b, n_a, channel)
    assert node_mask.shape == (n_b, n_a, 1)
    assert bool(jnp.all(jnp.isfinite(z)))
    print("KERNEL_OK")
</pallas_src>

<mosaic_0001>
module attributes {stable_mosaic.version = 11 : i64} {
  func.func @_encoder_kernel(%arg0: i32, %arg1: memref<32x64xf32, #tpu.memory_space<vmem>>, %arg2: memref<256x32xf32, #tpu.memory_space<vmem>>, %arg3: memref<256x32xf32, #tpu.memory_space<vmem>>, %arg4: memref<32x32xf32, #tpu.memory_space<vmem>>, %arg5: memref<1x32x32xf32, #tpu.memory_space<vmem>>, %arg6: memref<32x32xf32, #tpu.memory_space<vmem>>, %arg7: memref<4x32xf32, #tpu.memory_space<vmem>>, %arg8: memref<64x32xf32, #tpu.memory_space<vmem>>, %arg9: memref<2x32x32xf32, #tpu.memory_space<vmem>>, %arg10: memref<2x1x32xf32, #tpu.memory_space<vmem>>, %arg11: memref<2x32x32xf32, #tpu.memory_space<vmem>>, %arg12: memref<2x32x32xf32, #tpu.memory_space<vmem>>, %arg13: memref<2x1x32xf32, #tpu.memory_space<vmem>>, %arg14: memref<2x32x96xf32, #tpu.memory_space<vmem>>, %arg15: memref<32x64xf32, #tpu.memory_space<vmem>>, %arg16: memref<32x32xf32, #tpu.memory_space<vmem>>) attributes {dimension_semantics = [#tpu.dimension_semantics<parallel>], iteration_bounds = array<i64: 1>, scalar_prefetch = 0 : i64, scratch_operands = 0 : i64, tpu.core_type = #tpu.core_type<tc>, window_params = [{transform_indices = @transform_0, window_bounds = array<i64: 32, 64>}, {transform_indices = @transform_1, window_bounds = array<i64: 256, 32>}, {transform_indices = @transform_2, window_bounds = array<i64: 256, 32>}, {transform_indices = @transform_3, window_bounds = array<i64: 32, 32>}, {transform_indices = @transform_4, window_bounds = array<i64: 1, 32, 32>}, {transform_indices = @transform_5, window_bounds = array<i64: 32, 32>}, {pipeline_mode = #tpu.pipeline_mode<synchronous>, transform_indices = @transform_6, window_bounds = array<i64: 4, 32>}, {pipeline_mode = #tpu.pipeline_mode<synchronous>, transform_indices = @transform_7, window_bounds = array<i64: 64, 32>}, {pipeline_mode = #tpu.pipeline_mode<synchronous>, transform_indices = @transform_8, window_bounds = array<i64: 2, 32, 32>}, {pipeline_mode = #tpu.pipeline_mode<synchronous>, transform_indices = @transform_9, window_bounds = array<i64: 2, 1, 32>}, {pipeline_mode = #tpu.pipeline_mode<synchronous>, transform_indices = @transform_10, window_bounds = array<i64: 2, 32, 32>}, {pipeline_mode = #tpu.pipeline_mode<synchronous>, transform_indices = @transform_11, window_bounds = array<i64: 2, 32, 32>}, {pipeline_mode = #tpu.pipeline_mode<synchronous>, transform_indices = @transform_12, window_bounds = array<i64: 2, 1, 32>}, {pipeline_mode = #tpu.pipeline_mode<synchronous>, transform_indices = @transform_13, window_bounds = array<i64: 2, 32, 96>}, {pipeline_mode = #tpu.pipeline_mode<synchronous>, transform_indices = @transform_14, window_bounds = array<i64: 32, 64>}, {transform_indices = @transform_15, window_bounds = array<i64: 32, 32>}]} {
    %c0 = arith.constant 0 : index
    %c0_0 = arith.constant 0 : index
    %0 = vector.load %arg2[%c0, %c0_0] : memref<256x32xf32, #tpu.memory_space<vmem>>, vector<256x32xf32>
    %c0_1 = arith.constant 0 : index
    %c0_2 = arith.constant 0 : index
    %1 = vector.load %arg3[%c0_1, %c0_2] : memref<256x32xf32, #tpu.memory_space<vmem>>, vector<256x32xf32>
    %c0_3 = arith.constant 0 : index
    %c0_4 = arith.constant 0 : index
    %2 = vector.load %arg4[%c0_3, %c0_4] : memref<32x32xf32, #tpu.memory_space<vmem>>, vector<32x32xf32>
    %c0_5 = arith.constant 0 : index
    %c0_6 = arith.constant 0 : index
    %c0_7 = arith.constant 0 : index
    %3 = vector.load %arg5[%c0_5, %c0_6, %c0_7] : memref<1x32x32xf32, #tpu.memory_space<vmem>>, vector<1x32x32xf32>
    %4 = vector.shape_cast %3 : vector<1x32x32xf32> to vector<32x32xf32>
    %c0_8 = arith.constant 0 : index
    %c0_9 = arith.constant 0 : index
    %5 = vector.load %arg7[%c0_8, %c0_9] : memref<4x32xf32, #tpu.memory_space<vmem>>, vector<4x32xf32>
    %c0_10 = arith.constant 0 : index
    %c0_11 = arith.constant 0 : index
    %6 = vector.load %arg1[%c0_10, %c0_11] : memref<32x64xf32, #tpu.memory_space<vmem>>, vector<32x64xf32>
    %c0_12 = arith.constant 0 : index
    %c0_13 = arith.constant 0 : index
    %7 = vector.load %arg8[%c0_12, %c0_13] : memref<64x32xf32, #tpu.memory_space<vmem>>, vector<64x32xf32>
    %cst = arith.constant dense<0.000000e+00> : vector<32x32xf32>
    %8 = tpu.matmul %6, %7, %cst {dimension_numbers = #tpu.dot_dimension_numbers<[1], [0], [0], [1], [0, 0, 1, 1], [], []>} : vector<32x64xf32>, vector<64x32xf32>, vector<32x32xf32> -> vector<32x32xf32>
    %cst_14 = arith.constant 2.500000e-01 : f32
    %c0_i32 = arith.constant 0 : i32
    %9 = arith.index_cast %c0_i32 : i32 to index
    %c0_15 = arith.constant 0 : index
    %c0_16 = arith.constant 0 : index
    %10 = vector.load %arg9[%9, %c0_15, %c0_16] : memref<2x32x32xf32, #tpu.memory_space<vmem>>, vector<1x32x32xf32>
    %11 = vector.shape_cast %10 : vector<1x32x32xf32> to vector<32x32xf32>
    %cst_17 = arith.constant dense<0.000000e+00> : vector<256x32xf32>
    %12 = tpu.matmul %0, %11, %cst_17 {dimension_numbers = #tpu.dot_dimension_numbers<[1], [0], [0], [1], [0, 0, 1, 1], [], []>} : vector<256x32xf32>, vector<32x32xf32>, vector<256x32xf32> -> vector<256x32xf32>
    %13 = arith.index_cast %c0_i32 : i32 to index
    %c0_18 = arith.constant 0 : index
    %c0_19 = arith.constant 0 : index
    %14 = vector.load %arg10[%13, %c0_18, %c0_19] : memref<2x1x32xf32, #tpu.memory_space<vmem>>, vector<1x1x32xf32>
    %15 = vector.shape_cast %14 : vector<1x1x32xf32> to vector<1x32xf32>
    %16 = vector.broadcast %15 : vector<1x32xf32> to vector<256x32xf32>
    %17 = arith.addf %12, %16 : vector<256x32xf32>
    %cst_20 = arith.constant 0.000000e+00 : f32
    %18 = vector.broadcast %cst_20 : f32 to vector<256x32xf32>
    %19 = arith.cmpf ogt, %17, %18 : vector<256x32xf32>
    %cst_21 = arith.constant 0.000000e+00 : f32
    %20 = vector.broadcast %cst_21 : f32 to vector<256x32xf32>
    %21 = arith.minimumf %17, %20 : vector<256x32xf32>
    %22 = math.exp %21 : vector<256x32xf32>
    %cst_22 = arith.constant 1.000000e+00 : f32
    %23 = vector.broadcast %cst_22 : f32 to vector<256x32xf32>
    %24 = arith.subf %22, %23 : vector<256x32xf32>
    %cst_23 = arith.constant 1.67326319 : f32
    %25 = vector.broadcast %cst_23 : f32 to vector<256x32xf32>
    %26 = arith.mulf %25, %24 : vector<256x32xf32>
    %27 = arith.select %19, %17, %26 : vector<256x32xi1>, vector<256x32xf32>
    %cst_24 = arith.constant 1.05070102 : f32
    %28 = vector.broadcast %cst_24 : f32 to vector<256x32xf32>
    %29 = arith.mulf %28, %27 : vector<256x32xf32>
    %30 = arith.mulf %29, %1 : vector<256x32xf32>
    %31 = vector.shape_cast %30 : vector<256x32xf32> to vector<4x8x8x32xf32>
    %32 = vector.shape_cast %8 : vector<32x32xf32> to vector<4x8x32xf32>
    %33 = vector.shape_cast %32 : vector<4x8x32xf32> to vector<4x1x8x32xf32>
    %34 = vector.broadcast %33 : vector<4x1x8x32xf32> to vector<4x8x8x32xf32>
    %35 = arith.mulf %31, %34 : vector<4x8x8x32xf32>
    %cst_25 = arith.constant dense<0.000000e+00> : vector<4x8x32xf32>
    %36 = vector.multi_reduction <add>, %35, %cst_25 [2] : vector<4x8x8x32xf32> to vector<4x8x32xf32>
    %37 = vector.shape_cast %36 : vector<4x8x32xf32> to vector<32x32xf32>
    %38 = arith.index_cast %c0_i32 : i32 to index
    %c0_26 = arith.constant 0 : index
    %c0_27 = arith.constant 0 : index
    %39 = vector.load %arg11[%38, %c0_26, %c0_27] : memref<2x32x32xf32, #tpu.memory_space<vmem>>, vector<1x32x32xf32>
    %40 = vector.shape_cast %39 : vector<1x32x32xf32> to vector<32x32xf32>
    %cst_28 = arith.constant dense<0.000000e+00> : vector<32x32xf32>
    %41 = tpu.matmul %8, %40, %cst_28 {dimension_numbers = #tpu.dot_dimension_numbers<[1], [0], [0], [1], [0, 0, 1, 1], [], []>} : vector<32x32xf32>, vector<32x32xf32>, vector<32x32xf32> -> vector<32x32xf32>
    %42 = arith.index_cast %c0_i32 : i32 to index
    %c0_29 = arith.constant 0 : index
    %c0_30 = arith.constant 0 : index
    %43 = vector.load %arg12[%42, %c0_29, %c0_30] : memref<2x32x32xf32, #tpu.memory_space<vmem>>, vector<1x32x32xf32>
    %44 = vector.shape_cast %43 : vector<1x32x32xf32> to vector<32x32xf32>
    %cst_31 = arith.constant dense<0.000000e+00> : vector<32x32xf32>
    %45 = tpu.matmul %37, %44, %cst_31 {dimension_numbers = #tpu.dot_dimension_numbers<[1], [0], [0], [1], [0, 0, 1, 1], [], []>} : vector<32x32xf32>, vector<32x32xf32>, vector<32x32xf32> -> vector<32x32xf32>
    %46 = arith.addf %41, %45 : vector<32x32xf32>
    %47 = arith.index_cast %c0_i32 : i32 to index
    %c0_32 = arith.constant 0 : index
    %c0_33 = arith.constant 0 : index
    %48 = vector.load %arg13[%47, %c0_32, %c0_33] : memref<2x1x32xf32, #tpu.memory_space<vmem>>, vector<1x1x32xf32>
    %49 = vector.shape_cast %48 : vector<1x1x32xf32> to vector<1x32xf32>
    %50 = vector.broadcast %49 : vector<1x32xf32> to vector<32x32xf32>
    %51 = arith.addf %46, %50 : vector<32x32xf32>
    %cst_34 = arith.constant 0.000000e+00 : f32
    %52 = vector.broadcast %cst_34 : f32 to vector<32x32xf32>
    %53 = arith.cmpf ogt, %51, %52 : vector<32x32xf32>
    %cst_35 = arith.constant 0.000000e+00 : f32
    %54 = vector.broadcast %cst_35 : f32 to vector<32x32xf32>
    %55 = arith.minimumf %51, %54 : vector<32x32xf32>
    %56 = math.exp %55 : vector<32x32xf32>
    %cst_36 = arith.constant 1.000000e+00 : f32
    %57 = vector.broadcast %cst_36 : f32 to vector<32x32xf32>
    %58 = arith.subf %56, %57 : vector<32x32xf32>
    %cst_37 = arith.constant 1.67326319 : f32
    %59 = vector.broadcast %cst_37 : f32 to vector<32x32xf32>
    %60 = arith.mulf %59, %58 : vector<32x32xf32>
    %61 = arith.select %53, %51, %60 : vector<32x32xi1>, vector<32x32xf32>
    %cst_38 = arith.constant 1.05070102 : f32
    %62 = vector.broadcast %cst_38 : f32 to vector<32x32xf32>
    %63 = arith.mulf %62, %61 : vector<32x32xf32>
    %64 = arith.mulf %63, %2 : vector<32x32xf32>
    %65 = arith.addf %64, %8 : vector<32x32xf32>
    %66 = arith.index_cast %c0_i32 : i32 to index
    %c0_39 = arith.constant 0 : index
    %c0_40 = arith.constant 0 : index
    %67 = vector.load %arg14[%66, %c0_39, %c0_40] : memref<2x32x96xf32, #tpu.memory_space<vmem>>, vector<1x32x96xf32>
    %68 = vector.shape_cast %67 : vector<1x32x96xf32> to vector<32x96xf32>
    %cst_41 = arith.constant dense<0.000000e+00> : vector<32x96xf32>
    %69 = tpu.matmul %65, %68, %cst_41 {dimension_numbers = #tpu.dot_dimension_numbers<[1], [0], [0], [1], [0, 0, 1, 1], [], []>} : vector<32x32xf32>, vector<32x96xf32>, vector<32x96xf32> -> vector<32x96xf32>
    %70 = vector.extract_strided_slice %69 {offsets = [0, 0], sizes = [32, 32], strides = [1, 1]} : vector<32x96xf32> to vector<32x32xf32>
    %71 = vector.extract_strided_slice %69 {offsets = [0, 32], sizes = [32, 32], strides = [1, 1]} : vector<32x96xf32> to vector<32x32xf32>
    %72 = vector.extract_strided_slice %69 {offsets = [0, 64], sizes = [32, 32], strides = [1, 1]} : vector<32x96xf32> to vector<32x32xf32>
    %cst_42 = arith.constant 0.000000e+00 : f32
    %73 = vector.broadcast %cst_42 : f32 to vector<32x32xf32>
    %74 = vector.extract_strided_slice %5 {offsets = [0, 0], sizes = [1, 32], strides = [1, 1]} : vector<4x32xf32> to vector<1x32xf32>
    %75 = vector.broadcast %74 : vector<1x32xf32> to vector<32x32xf32>
    %76 = arith.mulf %70, %75 : vector<32x32xf32>
    %cst_43 = arith.constant dense<0.000000e+00> : vector<32x32xf32>
    %77 = tpu.matmul %76, %71, %cst_43 {dimension_numbers = #tpu.dot_dimension_numbers<[1], [1], [0], [0], [0, 0, 1, 0], [], []>} : vector<32x32xf32>, vector<32x32xf32>, vector<32x32xf32> -> vector<32x32xf32>
    %78 = vector.broadcast %cst_14 : f32 to vector<32x32xf32>
    %79 = arith.mulf %77, %78 : vector<32x32xf32>
    %80 = arith.addf %79, %4 : vector<32x32xf32>
    %cst_44 = arith.constant dense<0xFF800000> : vector<32xf32>
    %81 = vector.multi_reduction <maximumf>, %80, %cst_44 [1] : vector<32x32xf32> to vector<32xf32>
    %82 = vector.shape_cast %81 : vector<32xf32> to vector<32x1xf32>
    %83 = vector.broadcast %82 : vector<32x1xf32> to vector<32x32xf32>
    %84 = arith.subf %80, %83 : vector<32x32xf32>
    %85 = math.exp %84 : vector<32x32xf32>
    %cst_45 = arith.constant dense<0.000000e+00> : vector<32xf32>
    %86 = vector.multi_reduction <add>, %85, %cst_45 [1] : vector<32x32xf32> to vector<32xf32>
    %87 = vector.shape_cast %86 : vector<32xf32> to vector<32x1xf32>
    %88 = vector.broadcast %87 : vector<32x1xf32> to vector<32x32xf32>
    %89 = arith.divf %85, %88 : vector<32x32xf32>
    %90 = vector.broadcast %74 : vector<1x32xf32> to vector<32x32xf32>
    %91 = arith.mulf %72, %90 : vector<32x32xf32>
    %cst_46 = arith.constant dense<0.000000e+00> : vector<32x32xf32>
    %92 = tpu.matmul %89, %91, %cst_46 {dimension_numbers = #tpu.dot_dimension_numbers<[1], [0], [0], [1], [0, 0, 1, 1], [], []>} : vector<32x32xf32>, vector<32x32xf32>, vector<32x32xf32> -> vector<32x32xf32>
    %93 = arith.addf %73, %92 : vector<32x32xf32>
    %94 = vector.extract_strided_slice %5 {offsets = [1, 0], sizes = [1, 32], strides = [1, 1]} : vector<4x32xf32> to vector<1x32xf32>
    %95 = vector.broadcast %94 : vector<1x32xf32> to vector<32x32xf32>
    %96 = arith.mulf %70, %95 : vector<32x32xf32>
    %cst_47 = arith.constant dense<0.000000e+00> : vector<32x32xf32>
    %97 = tpu.matmul %96, %71, %cst_47 {dimension_numbers = #tpu.dot_dimension_numbers<[1], [1], [0], [0], [0, 0, 1, 0], [], []>} : vector<32x32xf32>, vector<32x32xf32>, vector<32x32xf32> -> vector<32x32xf32>
    %98 = vector.broadcast %cst_14 : f32 to vector<32x32xf32>
    %99 = arith.mulf %97, %98 : vector<32x32xf32>
    %100 = arith.addf %99, %4 : vector<32x32xf32>
    %cst_48 = arith.constant dense<0xFF800000> : vector<32xf32>
    %101 = vector.multi_reduction <maximumf>, %100, %cst_48 [1] : vector<32x32xf32> to vector<32xf32>
    %102 = vector.shape_cast %101 : vector<32xf32> to vector<32x1xf32>
    %103 = vector.broadcast %102 : vector<32x1xf32> to vector<32x32xf32>
    %104 = arith.subf %100, %103 : vector<32x32xf32>
    %105 = math.exp %104 : vector<32x32xf32>
    %cst_49 = arith.constant dense<0.000000e+00> : vector<32xf32>
    %106 = vector.multi_reduction <add>, %105, %cst_49 [1] : vector<32x32xf32> to vector<32xf32>
    %107 = vector.shape_cast %106 : vector<32xf32> to vector<32x1xf32>
    %108 = vector.broadcast %107 : vector<32x1xf32> to vector<32x32xf32>
    %109 = arith.divf %105, %108 : vector<32x32xf32>
    %110 = vector.broadcast %94 : vector<1x32xf32> to vector<32x32xf32>
    %111 = arith.mulf %72, %110 : vector<32x32xf32>
    %cst_50 = arith.constant dense<0.000000e+00> : vector<32x32xf32>
    %112 = tpu.matmul %109, %111, %cst_50 {dimension_numbers = #tpu.dot_dimension_numbers<[1], [0], [0], [1], [0, 0, 1, 1], [], []>} : vector<32x32xf32>, vector<32x32xf32>, vector<32x32xf32> -> vector<32x32xf32>
    %113 = arith.addf %93, %112 : vector<32x32xf32>
    %114 = vector.extract_strided_slice %5 {offsets = [2, 0], sizes = [1, 32], strides = [1, 1]} : vector<4x32xf32> to vector<1x32xf32>
    %115 = vector.broadcast %114 : vector<1x32xf32> to vector<32x32xf32>
    %116 = arith.mulf %70, %115 : vector<32x32xf32>
    %cst_51 = arith.constant dense<0.000000e+00> : vector<32x32xf32>
    %117 = tpu.matmul %116, %71, %cst_51 {dimension_numbers = #tpu.dot_dimension_numbers<[1], [1], [0], [0], [0, 0, 1, 0], [], []>} : vector<32x32xf32>, vector<32x32xf32>, vector<32x32xf32> -> vector<32x32xf32>
    %118 = vector.broadcast %cst_14 : f32 to vector<32x32xf32>
    %119 = arith.mulf %117, %118 : vector<32x32xf32>
    %120 = arith.addf %119, %4 : vector<32x32xf32>
    %cst_52 = arith.constant dense<0xFF800000> : vector<32xf32>
    %121 = vector.multi_reduction <maximumf>, %120, %cst_52 [1] : vector<32x32xf32> to vector<32xf32>
    %122 = vector.shape_cast %121 : vector<32xf32> to vector<32x1xf32>
    %123 = vector.broadcast %122 : vector<32x1xf32> to vector<32x32xf32>
    %124 = arith.subf %120, %123 : vector<32x32xf32>
    %125 = math.exp %124 : vector<32x32xf32>
    %cst_53 = arith.constant dense<0.000000e+00> : vector<32xf32>
    %126 = vector.multi_reduction <add>, %125, %cst_53 [1] : vector<32x32xf32> to vector<32xf32>
    %127 = vector.shape_cast %126 : vector<32xf32> to vector<32x1xf32>
    %128 = vector.broadcast %127 : vector<32x1xf32> to vector<32x32xf32>
    %129 = arith.divf %125, %128 : vector<32x32xf32>
    %130 = vector.broadcast %114 : vector<1x32xf32> to vector<32x32xf32>
    %131 = arith.mulf %72, %130 : vector<32x32xf32>
    %cst_54 = arith.constant dense<0.000000e+00> : vector<32x32xf32>
    %132 = tpu.matmul %129, %131, %cst_54 {dimension_numbers = #tpu.dot_dimension_numbers<[1], [0], [0], [1], [0, 0, 1, 1], [], []>} : vector<32x32xf32>, vector<32x32xf32>, vector<32x32xf32> -> vector<32x32xf32>
    %133 = arith.addf %113, %132 : vector<32x32xf32>
    %134 = vector.extract_strided_slice %5 {offsets = [3, 0], sizes = [1, 32], strides = [1, 1]} : vector<4x32xf32> to vector<1x32xf32>
    %135 = vector.broadcast %134 : vector<1x32xf32> to vector<32x32xf32>
    %136 = arith.mulf %70, %135 : vector<32x32xf32>
    %cst_55 = arith.constant dense<0.000000e+00> : vector<32x32xf32>
    %137 = tpu.matmul %136, %71, %cst_55 {dimension_numbers = #tpu.dot_dimension_numbers<[1], [1], [0], [0], [0, 0, 1, 0], [], []>} : vector<32x32xf32>, vector<32x32xf32>, vector<32x32xf32> -> vector<32x32xf32>
    %138 = vector.broadcast %cst_14 : f32 to vector<32x32xf32>
    %139 = arith.mulf %137, %138 : vector<32x32xf32>
    %140 = arith.addf %139, %4 : vector<32x32xf32>
    %cst_56 = arith.constant dense<0xFF800000> : vector<32xf32>
    %141 = vector.multi_reduction <maximumf>, %140, %cst_56 [1] : vector<32x32xf32> to vector<32xf32>
    %142 = vector.shape_cast %141 : vector<32xf32> to vector<32x1xf32>
    %143 = vector.broadcast %142 : vector<32x1xf32> to vector<32x32xf32>
    %144 = arith.subf %140, %143 : vector<32x32xf32>
    %145 = math.exp %144 : vector<32x32xf32>
    %cst_57 = arith.constant dense<0.000000e+00> : vector<32xf32>
    %146 = vector.multi_reduction <add>, %145, %cst_57 [1] : vector<32x32xf32> to vector<32xf32>
    %147 = vector.shape_cast %146 : vector<32xf32> to vector<32x1xf32>
    %148 = vector.broadcast %147 : vector<32x1xf32> to vector<32x32xf32>
    %149 = arith.divf %145, %148 : vector<32x32xf32>
    %150 = vector.broadcast %134 : vector<1x32xf32> to vector<32x32xf32>
    %151 = arith.mulf %72, %150 : vector<32x32xf32>
    %cst_58 = arith.constant dense<0.000000e+00> : vector<32x32xf32>
    %152 = tpu.matmul %149, %151, %cst_58 {dimension_numbers = #tpu.dot_dimension_numbers<[1], [0], [0], [1], [0, 0, 1, 1], [], []>} : vector<32x32xf32>, vector<32x32xf32>, vector<32x32xf32> -> vector<32x32xf32>
    %153 = arith.addf %133, %152 : vector<32x32xf32>
    %154 = arith.addf %153, %65 : vector<32x32xf32>
    %c1_i32 = arith.constant 1 : i32
    %155 = arith.index_cast %c1_i32 : i32 to index
    %c0_59 = arith.constant 0 : index
    %c0_60 = arith.constant 0 : index
    %156 = vector.load %arg9[%155, %c0_59, %c0_60] : memref<2x32x32xf32, #tpu.memory_space<vmem>>, vector<1x32x32xf32>
    %157 = vector.shape_cast %156 : vector<1x32x32xf32> to vector<32x32xf32>
    %cst_61 = arith.constant dense<0.000000e+00> : vector<256x32xf32>
    %158 = tpu.matmul %0, %157, %cst_61 {dimension_numbers = #tpu.dot_dimension_numbers<[1], [0], [0], [1], [0, 0, 1, 1], [], []>} : vector<256x32xf32>, vector<32x32xf32>, vector<256x32xf32> -> vector<256x32xf32>
    %159 = arith.index_cast %c1_i32 : i32 to index
    %c0_62 = arith.constant 0 : index
    %c0_63 = arith.constant 0 : index
    %160 = vector.load %arg10[%159, %c0_62, %c0_63] : memref<2x1x32xf32, #tpu.memory_space<vmem>>, vector<1x1x32xf32>
    %161 = vector.shape_cast %160 : vector<1x1x32xf32> to vector<1x32xf32>
    %162 = vector.broadcast %161 : vector<1x32xf32> to vector<256x32xf32>
    %163 = arith.addf %158, %162 : vector<256x32xf32>
    %cst_64 = arith.constant 0.000000e+00 : f32
    %164 = vector.broadcast %cst_64 : f32 to vector<256x32xf32>
    %165 = arith.cmpf ogt, %163, %164 : vector<256x32xf32>
    %cst_65 = arith.constant 0.000000e+00 : f32
    %166 = vector.broadcast %cst_65 : f32 to vector<256x32xf32>
    %167 = arith.minimumf %163, %166 : vector<256x32xf32>
    %168 = math.exp %167 : vector<256x32xf32>
    %cst_66 = arith.constant 1.000000e+00 : f32
    %169 = vector.broadcast %cst_66 : f32 to vector<256x32xf32>
    %170 = arith.subf %168, %169 : vector<256x32xf32>
    %cst_67 = arith.constant 1.67326319 : f32
    %171 = vector.broadcast %cst_67 : f32 to vector<256x32xf32>
    %172 = arith.mulf %171, %170 : vector<256x32xf32>
    %173 = arith.select %165, %163, %172 : vector<256x32xi1>, vector<256x32xf32>
    %cst_68 = arith.constant 1.05070102 : f32
    %174 = vector.broadcast %cst_68 : f32 to vector<256x32xf32>
    %175 = arith.mulf %174, %173 : vector<256x32xf32>
    %176 = arith.mulf %175, %1 : vector<256x32xf32>
    %177 = vector.shape_cast %176 : vector<256x32xf32> to vector<4x8x8x32xf32>
    %178 = vector.shape_cast %154 : vector<32x32xf32> to vector<4x8x32xf32>
    %179 = vector.shape_cast %178 : vector<4x8x32xf32> to vector<4x1x8x32xf32>
    %180 = vector.broadcast %179 : vector<4x1x8x32xf32> to vector<4x8x8x32xf32>
    %181 = arith.mulf %177, %180 : vector<4x8x8x32xf32>
    %cst_69 = arith.constant dense<0.000000e+00> : vector<4x8x32xf32>
    %182 = vector.multi_reduction <add>, %181, %cst_69 [2] : vector<4x8x8x32xf32> to vector<4x8x32xf32>
    %183 = vector.shape_cast %182 : vector<4x8x32xf32> to vector<32x32xf32>
    %184 = arith.index_cast %c1_i32 : i32 to index
    %c0_70 = arith.constant 0 : index
    %c0_71 = arith.constant 0 : index
    %185 = vector.load %arg11[%184, %c0_70, %c0_71] : memref<2x32x32xf32, #tpu.memory_space<vmem>>, vector<1x32x32xf32>
    %186 = vector.shape_cast %185 : vector<1x32x32xf32> to vector<32x32xf32>
    %cst_72 = arith.constant dense<0.000000e+00> : vector<32x32xf32>
    %187 = tpu.matmul %154, %186, %cst_72 {dimension_numbers = #tpu.dot_dimension_numbers<[1], [0], [0], [1], [0, 0, 1, 1], [], []>} : vector<32x32xf32>, vector<32x32xf32>, vector<32x32xf32> -> vector<32x32xf32>
    %188 = arith.index_cast %c1_i32 : i32 to index
    %c0_73 = arith.constant 0 : index
    %c0_74 = arith.constant 0 : index
    %189 = vector.load %arg12[%188, %c0_73, %c0_74] : memref<2x32x32xf32, #tpu.memory_space<vmem>>, vector<1x32x32xf32>
    %190 = vector.shape_cast %189 : vector<1x32x32xf32> to vector<32x32xf32>
    %cst_75 = arith.constant dense<0.000000e+00> : vector<32x32xf32>
    %191 = tpu.matmul %183, %190, %cst_75 {dimension_numbers = #tpu.dot_dimension_numbers<[1], [0], [0], [1], [0, 0, 1, 1], [], []>} : vector<32x32xf32>, vector<32x32xf32>, vector<32x32xf32> -> vector<32x32xf32>
    %192 = arith.addf %187, %191 : vector<32x32xf32>
    %193 = arith.index_cast %c1_i32 : i32 to index
    %c0_76 = arith.constant 0 : index
    %c0_77 = arith.constant 0 : index
    %194 = vector.load %arg13[%193, %c0_76, %c0_77] : memref<2x1x32xf32, #tpu.memory_space<vmem>>, vector<1x1x32xf32>
    %195 = vector.shape_cast %194 : vector<1x1x32xf32> to vector<1x32xf32>
    %196 = vector.broadcast %195 : vector<1x32xf32> to vector<32x32xf32>
    %197 = arith.addf %192, %196 : vector<32x32xf32>
    %cst_78 = arith.constant 0.000000e+00 : f32
    %198 = vector.broadcast %cst_78 : f32 to vector<32x32xf32>
    %199 = arith.cmpf ogt, %197, %198 : vector<32x32xf32>
    %cst_79 = arith.constant 0.000000e+00 : f32
    %200 = vector.broadcast %cst_79 : f32 to vector<32x32xf32>
    %201 = arith.minimumf %197, %200 : vector<32x32xf32>
    %202 = math.exp %201 : vector<32x32xf32>
    %cst_80 = arith.constant 1.000000e+00 : f32
    %203 = vector.broadcast %cst_80 : f32 to vector<32x32xf32>
    %204 = arith.subf %202, %203 : vector<32x32xf32>
    %cst_81 = arith.constant 1.67326319 : f32
    %205 = vector.broadcast %cst_81 : f32 to vector<32x32xf32>
    %206 = arith.mulf %205, %204 : vector<32x32xf32>
    %207 = arith.select %199, %197, %206 : vector<32x32xi1>, vector<32x32xf32>
    %cst_82 = arith.constant 1.05070102 : f32
    %208 = vector.broadcast %cst_82 : f32 to vector<32x32xf32>
    %209 = arith.mulf %208, %207 : vector<32x32xf32>
    %210 = arith.mulf %209, %2 : vector<32x32xf32>
    %211 = arith.addf %210, %154 : vector<32x32xf32>
    %212 = arith.index_cast %c1_i32 : i32 to index
    %c0_83 = arith.constant 0 : index
    %c0_84 = arith.constant 0 : index
    %213 = vector.load %arg14[%212, %c0_83, %c0_84] : memref<2x32x96xf32, #tpu.memory_space<vmem>>, vector<1x32x96xf32>
    %214 = vector.shape_cast %213 : vector<1x32x96xf32> to vector<32x96xf32>
    %cst_85 = arith.constant dense<0.000000e+00> : vector<32x96xf32>
    %215 = tpu.matmul %211, %214, %cst_85 {dimension_numbers = #tpu.dot_dimension_numbers<[1], [0], [0], [1], [0, 0, 1, 1], [], []>} : vector<32x32xf32>, vector<32x96xf32>, vector<32x96xf32> -> vector<32x96xf32>
    %216 = vector.extract_strided_slice %215 {offsets = [0, 0], sizes = [32, 32], strides = [1, 1]} : vector<32x96xf32> to vector<32x32xf32>
    %217 = vector.extract_strided_slice %215 {offsets = [0, 32], sizes = [32, 32], strides = [1, 1]} : vector<32x96xf32> to vector<32x32xf32>
    %218 = vector.extract_strided_slice %215 {offsets = [0, 64], sizes = [32, 32], strides = [1, 1]} : vector<32x96xf32> to vector<32x32xf32>
    %cst_86 = arith.constant 0.000000e+00 : f32
    %219 = vector.broadcast %cst_86 : f32 to vector<32x32xf32>
    %220 = vector.extract_strided_slice %5 {offsets = [0, 0], sizes = [1, 32], strides = [1, 1]} : vector<4x32xf32> to vector<1x32xf32>
    %221 = vector.broadcast %220 : vector<1x32xf32> to vector<32x32xf32>
    %222 = arith.mulf %216, %221 : vector<32x32xf32>
    %cst_87 = arith.constant dense<0.000000e+00> : vector<32x32xf32>
    %223 = tpu.matmul %222, %217, %cst_87 {dimension_numbers = #tpu.dot_dimension_numbers<[1], [1], [0], [0], [0, 0, 1, 0], [], []>} : vector<32x32xf32>, vector<32x32xf32>, vector<32x32xf32> -> vector<32x32xf32>
    %224 = vector.broadcast %cst_14 : f32 to vector<32x32xf32>
    %225 = arith.mulf %223, %224 : vector<32x32xf32>
    %226 = arith.addf %225, %4 : vector<32x32xf32>
    %cst_88 = arith.constant dense<0xFF800000> : vector<32xf32>
    %227 = vector.multi_reduction <maximumf>, %226, %cst_88 [1] : vector<32x32xf32> to vector<32xf32>
    %228 = vector.shape_cast %227 : vector<32xf32> to vector<32x1xf32>
    %229 = vector.broadcast %228 : vector<32x1xf32> to vector<32x32xf32>
    %230 = arith.subf %226, %229 : vector<32x32xf32>
    %231 = math.exp %230 : vector<32x32xf32>
    %cst_89 = arith.constant dense<0.000000e+00> : vector<32xf32>
    %232 = vector.multi_reduction <add>, %231, %cst_89 [1] : vector<32x32xf32> to vector<32xf32>
    %233 = vector.shape_cast %232 : vector<32xf32> to vector<32x1xf32>
    %234 = vector.broadcast %233 : vector<32x1xf32> to vector<32x32xf32>
    %235 = arith.divf %231, %234 : vector<32x32xf32>
    %236 = vector.broadcast %220 : vector<1x32xf32> to vector<32x32xf32>
    %237 = arith.mulf %218, %236 : vector<32x32xf32>
    %cst_90 = arith.constant dense<0.000000e+00> : vector<32x32xf32>
    %238 = tpu.matmul %235, %237, %cst_90 {dimension_numbers = #tpu.dot_dimension_numbers<[1], [0], [0], [1], [0, 0, 1, 1], [], []>} : vector<32x32xf32>, vector<32x32xf32>, vector<32x32xf32> -> vector<32x32xf32>
    %239 = arith.addf %219, %238 : vector<32x32xf32>
    %240 = vector.extract_strided_slice %5 {offsets = [1, 0], sizes = [1, 32], strides = [1, 1]} : vector<4x32xf32> to vector<1x32xf32>
    %241 = vector.broadcast %240 : vector<1x32xf32> to vector<32x32xf32>
    %242 = arith.mulf %216, %241 : vector<32x32xf32>
    %cst_91 = arith.constant dense<0.000000e+00> : vector<32x32xf32>
    %243 = tpu.matmul %242, %217, %cst_91 {dimension_numbers = #tpu.dot_dimension_numbers<[1], [1], [0], [0], [0, 0, 1, 0], [], []>} : vector<32x32xf32>, vector<32x32xf32>, vector<32x32xf32> -> vector<32x32xf32>
    %244 = vector.broadcast %cst_14 : f32 to vector<32x32xf32>
    %245 = arith.mulf %243, %244 : vector<32x32xf32>
    %246 = arith.addf %245, %4 : vector<32x32xf32>
    %cst_92 = arith.constant dense<0xFF800000> : vector<32xf32>
    %247 = vector.multi_reduction <maximumf>, %246, %cst_92 [1] : vector<32x32xf32> to vector<32xf32>
    %248 = vector.shape_cast %247 : vector<32xf32> to vector<32x1xf32>
    %249 = vector.broadcast %248 : vector<32x1xf32> to vector<32x32xf32>
    %250 = arith.subf %246, %249 : vector<32x32xf32>
    %251 = math.exp %250 : vector<32x32xf32>
    %cst_93 = arith.constant dense<0.000000e+00> : vector<32xf32>
    %252 = vector.multi_reduction <add>, %251, %cst_93 [1] : vector<32x32xf32> to vector<32xf32>
    %253 = vector.shape_cast %252 : vector<32xf32> to vector<32x1xf32>
    %254 = vector.broadcast %253 : vector<32x1xf32> to vector<32x32xf32>
    %255 = arith.divf %251, %254 : vector<32x32xf32>
    %256 = vector.broadcast %240 : vector<1x32xf32> to vector<32x32xf32>
    %257 = arith.mulf %218, %256 : vector<32x32xf32>
    %cst_94 = arith.constant dense<0.000000e+00> : vector<32x32xf32>
    %258 = tpu.matmul %255, %257, %cst_94 {dimension_numbers = #tpu.dot_dimension_numbers<[1], [0], [0], [1], [0, 0, 1, 1], [], []>} : vector<32x32xf32>, vector<32x32xf32>, vector<32x32xf32> -> vector<32x32xf32>
    %259 = arith.addf %239, %258 : vector<32x32xf32>
    %260 = vector.extract_strided_slice %5 {offsets = [2, 0], sizes = [1, 32], strides = [1, 1]} : vector<4x32xf32> to vector<1x32xf32>
    %261 = vector.broadcast %260 : vector<1x32xf32> to vector<32x32xf32>
    %262 = arith.mulf %216, %261 : vector<32x32xf32>
    %cst_95 = arith.constant dense<0.000000e+00> : vector<32x32xf32>
    %263 = tpu.matmul %262, %217, %cst_95 {dimension_numbers = #tpu.dot_dimension_numbers<[1], [1], [0], [0], [0, 0, 1, 0], [], []>} : vector<32x32xf32>, vector<32x32xf32>, vector<32x32xf32> -> vector<32x32xf32>
    %264 = vector.broadcast %cst_14 : f32 to vector<32x32xf32>
    %265 = arith.mulf %263, %264 : vector<32x32xf32>
    %266 = arith.addf %265, %4 : vector<32x32xf32>
    %cst_96 = arith.constant dense<0xFF800000> : vector<32xf32>
    %267 = vector.multi_reduction <maximumf>, %266, %cst_96 [1] : vector<32x32xf32> to vector<32xf32>
    %268 = vector.shape_cast %267 : vector<32xf32> to vector<32x1xf32>
    %269 = vector.broadcast %268 : vector<32x1xf32> to vector<32x32xf32>
    %270 = arith.subf %266, %269 : vector<32x32xf32>
    %271 = math.exp %270 : vector<32x32xf32>
    %cst_97 = arith.constant dense<0.000000e+00> : vector<32xf32>
    %272 = vector.multi_reduction <add>, %271, %cst_97 [1] : vector<32x32xf32> to vector<32xf32>
    %273 = vector.shape_cast %272 : vector<32xf32> to vector<32x1xf32>
    %274 = vector.broadcast %273 : vector<32x1xf32> to vector<32x32xf32>
    %275 = arith.divf %271, %274 : vector<32x32xf32>
    %276 = vector.broadcast %260 : vector<1x32xf32> to vector<32x32xf32>
    %277 = arith.mulf %218, %276 : vector<32x32xf32>
    %cst_98 = arith.constant dense<0.000000e+00> : vector<32x32xf32>
    %278 = tpu.matmul %275, %277, %cst_98 {dimension_numbers = #tpu.dot_dimension_numbers<[1], [0], [0], [1], [0, 0, 1, 1], [], []>} : vector<32x32xf32>, vector<32x32xf32>, vector<32x32xf32> -> vector<32x32xf32>
    %279 = arith.addf %259, %278 : vector<32x32xf32>
    %280 = vector.extract_strided_slice %5 {offsets = [3, 0], sizes = [1, 32], strides = [1, 1]} : vector<4x32xf32> to vector<1x32xf32>
    %281 = vector.broadcast %280 : vector<1x32xf32> to vector<32x32xf32>
    %282 = arith.mulf %216, %281 : vector<32x32xf32>
    %cst_99 = arith.constant dense<0.000000e+00> : vector<32x32xf32>
    %283 = tpu.matmul %282, %217, %cst_99 {dimension_numbers = #tpu.dot_dimension_numbers<[1], [1], [0], [0], [0, 0, 1, 0], [], []>} : vector<32x32xf32>, vector<32x32xf32>, vector<32x32xf32> -> vector<32x32xf32>
    %284 = vector.broadcast %cst_14 : f32 to vector<32x32xf32>
    %285 = arith.mulf %283, %284 : vector<32x32xf32>
    %286 = arith.addf %285, %4 : vector<32x32xf32>
    %cst_100 = arith.constant dense<0xFF800000> : vector<32xf32>
    %287 = vector.multi_reduction <maximumf>, %286, %cst_100 [1] : vector<32x32xf32> to vector<32xf32>
    %288 = vector.shape_cast %287 : vector<32xf32> to vector<32x1xf32>
    %289 = vector.broadcast %288 : vector<32x1xf32> to vector<32x32xf32>
    %290 = arith.subf %286, %289 : vector<32x32xf32>
    %291 = math.exp %290 : vector<32x32xf32>
    %cst_101 = arith.constant dense<0.000000e+00> : vector<32xf32>
    %292 = vector.multi_reduction <add>, %291, %cst_101 [1] : vector<32x32xf32> to vector<32xf32>
    %293 = vector.shape_cast %292 : vector<32xf32> to vector<32x1xf32>
    %294 = vector.broadcast %293 : vector<32x1xf32> to vector<32x32xf32>
    %295 = arith.divf %291, %294 : vector<32x32xf32>
    %296 = vector.broadcast %280 : vector<1x32xf32> to vector<32x32xf32>
    %297 = arith.mulf %218, %296 : vector<32x32xf32>
    %cst_102 = arith.constant dense<0.000000e+00> : vector<32x32xf32>
    %298 = tpu.matmul %295, %297, %cst_102 {dimension_numbers = #tpu.dot_dimension_numbers<[1], [0], [0], [1], [0, 0, 1, 1], [], []>} : vector<32x32xf32>, vector<32x32xf32>, vector<32x32xf32> -> vector<32x32xf32>
    %299 = arith.addf %279, %298 : vector<32x32xf32>
    %300 = arith.addf %299, %211 : vector<32x32xf32>
    %c2_i32 = arith.constant 2 : i32
    %c0_103 = arith.constant 0 : index
    %c0_104 = arith.constant 0 : index
    %301 = vector.load %arg15[%c0_103, %c0_104] : memref<32x64xf32, #tpu.memory_space<vmem>>, vector<32x64xf32>
    %cst_105 = arith.constant dense<0.000000e+00> : vector<32x64xf32>
    %302 = tpu.matmul %300, %301, %cst_105 {dimension_numbers = #tpu.dot_dimension_numbers<[1], [0], [0], [1], [0, 0, 1, 1], [], []>} : vector<32x32xf32>, vector<32x64xf32>, vector<32x64xf32> -> vector<32x64xf32>
    %303 = vector.extract_strided_slice %302 {offsets = [0, 0], sizes = [32, 32], strides = [1, 1]} : vector<32x64xf32> to vector<32x32xf32>
    %304 = vector.extract_strided_slice %302 {offsets = [0, 32], sizes = [32, 32], strides = [1, 1]} : vector<32x64xf32> to vector<32x32xf32>
    %305 = math.exp %304 : vector<32x32xf32>
    %c0_106 = arith.constant 0 : index
    %c0_107 = arith.constant 0 : index
    %306 = vector.load %arg6[%c0_106, %c0_107] : memref<32x32xf32, #tpu.memory_space<vmem>>, vector<32x32xf32>
    %307 = arith.mulf %305, %306 : vector<32x32xf32>
    %308 = arith.addf %303, %307 : vector<32x32xf32>
    %309 = arith.mulf %308, %2 : vector<32x32xf32>
    %c0_108 = arith.constant 0 : index
    %c0_109 = arith.constant 0 : index
    %310 = vector.load %arg16[%c0_108, %c0_109] : memref<32x32xf32, #tpu.memory_space<vmem>>, vector<32x32xf32>
    tpu.vector_store %arg16[%c0_108, %c0_109], %309 {strides = array<i32>} : memref<32x32xf32, #tpu.memory_space<vmem>>, vector<32x32xf32>,
    return
  }
  func.func @transform_0(%arg0: i32) -> (i32, i32) {
    %c0_i32 = arith.constant 0 : i32
    %c0_i32_0 = arith.constant 0 : i32
    return %arg0, %c0_i32 : i32, i32
  }
  func.func @transform_1(%arg0: i32) -> (i32, i32) {
    %c0_i32 = arith.constant 0 : i32
    %c0_i32_0 = arith.constant 0 : i32
    return %arg0, %c0_i32 : i32, i32
  }
  func.func @transform_2(%arg0: i32) -> (i32, i32) {
    %c0_i32 = arith.constant 0 : i32
    %c0_i32_0 = arith.constant 0 : i32
    return %arg0, %c0_i32 : i32, i32
  }
  func.func @transform_3(%arg0: i32) -> (i32, i32) {
    %c0_i32 = arith.constant 0 : i32
    %c0_i32_0 = arith.constant 0 : i32
    return %arg0, %c0_i32 : i32, i32
  }
  func.func @transform_4(%arg0: i32) -> (i32, i32, i32) {
    %c0_i32 = arith.constant 0 : i32
    %c0_i32_0 = arith.constant 0 : i32
    %c0_i32_1 = arith.constant 0 : i32
    return %arg0, %c0_i32, %c0_i32_0 : i32, i32, i32
  }
  func.func @transform_5(%arg0: i32) -> (i32, i32) {
    %c0_i32 = arith.constant 0 : i32
    %c0_i32_0 = arith.constant 0 : i32
    return %arg0, %c0_i32 : i32, i32
  }
  func.func @transform_6(%arg0: i32) -> (i32, i32) {
    %c0_i32 = arith.constant 0 : i32
    %c0_i32_0 = arith.constant 0 : i32
    %c0_i32_1 = arith.constant 0 : i32
    return %c0_i32, %c0_i32_0 : i32, i32
  }
  func.func @transform_7(%arg0: i32) -> (i32, i32) {
    %c0_i32 = arith.constant 0 : i32
    %c0_i32_0 = arith.constant 0 : i32
    %c0_i32_1 = arith.constant 0 : i32
    return %c0_i32, %c0_i32_0 : i32, i32
  }
  func.func @transform_8(%arg0: i32) -> (i32, i32, i32) {
    %c0_i32 = arith.constant 0 : i32
    %c0_i32_0 = arith.constant 0 : i32
    %c0_i32_1 = arith.constant 0 : i32
    %c0_i32_2 = arith.constant 0 : i32
    return %c0_i32, %c0_i32_0, %c0_i32_1 : i32, i32, i32
  }
  func.func @transform_9(%arg0: i32) -> (i32, i32, i32) {
    %c0_i32 = arith.constant 0 : i32
    %c0_i32_0 = arith.constant 0 : i32
    %c0_i32_1 = arith.constant 0 : i32
    %c0_i32_2 = arith.constant 0 : i32
    return %c0_i32, %c0_i32_0, %c0_i32_1 : i32, i32, i32
  }
  func.func @transform_10(%arg0: i32) -> (i32, i32, i32) {
    %c0_i32 = arith.constant 0 : i32
    %c0_i32_0 = arith.constant 0 : i32
    %c0_i32_1 = arith.constant 0 : i32
    %c0_i32_2 = arith.constant 0 : i32
    return %c0_i32, %c0_i32_0, %c0_i32_1 : i32, i32, i32
  }
  func.func @transform_11(%arg0: i32) -> (i32, i32, i32) {
    %c0_i32 = arith.constant 0 : i32
    %c0_i32_0 = arith.constant 0 : i32
    %c0_i32_1 = arith.constant 0 : i32
    %c0_i32_2 = arith.constant 0 : i32
    return %c0_i32, %c0_i32_0, %c0_i32_1 : i32, i32, i32
  }
  func.func @transform_12(%arg0: i32) -> (i32, i32, i32) {
    %c0_i32 = arith.constant 0 : i32
    %c0_i32_0 = arith.constant 0 : i32
    %c0_i32_1 = arith.constant 0 : i32
    %c0_i32_2 = arith.constant 0 : i32
    return %c0_i32, %c0_i32_0, %c0_i32_1 : i32, i32, i32
  }
  func.func @transform_13(%arg0: i32) -> (i32, i32, i32) {
    %c0_i32 = arith.constant 0 : i32
    %c0_i32_0 = arith.constant 0 : i32
    %c0_i32_1 = arith.constant 0 : i32
    %c0_i32_2 = arith.constant 0 : i32
    return %c0_i32, %c0_i32_0, %c0_i32_1 : i32, i32, i32
  }
  func.func @transform_14(%arg0: i32) -> (i32, i32) {
    %c0_i32 = arith.constant 0 : i32
    %c0_i32_0 = arith.constant 0 : i32
    %c0_i32_1 = arith.constant 0 : i32
    return %c0_i32, %c0_i32_0 : i32, i32
  }
  func.func @transform_15(%arg0: i32) -> (i32, i32) {
    %c0_i32 = arith.constant 0 : i32
    %c0_i32_0 = arith.constant 0 : i32
    return %arg0, %c0_i32 : i32, i32
  }
}

</mosaic_0001>

<llo_original>
// kernel: encoder_forward.1
$region0: #{encoder_forward.1}
  #allocation0 [shape = 'u32[]', space=smem, size = 0x4, offset = 0x4, fixed_abs, tag = 'smem constant byte address 0x4 - core index']
  #allocation1 [shape = 'u32[144,128]{1,0:T(1,128)}', space=vmem, size = 0x12000, scoped, tag = 'internal scratch']
  %s0 = inlined_call_operand.vmem [shape: f32[32,64], index: 0, kind: input, shape index: {}]
  %s1 = inlined_call_operand.vmem [shape: f32[256,32], index: 1, kind: input, shape index: {}]
  %s2 = inlined_call_operand.vmem [shape: f32[256,32], index: 2, kind: input, shape index: {}]
  %s3 = inlined_call_operand.vmem [shape: f32[32,32], index: 3, kind: input, shape index: {}]
  %s4 = inlined_call_operand.vmem [shape: f32[1,32,32], index: 4, kind: input, shape index: {}]
  %s5 = inlined_call_operand.vmem [shape: f32[32,32], index: 5, kind: input, shape index: {}]
  %s6 = inlined_call_operand.vmem [shape: f32[4,32], index: 6, kind: input, shape index: {}]
  %s7 = inlined_call_operand.vmem [shape: f32[64,32], index: 7, kind: input, shape index: {}]
  %s8 = inlined_call_operand.vmem [shape: f32[2,32,32], index: 8, kind: input, shape index: {}]
  %s9 = inlined_call_operand.vmem [shape: f32[2,1,32], index: 9, kind: input, shape index: {}]
  %s10 = inlined_call_operand.vmem [shape: f32[2,32,32], index: 10, kind: input, shape index: {}]
  %s11 = inlined_call_operand.vmem [shape: f32[2,32,32], index: 11, kind: input, shape index: {}]
  %s12 = inlined_call_operand.vmem [shape: f32[2,1,32], index: 12, kind: input, shape index: {}]
  %s13 = inlined_call_operand.vmem [shape: f32[2,32,96], index: 13, kind: input, shape index: {}]
  %s14 = inlined_call_operand.vmem [shape: f32[32,64], index: 14, kind: input, shape index: {}]
  %s15 = inlined_call_operand.hbm [shape: f32[32,32], index: 15, kind: output, shape index: {}]
  %s16 = sld [smem:[#allocation0]]
  $region70: #{encoder_forward.1} parent=0
    _
  %s18 = ssub.s32 1, %s16
  %s19 = scalar_select 0, %s18, %s16
  $region1: #{encoder_forward.1} parent=0
    #allocation2 [shape = 'u8[16384]{0}', space=vmem, size = 0x4000, scoped, tag = 'output window, operand 0, single buffered']
    #allocation3 [shape = 's32[1]{0}', space=sflag, size = 0x4, scoped, tag = 'scoped memory for encoder_forward.1']
    %20 = vsyncpa [#allocation3], 0
    // Predicated region
    $region2: #{encoder_forward.1} parent=1 // pred_check
      _
    $region3: #{encoder_forward.1} parent=1 // pred_check_branch
      %22 = sbr.rel (0) target = $region5
    $region4: #{encoder_forward.1} parent=1 // pred_region
      _
    $region5: #{encoder_forward.1} parent=1 // pred_fallthru
      _
    // Predicated region
    $region6: #{encoder_forward.1} parent=1 // pred_check
      _
    $region7: #{encoder_forward.1} parent=1 // pred_check_branch
      %24 = sbr.rel (0) target = $region9
    $region8: #{encoder_forward.1} parent=1 // pred_region
      _
    $region9: #{encoder_forward.1} parent=1 // pred_fallthru
      _
    // Predicated region
    $region10: #{encoder_forward.1} parent=1 // pred_check
      _
    $region11: #{encoder_forward.1} parent=1 // pred_check_branch
      %26 = sbr.rel (0) target = $region13
    $region12: #{encoder_forward.1} parent=1 // pred_region
      _
    $region13: #{encoder_forward.1} parent=1 // pred_fallthru
      _
    // Predicated region
    $region14: #{encoder_forward.1} parent=1 // pred_check
      _
    $region15: #{encoder_forward.1} parent=1 // pred_check_branch
      %28 = sbr.rel (0) target = $region17
    $region16: #{encoder_forward.1} parent=1 // pred_region
      _
    $region17: #{encoder_forward.1} parent=1 // pred_fallthru
      _
    // Predicated region
    $region18: #{encoder_forward.1} parent=1 // pred_check
      _
    $region19: #{encoder_forward.1} parent=1 // pred_check_branch
      %30 = sbr.rel (0) target = $region21
    $region20: #{encoder_forward.1} parent=1 // pred_region
      _
    $region21: #{encoder_forward.1} parent=1 // pred_fallthru
      _
    // Predicated region
    $region22: #{encoder_forward.1} parent=1 // pred_check
      _
    $region23: #{encoder_forward.1} parent=1 // pred_check_branch
      %32 = sbr.rel (0) target = $region25
    $region24: #{encoder_forward.1} parent=1 // pred_region
      _
    $region25: #{encoder_forward.1} parent=1 // pred_fallthru
      _
    // Predicated region
    $region26: #{encoder_forward.1} parent=1 // pred_check
      _
    $region27: #{encoder_forward.1} parent=1 // pred_check_branch
      %34 = sbr.rel (0) target = $region29
    $region28: #{encoder_forward.1} parent=1 // pred_region
      _
    $region29: #{encoder_forward.1} parent=1 // pred_fallthru
      _
    // Predicated region
    $region30: #{encoder_forward.1} parent=1 // pred_check
      _
    $region31: #{encoder_forward.1} parent=1 // pred_check_branch
      %36 = sbr.rel (0) target = $region33
    $region32: #{encoder_forward.1} parent=1 // pred_region
      _
    $region33: #{encoder_forward.1} parent=1 // pred_fallthru
      _
    // Predicated region
    $region34: #{encoder_forward.1} parent=1 // pred_check
      _
    $region35: #{encoder_forward.1} parent=1 // pred_check_branch
      %38 = sbr.rel (0) target = $region37
    $region36: #{encoder_forward.1} parent=1 // pred_region
      _
    $region37: #{encoder_forward.1} parent=1 // pred_fallthru
      _
    // Predicated region
    $region38: #{encoder_forward.1} parent=1 // pred_check
      _
    $region39: #{encoder_forward.1} parent=1 // pred_check_branch
      %40 = sbr.rel (0) target = $region41
    $region40: #{encoder_forward.1} parent=1 // pred_region
      _
    $region41: #{encoder_forward.1} parent=1 // pred_fallthru
      _
    // Predicated region
    $region42: #{encoder_forward.1} parent=1 // pred_check
      _
    $region43: #{encoder_forward.1} parent=1 // pred_check_branch
      %42 = sbr.rel (0) target = $region45
    $region44: #{encoder_forward.1} parent=1 // pred_region
      _
    $region45: #{encoder_forward.1} parent=1 // pred_fallthru
      _
    // Predicated region
    $region46: #{encoder_forward.1} parent=1 // pred_check
      _
    $region47: #{encoder_forward.1} parent=1 // pred_check_branch
      %44 = sbr.rel (0) target = $region49
    $region48: #{encoder_forward.1} parent=1 // pred_region
      _
    $region49: #{encoder_forward.1} parent=1 // pred_fallthru
      _
    // Predicated region
    $region50: #{encoder_forward.1} parent=1 // pred_check
      _
    $region51: #{encoder_forward.1} parent=1 // pred_check_branch
      %46 = sbr.rel (0) target = $region53
    $region52: #{encoder_forward.1} parent=1 // pred_region
      _
    $region53: #{encoder_forward.1} parent=1 // pred_fallthru
      _
    // Predicated region
    $region54: #{encoder_forward.1} parent=1 // pred_check
      _
    $region55: #{encoder_forward.1} parent=1 // pred_check_branch
      %48 = sbr.rel (0) target = $region57
    $region56: #{encoder_forward.1} parent=1 // pred_region
      _
    $region57: #{encoder_forward.1} parent=1 // pred_fallthru
      _
    // Predicated region
    $region58: #{encoder_forward.1} parent=1 // pred_check
      _
    $region59: #{encoder_forward.1} parent=1 // pred_check_branch
      %50 = sbr.rel (0) target = $region61
    $region60: #{encoder_forward.1} parent=1 // pred_region
      _
    $region61: #{encoder_forward.1} parent=1 // pred_fallthru
      _
    %v51 = vld [vmem:[%s1] sm:$0xff]
    %v52 = vld [vmem:[%s1 + $0x8] sm:$0xff]
    %v53 = vld [vmem:[%s1 + $0x10] sm:$0xff]
    %v54 = vld [vmem:[%s1 + $0x18] sm:$0xff]
    %v55 = vld [vmem:[%s1 + $0x20] sm:$0xff]
    %v56 = vld [vmem:[%s1 + $0x28] sm:$0xff]
    %v57 = vld [vmem:[%s1 + $0x30] sm:$0xff]
    %v58 = vld [vmem:[%s1 + $0x38] sm:$0xff]
    %v59 = vld [vmem:[%s1 + $0x40] sm:$0xff]
    %v60 = vld [vmem:[%s1 + $0x48] sm:$0xff]
    %v61 = vld [vmem:[%s1 + $0x50] sm:$0xff]
    %v62 = vld [vmem:[%s1 + $0x58] sm:$0xff]
    %v63 = vld [vmem:[%s1 + $0x60] sm:$0xff]
    %v64 = vld [vmem:[%s1 + $0x68] sm:$0xff]
    %v65 = vld [vmem:[%s1 + $0x70] sm:$0xff]
    %v66 = vld [vmem:[%s1 + $0x78] sm:$0xff]
    %v67 = vld [vmem:[%s1 + $0x80] sm:$0xff]
    %v68 = vld [vmem:[%s1 + $0x88] sm:$0xff]
    %v69 = vld [vmem:[%s1 + $0x90] sm:$0xff]
    %v70 = vld [vmem:[%s1 + $0x98] sm:$0xff]
    %v71 = vld [vmem:[%s1 + $0xa0] sm:$0xff]
    %v72 = vld [vmem:[%s1 + $0xa8] sm:$0xff]
    %v73 = vld [vmem:[%s1 + $0xb0] sm:$0xff]
    %v74 = vld [vmem:[%s1 + $0xb8] sm:$0xff]
    %v75 = vld [vmem:[%s1 + $0xc0] sm:$0xff]
    %v76 = vld [vmem:[%s1 + $0xc8] sm:$0xff]
    %v77 = vld [vmem:[%s1 + $0xd0] sm:$0xff]
    %v78 = vld [vmem:[%s1 + $0xd8] sm:$0xff]
    %v79 = vld [vmem:[%s1 + $0xe0] sm:$0xff]
    %v80 = vld [vmem:[%s1 + $0xe8] sm:$0xff]
    %v81 = vld [vmem:[%s1 + $0xf0] sm:$0xff]
    %v82 = vld [vmem:[%s1 + $0xf8] sm:$0xff]
    %v83 = vld [vmem:[%s2] sm:$0xff]
    %v84 = vld [vmem:[%s2 + $0x8] sm:$0xff]
    %v85 = vld [vmem:[%s2 + $0x10] sm:$0xff]
    %v86 = vld [vmem:[%s2 + $0x18] sm:$0xff]
    %v87 = vld [vmem:[%s2 + $0x20] sm:$0xff]
    %v88 = vld [vmem:[%s2 + $0x28] sm:$0xff]
    %v89 = vld [vmem:[%s2 + $0x30] sm:$0xff]
    %v90 = vld [vmem:[%s2 + $0x38] sm:$0xff]
    %v91 = vld [vmem:[%s2 + $0x40] sm:$0xff]
    %v92 = vld [vmem:[%s2 + $0x48] sm:$0xff]
    %v93 = vld [vmem:[%s2 + $0x50] sm:$0xff]
    %v94 = vld [vmem:[%s2 + $0x58] sm:$0xff]
    %v95 = vld [vmem:[%s2 + $0x60] sm:$0xff]
    %v96 = vld [vmem:[%s2 + $0x68] sm:$0xff]
    %v97 = vld [vmem:[%s2 + $0x70] sm:$0xff]
    %v98 = vld [vmem:[%s2 + $0x78] sm:$0xff]
    %v99 = vld [vmem:[%s2 + $0x80] sm:$0xff]
    %v100 = vld [vmem:[%s2 + $0x88] sm:$0xff]
    %v101 = vld [vmem:[%s2 + $0x90] sm:$0xff]
    %v102 = vld [vmem:[%s2 + $0x98] sm:$0xff]
    %v103 = vld [vmem:[%s2 + $0xa0] sm:$0xff]
    %v104 = vld [vmem:[%s2 + $0xa8] sm:$0xff]
    %v105 = vld [vmem:[%s2 + $0xb0] sm:$0xff]
    %v106 = vld [vmem:[%s2 + $0xb8] sm:$0xff]
    %v107 = vld [vmem:[%s2 + $0xc0] sm:$0xff]
    %v108 = vld [vmem:[%s2 + $0xc8] sm:$0xff]
    %v109 = vld [vmem:[%s2 + $0xd0] sm:$0xff]
    %v110 = vld [vmem:[%s2 + $0xd8] sm:$0xff]
    %v111 = vld [vmem:[%s2 + $0xe0] sm:$0xff]
    %v112 = vld [vmem:[%s2 + $0xe8] sm:$0xff]
    %v113 = vld [vmem:[%s2 + $0xf0] sm:$0xff]
    %v114 = vld [vmem:[%s2 + $0xf8] sm:$0xff]
    %v115 = vld [vmem:[%s3] sm:$0xff]
    %v116 = vld [vmem:[%s3 + $0x8] sm:$0xff]
    %v117 = vld [vmem:[%s3 + $0x10] sm:$0xff]
    %v118 = vld [vmem:[%s3 + $0x18] sm:$0xff]
    %v119 = vld [vmem:[%s4] sm:$0xff]
    %v120 = vld [vmem:[%s4 + $0x8] sm:$0xff]
    %v121 = vld [vmem:[%s4 + $0x10] sm:$0xff]
    %v122 = vld [vmem:[%s4 + $0x18] sm:$0xff]
    %v123 = vld [vmem:[%s6] sm:$0xf]
    %v124 = vld [vmem:[%s0] sm:$0xff]
    %v125 = vld [vmem:[%s0 + $0x8] sm:$0xff]
    %v126 = vld [vmem:[%s0 + $0x10] sm:$0xff]
    %v127 = vld [vmem:[%s0 + $0x18] sm:$0xff]
    %v128 = vld [vmem:[%s7] sm:$0xff]
    %v129 = vld [vmem:[%s7 + $0x8] sm:$0xff]
    %v130 = vld [vmem:[%s7 + $0x10] sm:$0xff]
    %v131 = vld [vmem:[%s7 + $0x18] sm:$0xff]
    %v132 = vld [vmem:[%s7 + $0x20] sm:$0xff]
    %v133 = vld [vmem:[%s7 + $0x28] sm:$0xff]
    %v134 = vld [vmem:[%s7 + $0x30] sm:$0xff]
    %v135 = vld [vmem:[%s7 + $0x38] sm:$0xff]
    %vm136 = vcmask 523264
    %v138 = vsel %vm136, %v124, 0
    %v141 = vsel %vm136, %v125, 0
    %v144 = vsel %vm136, %v126, 0
    %v147 = vsel %vm136, %v127, 0
    %149 = vmatprep.subr.mxu0 0.0
    %150 = vmatpush1.msra.mxu0 %v128
    %151 = vmatprep.subr.mxu0 0.0
    %152 = vmatpush1.msra.mxu0 %v129
    %153 = vmatprep.subr.mxu0 0.0
    %154 = vmatpush1.msra.mxu0 %v130
    %155 = vmatprep.subr.mxu0 0.0
    %156 = vmatpush1.msra.mxu0 %v131
    %157 = vmatprep.subr.mxu0 0.0
    %158 = vmatpush1.msra.mxu0 %v132
    %159 = vmatprep.subr.mxu0 0.0
    %160 = vmatpush1.msra.mxu0 %v133
    %161 = vmatprep.subr.mxu0 0.0
    %162 = vmatpush1.msra.mxu0 %v134
    %163 = vmatprep.subr.mxu0 0.0
    %164 = vmatpush1.msra.mxu0 %v135
    %165 = vmatprep.subr.mxu0 0.0
    %166 = vmatpush1.msra.mxu0 0.0
    %167 = vmatprep.subr.mxu0 0.0
    %168 = vmatpush1.msra.mxu0 0.0
    %169 = vmatprep.subr.mxu0 0.0
    %170 = vmatpush1.msra.mxu0 0.0
    %171 = vmatprep.subr.mxu0 0.0
    %172 = vmatpush1.msra.mxu0 0.0
    %173 = vmatprep.subr.mxu0 0.0
    %174 = vmatpush1.msra.mxu0 0.0
    %175 = vmatprep.subr.mxu0 0.0
    %176 = vmatpush1.msra.mxu0 0.0
    %177 = vmatprep.subr.mxu0 0.0
    %178 = vmatpush1.msra.mxu0 0.0
    %179 = vmatprep.subr.mxu0 0.0
    %180 = vmatpush1.msra.mxu0 0.0
    %181 = vmatprep.subr.mxu0 0.0
    %182 = vmatpush1.msra.mxu0 0.0
    %183 = vmatprep.subr.mxu0 0.0
    %184 = vmatpush1.msra.mxu0 0.0
    %185 = vmatprep.subr.mxu0 0.0
    %186 = vmatpush1.msra.mxu0 0.0
    %187 = vmatprep.subr.mxu0 0.0
    %188 = vmatpush1.msra.mxu0 0.0
    %189 = vmatprep.subr.mxu0 0.0
    %190 = vmatpush1.msra.mxu0 0.0
    %191 = vmatprep.subr.mxu0 0.0
    %192 = vmatpush1.msra.mxu0 0.0
    %193 = vmatprep.subr.mxu0 0.0
    %194 = vmatpush1.msra.mxu0 0.0
    %195 = vmatprep.subr.mxu0 0.0
    %196 = vmatpush1.msra.mxu0 0.0
    %197 = vmatprep.subr.mxu0 0.0
    %198 = vmatpush1.msra.mxu0 0.0
    %199 = vmatprep.subr.mxu0 0.0
    %200 = vmatpush1.msra.mxu0 0.0
    %201 = vmatprep.subr.mxu0 0.0
    %202 = vmatpush1.msra.mxu0 0.0
    %203 = vmatprep.subr.mxu0 0.0
    %204 = vmatpush1.msra.mxu0 0.0
    %205 = vmatprep.subr.mxu0 0.0
    %206 = vmatpush1.msra.mxu0 0.0
    %207 = vmatprep.subr.mxu0 0.0
    %208 = vmatpush1.msra.mxu0 0.0
    %209 = vmatprep.subr.mxu0 0.0
    %210 = vmatpush1.msra.mxu0 0.0
    %211 = vmatprep.subr.mxu0 0.0
    %212 = vmatpush1.msra.mxu0 0.0
    %213 = vmatprep.mubr.f32.mxu0 0.0
    %214 = vmatmul.mubr.f32.gmra.mrb[0].mxu0 %v138
    %v215 = vpop.f32.mrb[0].mxu0
    %v216 = vadd.f32 0.0, %v215
    %v217 = vpop.f32.mrb[0].mxu0
    %218 = vmatprep.mubr.f32.mxu0 0.0
    %219 = vmatmul.mubr.f32.gmra.mrb[0].mxu0 %v141
    %v220 = vpop.f32.mrb[0].mxu0
    %v221 = vadd.f32 0.0, %v220
    %v222 = vpop.f32.mrb[0].mxu0
    %223 = vmatprep.mubr.f32.mxu0 0.0
    %224 = vmatmul.mubr.f32.gmra.mrb[0].mxu0 %v144
    %v225 = vpop.f32.mrb[0].mxu0
    %v226 = vadd.f32 0.0, %v225
    %v227 = vpop.f32.mrb[0].mxu0
    %228 = vmatprep.mubr.f32.mxu0 0.0
    %229 = vmatmul.mubr.f32.gmra.mrb[0].mxu0 %v147
    %v230 = vpop.f32.mrb[0].mxu0
    %v231 = vadd.f32 0.0, %v230
    %v232 = vpop.f32.mrb[0].mxu0
    %233 = vdwg.mxu0
    %v234 = vld [vmem:[%s8] sm:$0xff]
    %v235 = vld [vmem:[%s8 + $0x8] sm:$0xff]
    %v236 = vld [vmem:[%s8 + $0x10] sm:$0xff]
    %v237 = vld [vmem:[%s8 + $0x18] sm:$0xff]
    %v238 = vld [vmem:[%s9] sm:$0x1]
    %v240 = vlaneseq
    %v241 = vshrl.u32 %v240, 7
    %v242 = vsub.s32 0, %v241
    %v243 = vrot.slane %v238, %v242
    %vm245 = vcmask 261120
    %v247 = vsel %vm245, %v51, 0
    %v250 = vsel %vm245, %v52, 0
    %v253 = vsel %vm245, %v53, 0
    %v256 = vsel %vm245, %v54, 0
    %v259 = vsel %vm245, %v55, 0
    %v262 = vsel %vm245, %v56, 0
    %v265 = vsel %vm245, %v57, 0
    %v268 = vsel %vm245, %v58, 0
    %v271 = vsel %vm245, %v59, 0
    %v274 = vsel %vm245, %v60, 0
    %v277 = vsel %vm245, %v61, 0
    %v280 = vsel %vm245, %v62, 0
    %v283 = vsel %vm245, %v63, 0
    %v286 = vsel %vm245, %v64, 0
    %v289 = vsel %vm245, %v65, 0
    %v292 = vsel %vm245, %v66, 0
    %v295 = vsel %vm245, %v67, 0
    %v298 = vsel %vm245, %v68, 0
    %v301 = vsel %vm245, %v69, 0
    %v304 = vsel %vm245, %v70, 0
    %v307 = vsel %vm245, %v71, 0
    %v310 = vsel %vm245, %v72, 0
    %v313 = vsel %vm245, %v73, 0
    %v316 = vsel %vm245, %v74, 0
    %v319 = vsel %vm245, %v75, 0
    %v322 = vsel %vm245, %v76, 0
    %v325 = vsel %vm245, %v77, 0
    %v328 = vsel %vm245, %v78, 0
    %v331 = vsel %vm245, %v79, 0
    %v334 = vsel %vm245, %v80, 0
    %v337 = vsel %vm245, %v81, 0
    %v340 = vsel %vm245, %v82, 0
    %342 = vmatprep.subr.mxu0 0.0
    %343 = vmatpush1.msra.mxu0 %v234
    %344 = vmatprep.subr.mxu0 0.0
    %345 = vmatpush1.msra.mxu0 %v235
    %346 = vmatprep.subr.mxu0 0.0
    %347 = vmatpush1.msra.mxu0 %v236
    %348 = vmatprep.subr.mxu0 0.0
    %349 = vmatpush1.msra.mxu0 %v237
    %350 = vmatprep.subr.mxu0 0.0
    %351 = vmatpush1.msra.mxu0 0.0
    %352 = vmatprep.subr.mxu0 0.0
    %353 = vmatpush1.msra.mxu0 0.0
    %354 = vmatprep.subr.mxu0 0.0
    %355 = vmatpush1.msra.mxu0 0.0
    %356 = vmatprep.subr.mxu0 0.0
    %357 = vmatpush1.msra.mxu0 0.0
    %358 = vmatprep.subr.mxu0 0.0
    %359 = vmatpush1.msra.mxu0 0.0
    %360 = vmatprep.subr.mxu0 0.0
    %361 = vmatpush1.msra.mxu0 0.0
    %362 = vmatprep.subr.mxu0 0.0
    %363 = vmatpush1.msra.mxu0 0.0
    %364 = vmatprep.subr.mxu0 0.0
    %365 = vmatpush1.msra.mxu0 0.0
    %366 = vmatprep.subr.mxu0 0.0
    %367 = vmatpush1.msra.mxu0 0.0
    %368 = vmatprep.subr.mxu0 0.0
    %369 = vmatpush1.msra.mxu0 0.0
    %370 = vmatprep.subr.mxu0 0.0
    %371 = vmatpush1.msra.mxu0 0.0
    %372 = vmatprep.subr.mxu0 0.0
    %373 = vmatpush1.msra.mxu0 0.0
    %374 = vmatprep.subr.mxu0 0.0
    %375 = vmatpush1.msra.mxu0 0.0
    %376 = vmatprep.subr.mxu0 0.0
    %377 = vmatpush1.msra.mxu0 0.0
    %378 = vmatprep.subr.mxu0 0.0
    %379 = vmatpush1.msra.mxu0 0.0
    %380 = vmatprep.subr.mxu0 0.0
    %381 = vmatpush1.msra.mxu0 0.0
    %382 = vmatprep.subr.mxu0 0.0
    %383 = vmatpush1.msra.mxu0 0.0
    %384 = vmatprep.subr.mxu0 0.0
    %385 = vmatpush1.msra.mxu0 0.0
    %386 = vmatprep.subr.mxu0 0.0
    %387 = vmatpush1.msra.mxu0 0.0
    %388 = vmatprep.subr.mxu0 0.0
    %389 = vmatpush1.msra.mxu0 0.0
    %390 = vmatprep.subr.mxu0 0.0
    %391 = vmatpush1.msra.mxu0 0.0
    %392 = vmatprep.subr.mxu0 0.0
    %393 = vmatpush1.msra.mxu0 0.0
    %394 = vmatprep.subr.mxu0 0.0
    %395 = vmatpush1.msra.mxu0 0.0
    %396 = vmatprep.subr.mxu0 0.0
    %397 = vmatpush1.msra.mxu0 0.0
    %398 = vmatprep.subr.mxu0 0.0
    %399 = vmatpush1.msra.mxu0 0.0
    %400 = vmatprep.subr.mxu0 0.0
    %401 = vmatpush1.msra.mxu0 0.0
    %402 = vmatprep.subr.mxu0 0.0
    %403 = vmatpush1.msra.mxu0 0.0
    %404 = vmatprep.subr.mxu0 0.0
    %405 = vmatpush1.msra.mxu0 0.0
    %406 = vmatprep.mubr.f32.mxu0 0.0
    %407 = vmatmul.mubr.f32.gmra.mrb[0].mxu0 %v247
    %v408 = vpop.f32.mrb[0].mxu0
    %v409 = vadd.f32 %v243, %v408
    %v410 = vpop.f32.mrb[0].mxu0
    %411 = vmatprep.mubr.f32.mxu0 0.0
    %412 = vmatmul.mubr.f32.gmra.mrb[0].mxu0 %v250
    %v413 = vpop.f32.mrb[0].mxu0
    %v414 = vadd.f32 %v243, %v413
    %v415 = vpop.f32.mrb[0].mxu0
    %416 = vmatprep.mubr.f32.mxu0 0.0
    %417 = vmatmul.mubr.f32.gmra.mrb[0].mxu0 %v253
    %v418 = vpop.f32.mrb[0].mxu0
    %v419 = vadd.f32 %v243, %v418
    %v420 = vpop.f32.mrb[0].mxu0
    %421 = vmatprep.mubr.f32.mxu0 0.0
    %422 = vmatmul.mubr.f32.gmra.mrb[0].mxu0 %v256
    %v423 = vpop.f32.mrb[0].mxu0
    %v424 = vadd.f32 %v243, %v423
    %v425 = vpop.f32.mrb[0].mxu0
    %426 = vmatprep.mubr.f32.mxu0 0.0
    %427 = vmatmul.mubr.f32.gmra.mrb[0].mxu0 %v259
    %v428 = vpop.f32.mrb[0].mxu0
    %v429 = vadd.f32 %v243, %v428
    %v430 = vpop.f32.mrb[0].mxu0
    %431 = vmatprep.mubr.f32.mxu0 0.0
    %432 = vmatmul.mubr.f32.gmra.mrb[0].mxu0 %v262
    %v433 = vpop.f32.mrb[0].mxu0
    %v434 = vadd.f32 %v243, %v433
    %v435 = vpop.f32.mrb[0].mxu0
    %436 = vmatprep.mubr.f32.mxu0 0.0
    %437 = vmatmul.mubr.f32.gmra.mrb[0].mxu0 %v265
    %v438 = vpop.f32.mrb[0].mxu0
    %v439 = vadd.f32 %v243, %v438
    %v440 = vpop.f32.mrb[0].mxu0
    %441 = vmatprep.mubr.f32.mxu0 0.0
    %442 = vmatmul.mubr.f32.gmra.mrb[0].mxu0 %v268
    %v443 = vpop.f32.mrb[0].mxu0
    %v444 = vadd.f32 %v243, %v443
    %v445 = vpop.f32.mrb[0].mxu0
    %446 = vmatprep.mubr.f32.mxu0 0.0
    %447 = vmatmul.mubr.f32.gmra.mrb[0].mxu0 %v271
    %v448 = vpop.f32.mrb[0].mxu0
    %v449 = vadd.f32 %v243, %v448
    %v450 = vpop.f32.mrb[0].mxu0
    %451 = vmatprep.mubr.f32.mxu0 0.0
    %452 = vmatmul.mubr.f32.gmra.mrb[0].mxu0 %v274
    %v453 = vpop.f32.mrb[0].mxu0
    %v454 = vadd.f32 %v243, %v453
    %v455 = vpop.f32.mrb[0].mxu0
    %456 = vmatprep.mubr.f32.mxu0 0.0
    %457 = vmatmul.mubr.f32.gmra.mrb[0].mxu0 %v277
    %v458 = vpop.f32.mrb[0].mxu0
    %v459 = vadd.f32 %v243, %v458
    %v460 = vpop.f32.mrb[0].mxu0
    %461 = vmatprep.mubr.f32.mxu0 0.0
    %462 = vmatmul.mubr.f32.gmra.mrb[0].mxu0 %v280
    %v463 = vpop.f32.mrb[0].mxu0
    %v464 = vadd.f32 %v243, %v463
    %v465 = vpop.f32.mrb[0].mxu0
    %466 = vmatprep.mubr.f32.mxu0 0.0
    %467 = vmatmul.mubr.f32.gmra.mrb[0].mxu0 %v283
    %v468 = vpop.f32.mrb[0].mxu0
    %v469 = vadd.f32 %v243, %v468
    %v470 = vpop.f32.mrb[0].mxu0
    %471 = vmatprep.mubr.f32.mxu0 0.0
    %472 = vmatmul.mubr.f32.gmra.mrb[0].mxu0 %v286
    %v473 = vpop.f32.mrb[0].mxu0
    %v474 = vadd.f32 %v243, %v473
    %v475 = vpop.f32.mrb[0].mxu0
    %476 = vmatprep.mubr.f32.mxu0 0.0
    %477 = vmatmul.mubr.f32.gmra.mrb[0].mxu0 %v289
    %v478 = vpop.f32.mrb[0].mxu0
    %v479 = vadd.f32 %v243, %v478
    %v480 = vpop.f32.mrb[0].mxu0
    %481 = vmatprep.mubr.f32.mxu0 0.0
    %482 = vmatmul.mubr.f32.gmra.mrb[0].mxu0 %v292
    %v483 = vpop.f32.mrb[0].mxu0
    %v484 = vadd.f32 %v243, %v483
    %v485 = vpop.f32.mrb[0].mxu0
    %486 = vmatprep.mubr.f32.mxu0 0.0
    %487 = vmatmul.mubr.f32.gmra.mrb[0].mxu0 %v295
    %v488 = vpop.f32.mrb[0].mxu0
    %v489 = vadd.f32 %v243, %v488
    %v490 = vpop.f32.mrb[0].mxu0
    %491 = vmatprep.mubr.f32.mxu0 0.0
    %492 = vmatmul.mubr.f32.gmra.mrb[0].mxu0 %v298
    %v493 = vpop.f32.mrb[0].mxu0
    %v494 = vadd.f32 %v243, %v493
    %v495 = vpop.f32.mrb[0].mxu0
    %496 = vmatprep.mubr.f32.mxu0 0.0
    %497 = vmatmul.mubr.f32.gmra.mrb[0].mxu0 %v301
    %v498 = vpop.f32.mrb[0].mxu0
    %v499 = vadd.f32 %v243, %v498
    %v500 = vpop.f32.mrb[0].mxu0
    %501 = vmatprep.mubr.f32.mxu0 0.0
    %502 = vmatmul.mubr.f32.gmra.mrb[0].mxu0 %v304
    %v503 = vpop.f32.mrb[0].mxu0
    %v504 = vadd.f32 %v243, %v503
    %v505 = vpop.f32.mrb[0].mxu0
    %506 = vmatprep.mubr.f32.mxu0 0.0
    %507 = vmatmul.mubr.f32.gmra.mrb[0].mxu0 %v307
    %v508 = vpop.f32.mrb[0].mxu0
    %v509 = vadd.f32 %v243, %v508
    %v510 = vpop.f32.mrb[0].mxu0
    %511 = vmatprep.mubr.f32.mxu0 0.0
    %512 = vmatmul.mubr.f32.gmra.mrb[0].mxu0 %v310
    %v513 = vpop.f32.mrb[0].mxu0
    %v514 = vadd.f32 %v243, %v513
    %v515 = vpop.f32.mrb[0].mxu0
    %516 = vmatprep.mubr.f32.mxu0 0.0
    %517 = vmatmul.mubr.f32.gmra.mrb[0].mxu0 %v313
    %v518 = vpop.f32.mrb[0].mxu0
    %v519 = vadd.f32 %v243, %v518
    %v520 = vpop.f32.mrb[0].mxu0
    %521 = vmatprep.mubr.f32.mxu0 0.0
    %522 = vmatmul.mubr.f32.gmra.mrb[0].mxu0 %v316
    %v523 = vpop.f32.mrb[0].mxu0
    %v524 = vadd.f32 %v243, %v523
    %v525 = vpop.f32.mrb[0].mxu0
    %526 = vmatprep.mubr.f32.mxu0 0.0
    %527 = vmatmul.mubr.f32.gmra.mrb[0].mxu0 %v319
    %v528 = vpop.f32.mrb[0].mxu0
    %v529 = vadd.f32 %v243, %v528
    %v530 = vpop.f32.mrb[0].mxu0
    %531 = vmatprep.mubr.f32.mxu0 0.0
    %532 = vmatmul.mubr.f32.gmra.mrb[0].mxu0 %v322
    %v533 = vpop.f32.mrb[0].mxu0
    %v534 = vadd.f32 %v243, %v533
    %v535 = vpop.f32.mrb[0].mxu0
    %536 = vmatprep.mubr.f32.mxu0 0.0
    %537 = vmatmul.mubr.f32.gmra.mrb[0].mxu0 %v325
    %v538 = vpop.f32.mrb[0].mxu0
    %v539 = vadd.f32 %v243, %v538
    %v540 = vpop.f32.mrb[0].mxu0
    %541 = vmatprep.mubr.f32.mxu0 0.0
    %542 = vmatmul.mubr.f32.gmra.mrb[0].mxu0 %v328
    %v543 = vpop.f32.mrb[0].mxu0
    %v544 = vadd.f32 %v243, %v543
    %v545 = vpop.f32.mrb[0].mxu0
    %546 = vmatprep.mubr.f32.mxu0 0.0
    %547 = vmatmul.mubr.f32.gmra.mrb[0].mxu0 %v331
    %v548 = vpop.f32.mrb[0].mxu0
    %v549 = vadd.f32 %v243, %v548
    %v550 = vpop.f32.mrb[0].mxu0
    %551 = vmatprep.mubr.f32.mxu0 0.0
    %552 = vmatmul.mubr.f32.gmra.mrb[0].mxu0 %v334
    %v553 = vpop.f32.mrb[0].mxu0
    %v554 = vadd.f32 %v243, %v553
    %v555 = vpop.f32.mrb[0].mxu0
    %556 = vmatprep.mubr.f32.mxu0 0.0
    %557 = vmatmul.mubr.f32.gmra.mrb[0].mxu0 %v337
    %v558 = vpop.f32.mrb[0].mxu0
    %v559 = vadd.f32 %v243, %v558
    %v560 = vpop.f32.mrb[0].mxu0
    %561 = vmatprep.mubr.f32.mxu0 0.0
    %562 = vmatmul.mubr.f32.gmra.mrb[0].mxu0 %v340
    %v563 = vpop.f32.mrb[0].mxu0
    %v564 = vadd.f32 %v243, %v563
    %v565 = vpop.f32.mrb[0].mxu0
    %566 = vdwg.mxu0
    %vm567 = vcmp.gt.f32.partialorder %v409, 0.0
    %vm568 = vcmp.gt.f32.partialorder %v414, 0.0
    %vm569 = vcmp.gt.f32.partialorder %v419, 0.0
    %vm570 = vcmp.gt.f32.partialorder %v424, 0.0
    %vm571 = vcmp.gt.f32.partialorder %v429, 0.0
    %vm572 = vcmp.gt.f32.partialorder %v434, 0.0
    %vm573 = vcmp.gt.f32.partialorder %v439, 0.0
    %vm574 = vcmp.gt.f32.partialorder %v444, 0.0
    %vm575 = vcmp.gt.f32.partialorder %v449, 0.0
    %vm576 = vcmp.gt.f32.partialorder %v454, 0.0
    %vm577 = vcmp.gt.f32.partialorder %v459, 0.0
    %vm578 = vcmp.gt.f32.partialorder %v464, 0.0
    %vm579 = vcmp.gt.f32.partialorder %v469, 0.0
    %vm580 = vcmp.gt.f32.partialorder %v474, 0.0
    %vm581 = vcmp.gt.f32.partialorder %v479, 0.0
    %vm582 = vcmp.gt.f32.partialorder %v484, 0.0
    %vm583 = vcmp.gt.f32.partialorder %v489, 0.0
    %vm584 = vcmp.gt.f32.partialorder %v494, 0.0
    %vm585 = vcmp.gt.f32.partialorder %v499, 0.0
    %vm586 = vcmp.gt.f32.partialorder %v504, 0.0
    %vm587 = vcmp.gt.f32.partialorder %v509, 0.0
    %vm588 = vcmp.gt.f32.partialorder %v514, 0.0
    %vm589 = vcmp.gt.f32.partialorder %v519, 0.0
    %vm590 = vcmp.gt.f32.partialorder %v524, 0.0
    %vm591 = vcmp.gt.f32.partialorder %v529, 0.0
    %vm592 = vcmp.gt.f32.partialorder %v534, 0.0
    %vm593 = vcmp.gt.f32.partialorder %v539, 0.0
    %vm594 = vcmp.gt.f32.partialorder %v544, 0.0
    %vm595 = vcmp.gt.f32.partialorder %v549, 0.0
    %vm596 = vcmp.gt.f32.partialorder %v554, 0.0
    %vm597 = vcmp.gt.f32.partialorder %v559, 0.0
    %vm598 = vcmp.gt.f32.partialorder %v564, 0.0
    %v599 = vmin.f32 %v409, 0.0
    %v600 = vmin.f32 %v414, 0.0
    %v601 = vmin.f32 %v419, 0.0
    %v602 = vmin.f32 %v424, 0.0
    %v603 = vmin.f32 %v429, 0.0
    %v604 = vmin.f32 %v434, 0.0
    %v605 = vmin.f32 %v439, 0.0
    %v606 = vmin.f32 %v444, 0.0
    %v607 = vmin.f32 %v449, 0.0
    %v608 = vmin.f32 %v454, 0.0
    %v609 = vmin.f32 %v459, 0.0
    %v610 = vmin.f32 %v464, 0.0
    %v611 = vmin.f32 %v469, 0.0
    %v612 = vmin.f32 %v474, 0.0
    %v613 = vmin.f32 %v479, 0.0
    %v614 = vmin.f32 %v484, 0.0
    %v615 = vmin.f32 %v489, 0.0
    %v616 = vmin.f32 %v494, 0.0
    %v617 = vmin.f32 %v499, 0.0
    %v618 = vmin.f32 %v504, 0.0
    %v619 = vmin.f32 %v509, 0.0
    %v620 = vmin.f32 %v514, 0.0
    %v621 = vmin.f32 %v519, 0.0
    %v622 = vmin.f32 %v524, 0.0
    %v623 = vmin.f32 %v529, 0.0
    %v624 = vmin.f32 %v534, 0.0
    %v625 = vmin.f32 %v539, 0.0
    %v626 = vmin.f32 %v544, 0.0
    %v627 = vmin.f32 %v549, 0.0
    %v628 = vmin.f32 %v554, 0.0
    %v629 = vmin.f32 %v559, 0.0
    %v630 = vmin.f32 %v564, 0.0
    %v631 = vmul.f32 %v599, 1.442695
    %v632 = vpow.pop %v631
    %v633 = vmul.f32 %v600, 1.442695
    %v634 = vpow.pop %v633
    %v635 = vmul.f32 %v601, 1.442695
    %v636 = vpow.pop %v635
    %v637 = vmul.f32 %v602, 1.442695
    %v638 = vpow.pop %v637
    %v639 = vmul.f32 %v603, 1.442695
    %v640 = vpow.pop %v639
    %v641 = vmul.f32 %v604, 1.442695
    %v642 = vpow.pop %v641
    %v643 = vmul.f32 %v605, 1.442695
    %v644 = vpow.pop %v643
    %v645 = vmul.f32 %v606, 1.442695
    %v646 = vpow.pop %v645
    %v647 = vmul.f32 %v607, 1.442695
    %v648 = vpow.pop %v647
    %v649 = vmul.f32 %v608, 1.442695
    %v650 = vpow.pop %v649
    %v651 = vmul.f32 %v609, 1.442695
    %v652 = vpow.pop %v651
    %v653 = vmul.f32 %v610, 1.442695
    %v654 = vpow.pop %v653
    %v655 = vmul.f32 %v611, 1.442695
    %v656 = vpow.pop %v655
    %v657 = vmul.f32 %v612, 1.442695
    %v658 = vpow.pop %v657
    %v659 = vmul.f32 %v613, 1.442695
    %v660 = vpow.pop %v659
    %v661 = vmul.f32 %v614, 1.442695
    %v662 = vpow.pop %v661
    %v663 = vmul.f32 %v615, 1.442695
    %v664 = vpow.pop %v663
    %v665 = vmul.f32 %v616, 1.442695
    %v666 = vpow.pop %v665
    %v667 = vmul.f32 %v617, 1.442695
    %v668 = vpow.pop %v667
    %v669 = vmul.f32 %v618, 1.442695
    %v670 = vpow.pop %v669
    %v671 = vmul.f32 %v619, 1.442695
    %v672 = vpow.pop %v671
    %v673 = vmul.f32 %v620, 1.442695
    %v674 = vpow.pop %v673
    %v675 = vmul.f32 %v621, 1.442695
    %v676 = vpow.pop %v675
    %v677 = vmul.f32 %v622, 1.442695
    %v678 = vpow.pop %v677
    %v679 = vmul.f32 %v623, 1.442695
    %v680 = vpow.pop %v679
    %v681 = vmul.f32 %v624, 1.442695
    %v682 = vpow.pop %v681
    %v683 = vmul.f32 %v625, 1.442695
    %v684 = vpow.pop %v683
    %v685 = vmul.f32 %v626, 1.442695
    %v686 = vpow.pop %v685
    %v687 = vmul.f32 %v627, 1.442695
    %v688 = vpow.pop %v687
    %v689 = vmul.f32 %v628, 1.442695
    %v690 = vpow.pop %v689
    %v691 = vmul.f32 %v629, 1.442695
    %v692 = vpow.pop %v691
    %v693 = vmul.f32 %v630, 1.442695
    %v694 = vpow.pop %v693
    %v695 = vsub.f32 %v632, 1.0
    %v696 = vsub.f32 %v634, 1.0
    %v697 = vsub.f32 %v636, 1.0
    %v698 = vsub.f32 %v638, 1.0
    %v699 = vsub.f32 %v640, 1.0
    %v700 = vsub.f32 %v642, 1.0
    %v701 = vsub.f32 %v644, 1.0
    %v702 = vsub.f32 %v646, 1.0
    %v703 = vsub.f32 %v648, 1.0
    %v704 = vsub.f32 %v650, 1.0
    %v705 = vsub.f32 %v652, 1.0
    %v706 = vsub.f32 %v654, 1.0
    %v707 = vsub.f32 %v656, 1.0
    %v708 = vsub.f32 %v658, 1.0
    %v709 = vsub.f32 %v660, 1.0
    %v710 = vsub.f32 %v662, 1.0
    %v711 = vsub.f32 %v664, 1.0
    %v712 = vsub.f32 %v666, 1.0
    %v713 = vsub.f32 %v668, 1.0
    %v714 = vsub.f32 %v670, 1.0
    %v715 = vsub.f32 %v672, 1.0
    %v716 = vsub.f32 %v674, 1.0
    %v717 = vsub.f32 %v676, 1.0
    %v718 = vsub.f32 %v678, 1.0
    %v719 = vsub.f32 %v680, 1.0
    %v720 = vsub.f32 %v682, 1.0
    %v721 = vsub.f32 %v684, 1.0
    %v722 = vsub.f32 %v686, 1.0
    %v723 = vsub.f32 %v688, 1.0
    %v724 = vsub.f32 %v690, 1.0
    %v725 = vsub.f32 %v692, 1.0
    %v726 = vsub.f32 %v694, 1.0
    %v727 = vmul.f32 %v695, 1.6732632
    %v728 = vmul.f32 %v696, 1.6732632
    %v729 = vmul.f32 %v697, 1.6732632
    %v730 = vmul.f32 %v698, 1.6732632
    %v731 = vmul.f32 %v699, 1.6732632
    %v732 = vmul.f32 %v700, 1.6732632
    %v733 = vmul.f32 %v701, 1.6732632
    %v734 = vmul.f32 %v702, 1.6732632
    %v735 = vmul.f32 %v703, 1.6732632
    %v736 = vmul.f32 %v704, 1.6732632
    %v737 = vmul.f32 %v705, 1.6732632
    %v738 = vmul.f32 %v706, 1.6732632
    %v739 = vmul.f32 %v707, 1.6732632
    %v740 = vmul.f32 %v708, 1.6732632
    %v741 = vmul.f32 %v709, 1.6732632
    %v742 = vmul.f32 %v710, 1.6732632
    %v743 = vmul.f32 %v711, 1.6732632
    %v744 = vmul.f32 %v712, 1.6732632
    %v745 = vmul.f32 %v713, 1.6732632
    %v746 = vmul.f32 %v714, 1.6732632
    %v747 = vmul.f32 %v715, 1.6732632
    %v748 = vmul.f32 %v716, 1.6732632
    %v749 = vmul.f32 %v717, 1.6732632
    %v750 = vmul.f32 %v718, 1.6732632
    %v751 = vmul.f32 %v719, 1.6732632
    %v752 = vmul.f32 %v720, 1.6732632
    %v753 = vmul.f32 %v721, 1.6732632
    %v754 = vmul.f32 %v722, 1.6732632
    %v755 = vmul.f32 %v723, 1.6732632
    %v756 = vmul.f32 %v724, 1.6732632
    %v757 = vmul.f32 %v725, 1.6732632
    %v758 = vmul.f32 %v726, 1.6732632
    %v759 = vsel %vm567, %v409, %v727
    %v760 = vsel %vm568, %v414, %v728
    %v761 = vsel %vm569, %v419, %v729
    %v762 = vsel %vm570, %v424, %v730
    %v763 = vsel %vm571, %v429, %v731
    %v764 = vsel %vm572, %v434, %v732
    %v765 = vsel %vm573, %v439, %v733
    %v766 = vsel %vm574, %v444, %v734
    %v767 = vsel %vm575, %v449, %v735
    %v768 = vsel %vm576, %v454, %v736
    %v769 = vsel %vm577, %v459, %v737
    %v770 = vsel %vm578, %v464, %v738
    %v771 = vsel %vm579, %v469, %v739
    %v772 = vsel %vm580, %v474, %v740
    %v773 = vsel %vm581, %v479, %v741
    %v774 = vsel %vm582, %v484, %v742
    %v775 = vsel %vm583, %v489, %v743
    %v776 = vsel %vm584, %v494, %v744
    %v777 = vsel %vm585, %v499, %v745
    %v778 = vsel %vm586, %v504, %v746
    %v779 = vsel %vm587, %v509, %v747
    %v780 = vsel %vm588, %v514, %v748
    %v781 = vsel %vm589, %v519, %v749
    %v782 = vsel %vm590, %v524, %v750
    %v783 = vsel %vm591, %v529, %v751
    %v784 = vsel %vm592, %v534, %v752
    %v785 = vsel %vm593, %v539, %v753
    %v786 = vsel %vm594, %v544, %v754
    %v787 = vsel %vm595, %v549, %v755
    %v788 = vsel %vm596, %v554, %v756
    %v789 = vsel %vm597, %v559, %v757
    %v790 = vsel %vm598, %v564, %v758
    %v791 = vmul.f32 %v759, 1.050701
    %v792 = vmul.f32 %v760, 1.050701
    %v793 = vmul.f32 %v761, 1.050701
    %v794 = vmul.f32 %v762, 1.050701
    %v795 = vmul.f32 %v763, 1.050701
    %v796 = vmul.f32 %v764, 1.050701
    %v797 = vmul.f32 %v765, 1.050701
    %v798 = vmul.f32 %v766, 1.050701
    %v799 = vmul.f32 %v767, 1.050701
    %v800 = vmul.f32 %v768, 1.050701
    %v801 = vmul.f32 %v769, 1.050701
    %v802 = vmul.f32 %v770, 1.050701
    %v803 = vmul.f32 %v771, 1.050701
    %v804 = vmul.f32 %v772, 1.050701
    %v805 = vmul.f32 %v773, 1.050701
    %v806 = vmul.f32 %v774, 1.050701
    %v807 = vmul.f32 %v775, 1.050701
    %v808 = vmul.f32 %v776, 1.050701
    %v809 = vmul.f32 %v777, 1.050701
    %v810 = vmul.f32 %v778, 1.050701
    %v811 = vmul.f32 %v779, 1.050701
    %v812 = vmul.f32 %v780, 1.050701
    %v813 = vmul.f32 %v781, 1.050701
    %v814 = vmul.f32 %v782, 1.050701
    %v815 = vmul.f32 %v783, 1.050701
    %v816 = vmul.f32 %v784, 1.050701
    %v817 = vmul.f32 %v785, 1.050701
    %v818 = vmul.f32 %v786, 1.050701
    %v819 = vmul.f32 %v787, 1.050701
    %v820 = vmul.f32 %v788, 1.050701
    %v821 = vmul.f32 %v789, 1.050701
    %v822 = vmul.f32 %v790, 1.050701
    %v823 = vmul.f32 %v791, %v83
    %v824 = vmul.f32 %v792, %v84
    %v825 = vmul.f32 %v793, %v85
    %v826 = vmul.f32 %v794, %v86
    %v827 = vmul.f32 %v795, %v87
    %v828 = vmul.f32 %v796, %v88
    %v829 = vmul.f32 %v797, %v89
    %v830 = vmul.f32 %v798, %v90
    %v831 = vmul.f32 %v799, %v91
    %v832 = vmul.f32 %v800, %v92
    %v833 = vmul.f32 %v801, %v93
    %v834 = vmul.f32 %v802, %v94
    %v835 = vmul.f32 %v803, %v95
    %v836 = vmul.f32 %v804, %v96
    %v837 = vmul.f32 %v805, %v97
    %v838 = vmul.f32 %v806, %v98
    %v839 = vmul.f32 %v807, %v99
    %v840 = vmul.f32 %v808, %v100
    %v841 = vmul.f32 %v809, %v101
    %v842 = vmul.f32 %v810, %v102
    %v843 = vmul.f32 %v811, %v103
    %v844 = vmul.f32 %v812, %v104
    %v845 = vmul.f32 %v813, %v105
    %v846 = vmul.f32 %v814, %v106
    %v847 = vmul.f32 %v815, %v107
    %v848 = vmul.f32 %v816, %v108
    %v849 = vmul.f32 %v817, %v109
    %v850 = vmul.f32 %v818, %v110
    %v851 = vmul.f32 %v819, %v111
    %v852 = vmul.f32 %v820, %v112
    %v853 = vmul.f32 %v821, %v113
    %v854 = vmul.f32 %v822, %v114
    %v855 = vmul.f32 %v823, %v216
    %v856 = vmul.f32 %v824, %v216
    %v857 = vmul.f32 %v825, %v216
    %v858 = vmul.f32 %v826, %v216
    %v859 = vmul.f32 %v827, %v216
    %v860 = vmul.f32 %v828, %v216
    %v861 = vmul.f32 %v829, %v216
    %v862 = vmul.f32 %v830, %v216
    %v863 = vmul.f32 %v831, %v221
    %v864 = vmul.f32 %v832, %v221
    %v865 = vmul.f32 %v833, %v221
    %v866 = vmul.f32 %v834, %v221
    %v867 = vmul.f32 %v835, %v221
    %v868 = vmul.f32 %v836, %v221
    %v869 = vmul.f32 %v837, %v221
    %v870 = vmul.f32 %v838, %v221
    %v871 = vmul.f32 %v839, %v226
    %v872 = vmul.f32 %v840, %v226
    %v873 = vmul.f32 %v841, %v226
    %v874 = vmul.f32 %v842, %v226
    %v875 = vmul.f32 %v843, %v226
    %v876 = vmul.f32 %v844, %v226
    %v877 = vmul.f32 %v845, %v226
    %v878 = vmul.f32 %v846, %v226
    %v879 = vmul.f32 %v847, %v231
    %v880 = vmul.f32 %v848, %v231
    %v881 = vmul.f32 %v849, %v231
    %v882 = vmul.f32 %v850, %v231
    %v883 = vmul.f32 %v851, %v231
    %v884 = vmul.f32 %v852, %v231
    %v885 = vmul.f32 %v853, %v231
    %v886 = vmul.f32 %v854, %v231
    %v887 = vsel %vm245, %v855, 0.0
    %v888 = vrot.slane %v887, 4
    %v889 = vadd.f32 %v887, %v888
    %v890 = vrot.slane %v889, 2
    %v891 = vadd.f32 %v889, %v890
    %v892 = vrot.slane %v891, 1
    %v893 = vadd.f32 %v891, %v892
    %v894 = vsel %vm245, %v856, 0.0
    %v895 = vrot.slane %v894, 4
    %v896 = vadd.f32 %v894, %v895
    %v897 = vrot.slane %v896, 2
    %v898 = vadd.f32 %v896, %v897
    %v899 = vrot.slane %v898, 1
    %v900 = vadd.f32 %v898, %v899
    %v901 = vsel %vm245, %v857, 0.0
    %v902 = vrot.slane %v901, 4
    %v903 = vadd.f32 %v901, %v902
    %v904 = vrot.slane %v903, 2
    %v905 = vadd.f32 %v903, %v904
    %v906 = vrot.slane %v905, 1
    %v907 = vadd.f32 %v905, %v906
    %v908 = vsel %vm245, %v858, 0.0
    %v909 = vrot.slane %v908, 4
    %v910 = vadd.f32 %v908, %v909
    %v911 = vrot.slane %v910, 2
    %v912 = vadd.f32 %v910, %v911
    %v913 = vrot.slane %v912, 1
    %v914 = vadd.f32 %v912, %v913
    %v915 = vsel %vm245, %v859, 0.0
    %v916 = vrot.slane %v915, 4
    %v917 = vadd.f32 %v915, %v916
    %v918 = vrot.slane %v917, 2
    %v919 = vadd.f32 %v917, %v918
    %v920 = vrot.slane %v919, 1
    %v921 = vadd.f32 %v919, %v920
    %v922 = vsel %vm245, %v860, 0.0
    %v923 = vrot.slane %v922, 4
    %v924 = vadd.f32 %v922, %v923
    %v925 = vrot.slane %v924, 2
    %v926 = vadd.f32 %v924, %v925
    %v927 = vrot.slane %v926, 1
    %v928 = vadd.f32 %v926, %v927
    %v929 = vsel %vm245, %v861, 0.0
    %v930 = vrot.slane %v929, 4
    %v931 = vadd.f32 %v929, %v930
    %v932 = vrot.slane %v931, 2
    %v933 = vadd.f32 %v931, %v932
    %v934 = vrot.slane %v933, 1
    %v935 = vadd.f32 %v933, %v934
    %v936 = vsel %vm245, %v862, 0.0
    %v937 = vrot.slane %v936, 4
    %v938 = vadd.f32 %v936, %v937
    %v939 = vrot.slane %v938, 2
    %v940 = vadd.f32 %v938, %v939
    %v941 = vrot.slane %v940, 1
    %v942 = vadd.f32 %v940, %v941
    %v943 = vsel %vm245, %v863, 0.0
    %v944 = vrot.slane %v943, 4
    %v945 = vadd.f32 %v943, %v944
    %v946 = vrot.slane %v945, 2
    %v947 = vadd.f32 %v945, %v946
    %v948 = vrot.slane %v947, 1
    %v949 = vadd.f32 %v947, %v948
    %v950 = vsel %vm245, %v864, 0.0
    %v951 = vrot.slane %v950, 4
    %v952 = vadd.f32 %v950, %v951
    %v953 = vrot.slane %v952, 2
    %v954 = vadd.f32 %v952, %v953
    %v955 = vrot.slane %v954, 1
    %v956 = vadd.f32 %v954, %v955
    %v957 = vsel %vm245, %v865, 0.0
    %v958 = vrot.slane %v957, 4
    %v959 = vadd.f32 %v957, %v958
    %v960 = vrot.slane %v959, 2
    %v961 = vadd.f32 %v959, %v960
    %v962 = vrot.slane %v961, 1
    %v963 = vadd.f32 %v961, %v962
    %v964 = vsel %vm245, %v866, 0.0
    %v965 = vrot.slane %v964, 4
    %v966 = vadd.f32 %v964, %v965
    %v967 = vrot.slane %v966, 2
    %v968 = vadd.f32 %v966, %v967
    %v969 = vrot.slane %v968, 1
    %v970 = vadd.f32 %v968, %v969
    %v971 = vsel %vm245, %v867, 0.0
    %v972 = vrot.slane %v971, 4
    %v973 = vadd.f32 %v971, %v972
    %v974 = vrot.slane %v973, 2
    %v975 = vadd.f32 %v973, %v974
    %v976 = vrot.slane %v975, 1
    %v977 = vadd.f32 %v975, %v976
    %v978 = vsel %vm245, %v868, 0.0
    %v979 = vrot.slane %v978, 4
    %v980 = vadd.f32 %v978, %v979
    %v981 = vrot.slane %v980, 2
    %v982 = vadd.f32 %v980, %v981
    %v983 = vrot.slane %v982, 1
    %v984 = vadd.f32 %v982, %v983
    %v985 = vsel %vm245, %v869, 0.0
    %v986 = vrot.slane %v985, 4
    %v987 = vadd.f32 %v985, %v986
    %v988 = vrot.slane %v987, 2
    %v989 = vadd.f32 %v987, %v988
    %v990 = vrot.slane %v989, 1
    %v991 = vadd.f32 %v989, %v990
    %v992 = vsel %vm245, %v870, 0.0
    %v993 = vrot.slane %v992, 4
    %v994 = vadd.f32 %v992, %v993
    %v995 = vrot.slane %v994, 2
    %v996 = vadd.f32 %v994, %v995
    %v997 = vrot.slane %v996, 1
    %v998 = vadd.f32 %v996, %v997
    %v999 = vsel %vm245, %v871, 0.0
    %v1000 = vrot.slane %v999, 4
    %v1001 = vadd.f32 %v999, %v1000
    %v1002 = vrot.slane %v1001, 2
    %v1003 = vadd.f32 %v1001, %v1002
    %v1004 = vrot.slane %v1003, 1
    %v1005 = vadd.f32 %v1003, %v1004
    %v1006 = vsel %vm245, %v872, 0.0
    %v1007 = vrot.slane %v1006, 4
    %v1008 = vadd.f32 %v1006, %v1007
    %v1009 = vrot.slane %v1008, 2
    %v1010 = vadd.f32 %v1008, %v1009
    %v1011 = vrot.slane %v1010, 1
    %v1012 = vadd.f32 %v1010, %v1011
    %v1013 = vsel %vm245, %v873, 0.0
    %v1014 = vrot.slane %v1013, 4
    %v1015 = vadd.f32 %v1013, %v1014
    %v1016 = vrot.slane %v1015, 2
    %v1017 = vadd.f32 %v1015, %v1016
    %v1018 = vrot.slane %v1017, 1
    %v1019 = vadd.f32 %v1017, %v1018
    %v1020 = vsel %vm245, %v874, 0.0
    %v1021 = vrot.slane %v1020, 4
    %v1022 = vadd.f32 %v1020, %v1021
    %v1023 = vrot.slane %v1022, 2
    %v1024 = vadd.f32 %v1022, %v1023
    %v1025 = vrot.slane %v1024, 1
    %v1026 = vadd.f32 %v1024, %v1025
    %v1027 = vsel %vm245, %v875, 0.0
    %v1028 = vrot.slane %v1027, 4
    %v1029 = vadd.f32 %v1027, %v1028
    %v1030 = vrot.slane %v1029, 2
    %v1031 = vadd.f32 %v1029, %v1030
    %v1032 = vrot.slane %v1031, 1
    %v1033 = vadd.f32 %v1031, %v1032
    %v1034 = vsel %vm245, %v876, 0.0
    %v1035 = vrot.slane %v1034, 4
    %v1036 = vadd.f32 %v1034, %v1035
    %v1037 = vrot.slane %v1036, 2
    %v1038 = vadd.f32 %v1036, %v1037
    %v1039 = vrot.slane %v1038, 1
    %v1040 = vadd.f32 %v1038, %v1039
    %v1041 = vsel %vm245, %v877, 0.0
    %v1042 = vrot.slane %v1041, 4
    %v1043 = vadd.f32 %v1041, %v1042
    %v1044 = vrot.slane %v1043, 2
    %v1045 = vadd.f32 %v1043, %v1044
    %v1046 = vrot.slane %v1045, 1
    %v1047 = vadd.f32 %v1045, %v1046
    %v1048 = vsel %vm245, %v878, 0.0
    %v1049 = vrot.slane %v1048, 4
    %v1050 = vadd.f32 %v1048, %v1049
    %v1051 = vrot.slane %v1050, 2
    %v1052 = vadd.f32 %v1050, %v1051
    %v1053 = vrot.slane %v1052, 1
    %v1054 = vadd.f32 %v1052, %v1053
    %v1055 = vsel %vm245, %v879, 0.0
    %v1056 = vrot.slane %v1055, 4
    %v1057 = vadd.f32 %v1055, %v1056
    %v1058 = vrot.slane %v1057, 2
    %v1059 = vadd.f32 %v1057, %v1058
    %v1060 = vrot.slane %v1059, 1
    %v1061 = vadd.f32 %v1059, %v1060
    %v1062 = vsel %vm245, %v880, 0.0
    %v1063 = vrot.slane %v1062, 4
    %v1064 = vadd.f32 %v1062, %v1063
    %v1065 = vrot.slane %v1064, 2
    %v1066 = vadd.f32 %v1064, %v1065
    %v1067 = vrot.slane %v1066, 1
    %v1068 = vadd.f32 %v1066, %v1067
    %v1069 = vsel %vm245, %v881, 0.0
    %v1070 = vrot.slane %v1069, 4
    %v1071 = vadd.f32 %v1069, %v1070
    %v1072 = vrot.slane %v1071, 2
    %v1073 = vadd.f32 %v1071, %v1072
    %v1074 = vrot.slane %v1073, 1
    %v1075 = vadd.f32 %v1073, %v1074
    %v1076 = vsel %vm245, %v882, 0.0
    %v1077 = vrot.slane %v1076, 4
    %v1078 = vadd.f32 %v1076, %v1077
    %v1079 = vrot.slane %v1078, 2
    %v1080 = vadd.f32 %v1078, %v1079
    %v1081 = vrot.slane %v1080, 1
    %v1082 = vadd.f32 %v1080, %v1081
    %v1083 = vsel %vm245, %v883, 0.0
    %v1084 = vrot.slane %v1083, 4
    %v1085 = vadd.f32 %v1083, %v1084
    %v1086 = vrot.slane %v1085, 2
    %v1087 = vadd.f32 %v1085, %v1086
    %v1088 = vrot.slane %v1087, 1
    %v1089 = vadd.f32 %v1087, %v1088
    %v1090 = vsel %vm245, %v884, 0.0
    %v1091 = vrot.slane %v1090, 4
    %v1092 = vadd.f32 %v1090, %v1091
    %v1093 = vrot.slane %v1092, 2
    %v1094 = vadd.f32 %v1092, %v1093
    %v1095 = vrot.slane %v1094, 1
    %v1096 = vadd.f32 %v1094, %v1095
    %v1097 = vsel %vm245, %v885, 0.0
    %v1098 = vrot.slane %v1097, 4
    %v1099 = vadd.f32 %v1097, %v1098
    %v1100 = vrot.slane %v1099, 2
    %v1101 = vadd.f32 %v1099, %v1100
    %v1102 = vrot.slane %v1101, 1
    %v1103 = vadd.f32 %v1101, %v1102
    %v1104 = vsel %vm245, %v886, 0.0
    %v1105 = vrot.slane %v1104, 4
    %v1106 = vadd.f32 %v1104, %v1105
    %v1107 = vrot.slane %v1106, 2
    %v1108 = vadd.f32 %v1106, %v1107
    %v1109 = vrot.slane %v1108, 1
    %v1110 = vadd.f32 %v1108, %v1109
    %v1111 = vld [vmem:[%s10] sm:$0xff]
    %v1112 = vld [vmem:[%s10 + $0x8] sm:$0xff]
    %v1113 = vld [vmem:[%s10 + $0x10] sm:$0xff]
    %v1114 = vld [vmem:[%s10 + $0x18] sm:$0xff]
    %v1115 = vld [vmem:[%s11] sm:$0xff]
    %v1116 = vld [vmem:[%s11 + $0x8] sm:$0xff]
    %v1117 = vld [vmem:[%s11 + $0x10] sm:$0xff]
    %v1118 = vld [vmem:[%s11 + $0x18] sm:$0xff]
    %vm1151 = vcmask 1041409
    %v1152 = vsel %vm1151, %v900, %v893
    %vm1153 = vcmask 1042434
    %v1154 = vsel %vm1153, %v907, %v1152
    %vm1155 = vcmask 1043459
    %v1156 = vsel %vm1155, %v914, %v1154
    %vm1157 = vcmask 1044484
    %v1158 = vsel %vm1157, %v921, %v1156
    %vm1159 = vcmask 1045509
    %v1160 = vsel %vm1159, %v928, %v1158
    %vm1161 = vcmask 1046534
    %v1162 = vsel %vm1161, %v935, %v1160
    %vm1163 = vcmask 1047559
    %v1164 = vsel %vm1163, %v942, %v1162
    %v1165 = vsel %vm1151, %v956, %v949
    %v1166 = vsel %vm1153, %v963, %v1165
    %v1167 = vsel %vm1155, %v970, %v1166
    %v1168 = vsel %vm1157, %v977, %v1167
    %v1169 = vsel %vm1159, %v984, %v1168
    %v1170 = vsel %vm1161, %v991, %v1169
    %v1171 = vsel %vm1163, %v998, %v1170
    %v1172 = vsel %vm1151, %v1012, %v1005
    %v1173 = vsel %vm1153, %v1019, %v1172
    %v1174 = vsel %vm1155, %v1026, %v1173
    %v1175 = vsel %vm1157, %v1033, %v1174
    %v1176 = vsel %vm1159, %v1040, %v1175
    %v1177 = vsel %vm1161, %v1047, %v1176
    %v1178 = vsel %vm1163, %v1054, %v1177
    %v1179 = vsel %vm1151, %v1068, %v1061
    %v1180 = vsel %vm1153, %v1075, %v1179
    %v1181 = vsel %vm1155, %v1082, %v1180
    %v1182 = vsel %vm1157, %v1089, %v1181
    %v1183 = vsel %vm1159, %v1096, %v1182
    %v1184 = vsel %vm1161, %v1103, %v1183
    %v1185 = vsel %vm1163, %v1110, %v1184
    %v1186 = vsel %vm245, %v1164, 0
    %v1188 = vsel %vm245, %v1171, 0
    %v1190 = vsel %vm245, %v1178, 0
    %v1192 = vsel %vm245, %v1185, 0
    %1194 = vmatprep.subr.mxu0 0.0
    %1195 = vmatpush1.msra.mxu0 %v1115
    %1196 = vmatprep.subr.mxu0 0.0
    %1197 = vmatpush1.msra.mxu0 %v1116
    %1198 = vmatprep.subr.mxu0 0.0
    %1199 = vmatpush1.msra.mxu0 %v1117
    %1200 = vmatprep.subr.mxu0 0.0
    %1201 = vmatpush1.msra.mxu0 %v1118
    %1202 = vmatprep.subr.mxu0 0.0
    %1203 = vmatpush1.msra.mxu0 0.0
    %1204 = vmatprep.subr.mxu0 0.0
    %1205 = vmatpush1.msra.mxu0 0.0
    %1206 = vmatprep.subr.mxu0 0.0
    %1207 = vmatpush1.msra.mxu0 0.0
    %1208 = vmatprep.subr.mxu0 0.0
    %1209 = vmatpush1.msra.mxu0 0.0
    %1210 = vmatprep.subr.mxu0 0.0
    %1211 = vmatpush1.msra.mxu0 0.0
    %1212 = vmatprep.subr.mxu0 0.0
    %1213 = vmatpush1.msra.mxu0 0.0
    %1214 = vmatprep.subr.mxu0 0.0
    %1215 = vmatpush1.msra.mxu0 0.0
    %1216 = vmatprep.subr.mxu0 0.0
    %1217 = vmatpush1.msra.mxu0 0.0
    %1218 = vmatprep.subr.mxu0 0.0
    %1219 = vmatpush1.msra.mxu0 0.0
    %1220 = vmatprep.subr.mxu0 0.0
    %1221 = vmatpush1.msra.mxu0 0.0
    %1222 = vmatprep.subr.mxu0 0.0
    %1223 = vmatpush1.msra.mxu0 0.0
    %1224 = vmatprep.subr.mxu0 0.0
    %1225 = vmatpush1.msra.mxu0 0.0
    %1226 = vmatprep.subr.mxu0 0.0
    %1227 = vmatpush1.msra.mxu0 0.0
    %1228 = vmatprep.subr.mxu0 0.0
    %1229 = vmatpush1.msra.mxu0 0.0
    %1230 = vmatprep.subr.mxu0 0.0
    %1231 = vmatpush1.msra.mxu0 0.0
    %1232 = vmatprep.subr.mxu0 0.0
    %1233 = vmatpush1.msra.mxu0 0.0
    %1234 = vmatprep.subr.mxu0 0.0
    %1235 = vmatpush1.msra.mxu0 0.0
    %1236 = vmatprep.subr.mxu0 0.0
    %1237 = vmatpush1.msra.mxu0 0.0
    %1238 = vmatprep.subr.mxu0 0.0
    %1239 = vmatpush1.msra.mxu0 0.0
    %1240 = vmatprep.subr.mxu0 0.0
    %1241 = vmatpush1.msra.mxu0 0.0
    %1242 = vmatprep.subr.mxu0 0.0
    %1243 = vmatpush1.msra.mxu0 0.0
    %1244 = vmatprep.subr.mxu0 0.0
    %1245 = vmatpush1.msra.mxu0 0.0
    %1246 = vmatprep.subr.mxu0 0.0
    %1247 = vmatpush1.msra.mxu0 0.0
    %1248 = vmatprep.subr.mxu0 0.0
    %1249 = vmatpush1.msra.mxu0 0.0
    %1250 = vmatprep.subr.mxu0 0.0
    %1251 = vmatpush1.msra.mxu0 0.0
    %1252 = vmatprep.subr.mxu0 0.0
    %1253 = vmatpush1.msra.mxu0 0.0
    %1254 = vmatprep.subr.mxu0 0.0
    %1255 = vmatpush1.msra.mxu0 0.0
    %1256 = vmatprep.subr.mxu0 0.0
    %1257 = vmatpush1.msra.mxu0 0.0
    %1258 = vmatprep.mubr.f32.mxu0 0.0
    %1259 = vmatmul.mubr.f32.gmra.mrb[0].mxu0 %v1186
    %v1260 = vpop.f32.mrb[0].mxu0
    %v1261 = vadd.f32 0.0, %v1260
    %v1262 = vpop.f32.mrb[0].mxu0
    %1263 = vmatprep.mubr.f32.mxu0 0.0
    %1264 = vmatmul.mubr.f32.gmra.mrb[0].mxu0 %v1188
    %v1265 = vpop.f32.mrb[0].mxu0
    %v1266 = vadd.f32 0.0, %v1265
    %v1267 = vpop.f32.mrb[0].mxu0
    %1268 = vmatprep.mubr.f32.mxu0 0.0
    %1269 = vmatmul.mubr.f32.gmra.mrb[0].mxu0 %v1190
    %v1270 = vpop.f32.mrb[0].mxu0
    %v1271 = vadd.f32 0.0, %v1270
    %v1272 = vpop.f32.mrb[0].mxu0
    %1273 = vmatprep.mubr.f32.mxu0 0.0
    %1274 = vmatmul.mubr.f32.gmra.mrb[0].mxu0 %v1192
    %v1275 = vpop.f32.mrb[0].mxu0
    %v1276 = vadd.f32 0.0, %v1275
    %v1277 = vpop.f32.mrb[0].mxu0
    %1278 = vdwg.mxu0
    %v1280 = vsel %vm245, %v216, 0
    %v1283 = vsel %vm245, %v221, 0
    %v1286 = vsel %vm245, %v226, 0
    %v1289 = vsel %vm245, %v231, 0
    %1291 = vmatprep.subr.mxu0 0.0
    %1292 = vmatpush1.msra.mxu0 %v1111
    %1293 = vmatprep.subr.mxu0 0.0
    %1294 = vmatpush1.msra.mxu0 %v1112
    %1295 = vmatprep.subr.mxu0 0.0
    %1296 = vmatpush1.msra.mxu0 %v1113
    %1297 = vmatprep.subr.mxu0 0.0
    %1298 = vmatpush1.msra.mxu0 %v1114
    %1299 = vmatprep.subr.mxu0 0.0
    %1300 = vmatpush1.msra.mxu0 0.0
    %1301 = vmatprep.subr.mxu0 0.0
    %1302 = vmatpush1.msra.mxu0 0.0
    %1303 = vmatprep.subr.mxu0 0.0
    %1304 = vmatpush1.msra.mxu0 0.0
    %1305 = vmatprep.subr.mxu0 0.0
    %1306 = vmatpush1.msra.mxu0 0.0
    %1307 = vmatprep.subr.mxu0 0.0
    %1308 = vmatpush1.msra.mxu0 0.0
    %1309 = vmatprep.subr.mxu0 0.0
    %1310 = vmatpush1.msra.mxu0 0.0
    %1311 = vmatprep.subr.mxu0 0.0
    %1312 = vmatpush1.msra.mxu0 0.0
    %1313 = vmatprep.subr.mxu0 0.0
    %1314 = vmatpush1.msra.mxu0 0.0
    %1315 = vmatprep.subr.mxu0 0.0
    %1316 = vmatpush1.msra.mxu0 0.0
    %1317 = vmatprep.subr.mxu0 0.0
    %1318 = vmatpush1.msra.mxu0 0.0
    %1319 = vmatprep.subr.mxu0 0.0
    %1320 = vmatpush1.msra.mxu0 0.0
    %1321 = vmatprep.subr.mxu0 0.0
    %1322 = vmatpush1.msra.mxu0 0.0
    %1323 = vmatprep.subr.mxu0 0.0
    %1324 = vmatpush1.msra.mxu0 0.0
    %1325 = vmatprep.subr.mxu0 0.0
    %1326 = vmatpush1.msra.mxu0 0.0
    %1327 = vmatprep.subr.mxu0 0.0
    %1328 = vmatpush1.msra.mxu0 0.0
    %1329 = vmatprep.subr.mxu0 0.0
    %1330 = vmatpush1.msra.mxu0 0.0
    %1331 = vmatprep.subr.mxu0 0.0
    %1332 = vmatpush1.msra.mxu0 0.0
    %1333 = vmatprep.subr.mxu0 0.0
    %1334 = vmatpush1.msra.mxu0 0.0
    %1335 = vmatprep.subr.mxu0 0.0
    %1336 = vmatpush1.msra.mxu0 0.0
    %1337 = vmatprep.subr.mxu0 0.0
    %1338 = vmatpush1.msra.mxu0 0.0
    %1339 = vmatprep.subr.mxu0 0.0
    %1340 = vmatpush1.msra.mxu0 0.0
    %1341 = vmatprep.subr.mxu0 0.0
    %1342 = vmatpush1.msra.mxu0 0.0
    %1343 = vmatprep.subr.mxu0 0.0
    %1344 = vmatpush1.msra.mxu0 0.0
    %1345 = vmatprep.subr.mxu0 0.0
    %1346 = vmatpush1.msra.mxu0 0.0
    %1347 = vmatprep.subr.mxu0 0.0
    %1348 = vmatpush1.msra.mxu0 0.0
    %1349 = vmatprep.subr.mxu0 0.0
    %1350 = vmatpush1.msra.mxu0 0.0
    %1351 = vmatprep.subr.mxu0 0.0
    %1352 = vmatpush1.msra.mxu0 0.0
    %1353 = vmatprep.subr.mxu0 0.0
    %1354 = vmatpush1.msra.mxu0 0.0
    %1355 = vmatprep.mubr.f32.mxu0 0.0
    %1356 = vmatmul.mubr.f32.gmra.mrb[0].mxu0 %v1280
    %v1357 = vpop.f32.mrb[0].mxu0
    %v1358 = vadd.f32 %v1261, %v1357
    %v1359 = vpop.f32.mrb[0].mxu0
    %1360 = vmatprep.mubr.f32.mxu0 0.0
    %1361 = vmatmul.mubr.f32.gmra.mrb[0].mxu0 %v1283
    %v1362 = vpop.f32.mrb[0].mxu0
    %v1363 = vadd.f32 %v1266, %v1362
    %v1364 = vpop.f32.mrb[0].mxu0
    %1365 = vmatprep.mubr.f32.mxu0 0.0
    %1366 = vmatmul.mubr.f32.gmra.mrb[0].mxu0 %v1286
    %v1367 = vpop.f32.mrb[0].mxu0
    %v1368 = vadd.f32 %v1271, %v1367
    %v1369 = vpop.f32.mrb[0].mxu0
    %1370 = vmatprep.mubr.f32.mxu0 0.0
    %1371 = vmatmul.mubr.f32.gmra.mrb[0].mxu0 %v1289
    %v1372 = vpop.f32.mrb[0].mxu0
    %v1373 = vadd.f32 %v1276, %v1372
    %v1374 = vpop.f32.mrb[0].mxu0
    %1375 = vdwg.mxu0
    %v1376 = vld [vmem:[%s12] sm:$0x1]
    %v1378 = vlaneseq
    %v1379 = vshrl.u32 %v1378, 7
    %v1380 = vsub.s32 0, %v1379
    %v1381 = vrot.slane %v1376, %v1380
    %v1383 = vadd.f32 %v1358, %v1381
    %v1384 = vadd.f32 %v1363, %v1381
    %v1385 = vadd.f32 %v1368, %v1381
    %v1386 = vadd.f32 %v1373, %v1381
    %vm1387 = vcmp.gt.f32.partialorder %v1383, 0.0
    %vm1388 = vcmp.gt.f32.partialorder %v1384, 0.0
    %vm1389 = vcmp.gt.f32.partialorder %v1385, 0.0
    %vm1390 = vcmp.gt.f32.partialorder %v1386, 0.0
    %v1391 = vmin.f32 %v1383, 0.0
    %v1392 = vmin.f32 %v1384, 0.0
    %v1393 = vmin.f32 %v1385, 0.0
    %v1394 = vmin.f32 %v1386, 0.0
    %v1395 = vmul.f32 %v1391, 1.442695
    %v1396 = vpow.pop %v1395
    %v1397 = vmul.f32 %v1392, 1.442695
    %v1398 = vpow.pop %v1397
    %v1399 = vmul.f32 %v1393, 1.442695
    %v1400 = vpow.pop %v1399
    %v1401 = vmul.f32 %v1394, 1.442695
    %v1402 = vpow.pop %v1401
    %v1403 = vsub.f32 %v1396, 1.0
    %v1404 = vsub.f32 %v1398, 1.0
    %v1405 = vsub.f32 %v1400, 1.0
    %v1406 = vsub.f32 %v1402, 1.0
    %v1407 = vmul.f32 %v1403, 1.6732632
    %v1408 = vmul.f32 %v1404, 1.6732632
    %v1409 = vmul.f32 %v1405, 1.6732632
    %v1410 = vmul.f32 %v1406, 1.6732632
    %v1411 = vsel %vm1387, %v1383, %v1407
    %v1412 = vsel %vm1388, %v1384, %v1408
    %v1413 = vsel %vm1389, %v1385, %v1409
    %v1414 = vsel %vm1390, %v1386, %v1410
    %v1415 = vmul.f32 %v1411, 1.050701
    %v1416 = vmul.f32 %v1412, 1.050701
    %v1417 = vmul.f32 %v1413, 1.050701
    %v1418 = vmul.f32 %v1414, 1.050701
    %v1419 = vmul.f32 %v1415, %v115
    %v1420 = vmul.f32 %v1416, %v116
    %v1421 = vmul.f32 %v1417, %v117
    %v1422 = vmul.f32 %v1418, %v118
    %v1423 = vadd.f32 %v1419, %v216
    %v1424 = vadd.f32 %v1420, %v221
    %v1425 = vadd.f32 %v1421, %v226
    %v1426 = vadd.f32 %v1422, %v231
    %v1427 = vld [vmem:[%s13] sm:$0xff]
    %v1428 = vld [vmem:[%s13 + $0x8] sm:$0xff]
    %v1429 = vld [vmem:[%s13 + $0x10] sm:$0xff]
    %v1430 = vld [vmem:[%s13 + $0x18] sm:$0xff]
    %v1432 = vsel %vm245, %v1423, 0
    %v1435 = vsel %vm245, %v1424, 0
    %v1438 = vsel %vm245, %v1425, 0
    %v1441 = vsel %vm245, %v1426, 0
    %1443 = vmatprep.subr.mxu0 0.0
    %1444 = vmatpush1.msra.mxu0 %v1427
    %1445 = vmatprep.subr.mxu0 0.0
    %1446 = vmatpush1.msra.mxu0 %v1428
    %1447 = vmatprep.subr.mxu0 0.0
    %1448 = vmatpush1.msra.mxu0 %v1429
    %1449 = vmatprep.subr.mxu0 0.0
    %1450 = vmatpush1.msra.mxu0 %v1430
    %1451 = vmatprep.subr.mxu0 0.0
    %1452 = vmatpush1.msra.mxu0 0.0
    %1453 = vmatprep.subr.mxu0 0.0
    %1454 = vmatpush1.msra.mxu0 0.0
    %1455 = vmatprep.subr.mxu0 0.0
    %1456 = vmatpush1.msra.mxu0 0.0
    %1457 = vmatprep.subr.mxu0 0.0
    %1458 = vmatpush1.msra.mxu0 0.0
    %1459 = vmatprep.subr.mxu0 0.0
    %1460 = vmatpush1.msra.mxu0 0.0
    %1461 = vmatprep.subr.mxu0 0.0
    %1462 = vmatpush1.msra.mxu0 0.0
    %1463 = vmatprep.subr.mxu0 0.0
    %1464 = vmatpush1.msra.mxu0 0.0
    %1465 = vmatprep.subr.mxu0 0.0
    %1466 = vmatpush1.msra.mxu0 0.0
    %1467 = vmatprep.subr.mxu0 0.0
    %1468 = vmatpush1.msra.mxu0 0.0
    %1469 = vmatprep.subr.mxu0 0.0
    %1470 = vmatpush1.msra.mxu0 0.0
    %1471 = vmatprep.subr.mxu0 0.0
    %1472 = vmatpush1.msra.mxu0 0.0
    %1473 = vmatprep.subr.mxu0 0.0
    %1474 = vmatpush1.msra.mxu0 0.0
    %1475 = vmatprep.subr.mxu0 0.0
    %1476 = vmatpush1.msra.mxu0 0.0
    %1477 = vmatprep.subr.mxu0 0.0
    %1478 = vmatpush1.msra.mxu0 0.0
    %1479 = vmatprep.subr.mxu0 0.0
    %1480 = vmatpush1.msra.mxu0 0.0
    %1481 = vmatprep.subr.mxu0 0.0
    %1482 = vmatpush1.msra.mxu0 0.0
    %1483 = vmatprep.subr.mxu0 0.0
    %1484 = vmatpush1.msra.mxu0 0.0
    %1485 = vmatprep.subr.mxu0 0.0
    %1486 = vmatpush1.msra.mxu0 0.0
    %1487 = vmatprep.subr.mxu0 0.0
    %1488 = vmatpush1.msra.mxu0 0.0
    %1489 = vmatprep.subr.mxu0 0.0
    %1490 = vmatpush1.msra.mxu0 0.0
    %1491 = vmatprep.subr.mxu0 0.0
    %1492 = vmatpush1.msra.mxu0 0.0
    %1493 = vmatprep.subr.mxu0 0.0
    %1494 = vmatpush1.msra.mxu0 0.0
    %1495 = vmatprep.subr.mxu0 0.0
    %1496 = vmatpush1.msra.mxu0 0.0
    %1497 = vmatprep.subr.mxu0 0.0
    %1498 = vmatpush1.msra.mxu0 0.0
    %1499 = vmatprep.subr.mxu0 0.0
    %1500 = vmatpush1.msra.mxu0 0.0
    %1501 = vmatprep.subr.mxu0 0.0
    %1502 = vmatpush1.msra.mxu0 0.0
    %1503 = vmatprep.subr.mxu0 0.0
    %1504 = vmatpush1.msra.mxu0 0.0
    %1505 = vmatprep.subr.mxu0 0.0
    %1506 = vmatpush1.msra.mxu0 0.0
    %1507 = vmatprep.mubr.f32.mxu0 0.0
    %1508 = vmatmul.mubr.f32.gmra.mrb[0].mxu0 %v1432
    %v1509 = vpop.f32.mrb[0].mxu0
    %v1510 = vadd.f32 0.0, %v1509
    %v1511 = vpop.f32.mrb[0].mxu0
    %1512 = vmatprep.mubr.f32.mxu0 0.0
    %1513 = vmatmul.mubr.f32.gmra.mrb[0].mxu0 %v1435
    %v1514 = vpop.f32.mrb[0].mxu0
    %v1515 = vadd.f32 0.0, %v1514
    %v1516 = vpop.f32.mrb[0].mxu0
    %1517 = vmatprep.mubr.f32.mxu0 0.0
    %1518 = vmatmul.mubr.f32.gmra.mrb[0].mxu0 %v1438
    %v1519 = vpop.f32.mrb[0].mxu0
    %v1520 = vadd.f32 0.0, %v1519
    %v1521 = vpop.f32.mrb[0].mxu0
    %1522 = vmatprep.mubr.f32.mxu0 0.0
    %1523 = vmatmul.mubr.f32.gmra.mrb[0].mxu0 %v1441
    %v1524 = vpop.f32.mrb[0].mxu0
    %v1525 = vadd.f32 0.0, %v1524
    %v1526 = vpop.f32.mrb[0].mxu0
    %1527 = vdwg.mxu0
    %v1528 = vlaneseq
    %v1529 = vshrl.u32 %v1528, 7
    %v1530 = vsub.s32 0, %v1529
    %v1531 = vrot.slane %v123, %v1530
    %v1532 = vmul.f32 %v1510, %v1531
    %v1533 = vmul.f32 %v1515, %v1531
    %v1534 = vmul.f32 %v1520, %v1531
    %v1535 = vmul.f32 %v1525, %v1531
    %1540 = vrot.lane.b32.xlu0 %v1510, 96
    %v1541 = vpop.permute.xlu0 %1540
    %1542 = vrot.lane.b32.xlu0 %v1515, 96
    %v1543 = vpop.permute.xlu0 %1542
    %1544 = vrot.lane.b32.xlu0 %v1520, 96
    %v1545 = vpop.permute.xlu0 %1544
    %1546 = vrot.lane.b32.xlu0 %v1525, 96
    %v1547 = vpop.permute.xlu0 %1546
    %v1549 = vsel %vm245, %v1532, 0
    %v1552 = vsel %vm245, %v1533, 0
    %v1555 = vsel %vm245, %v1534, 0
    %v1558 = vsel %vm245, %v1535, 0
    %v1560 = vsel %vm245, %v1541, 0
    %v1562 = vsel %vm245, %v1543, 0
    %v1564 = vsel %vm245, %v1545, 0
    %v1566 = vsel %vm245, %v1547, 0
    %1568 = vmatprep.subr.mxu0 0.0
    %1569 = vmatpush1.xpose.msra.mxu0 %v1560
    %1570 = vmatprep.subr.mxu0 0.0
    %1571 = vmatpush1.xpose.msra.mxu0 %v1562
    %1572 = vmatprep.subr.mxu0 0.0
    %1573 = vmatpush1.xpose.msra.mxu0 %v1564
    %1574 = vmatprep.subr.mxu0 0.0
    %1575 = vmatpush1.xpose.msra.mxu0 %v1566
    %1576 = vmatprep.subr.mxu0 0.0
    %1577 = vmatpush1.xpose.msra.mxu0 0.0
    %1578 = vmatprep.subr.mxu0 0.0
    %1579 = vmatpush1.xpose.msra.mxu0 0.0
    %1580 = vmatprep.subr.mxu0 0.0
    %1581 = vmatpush1.xpose.msra.mxu0 0.0
    %1582 = vmatprep.subr.mxu0 0.0
    %1583 = vmatpush1.xpose.msra.mxu0 0.0
    %1584 = vmatprep.subr.mxu0 0.0
    %1585 = vmatpush1.xpose.msra.mxu0 0.0
    %1586 = vmatprep.subr.mxu0 0.0
    %1587 = vmatpush1.xpose.msra.mxu0 0.0
    %1588 = vmatprep.subr.mxu0 0.0
    %1589 = vmatpush1.xpose.msra.mxu0 0.0
    %1590 = vmatprep.subr.mxu0 0.0
    %1591 = vmatpush1.xpose.msra.mxu0 0.0
    %1592 = vmatprep.subr.mxu0 0.0
    %1593 = vmatpush1.xpose.msra.mxu0 0.0
    %1594 = vmatprep.subr.mxu0 0.0
    %1595 = vmatpush1.xpose.msra.mxu0 0.0
    %1596 = vmatprep.subr.mxu0 0.0
    %1597 = vmatpush1.xpose.msra.mxu0 0.0
    %1598 = vmatprep.subr.mxu0 0.0
    %1599 = vmatpush1.xpose.msra.mxu0 0.0
    %1600 = vmatprep.subr.mxu0 0.0
    %1601 = vmatpush1.xpose.msra.mxu0 0.0
    %1602 = vmatprep.subr.mxu0 0.0
    %1603 = vmatpush1.xpose.msra.mxu0 0.0
    %1604 = vmatprep.subr.mxu0 0.0
    %1605 = vmatpush1.xpose.msra.mxu0 0.0
    %1606 = vmatprep.subr.mxu0 0.0
    %1607 = vmatpush1.xpose.msra.mxu0 0.0
    %1608 = vmatprep.subr.mxu0 0.0
    %1609 = vmatpush1.xpose.msra.mxu0 0.0
    %1610 = vmatprep.subr.mxu0 0.0
    %1611 = vmatpush1.xpose.msra.mxu0 0.0
    %1612 = vmatprep.subr.mxu0 0.0
    %1613 = vmatpush1.xpose.msra.mxu0 0.0
    %1614 = vmatprep.subr.mxu0 0.0
    %1615 = vmatpush1.xpose.msra.mxu0 0.0
    %1616 = vmatprep.subr.mxu0 0.0
    %1617 = vmatpush1.xpose.msra.mxu0 0.0
    %1618 = vmatprep.subr.mxu0 0.0
    %1619 = vmatpush1.xpose.msra.mxu0 0.0
    %1620 = vmatprep.subr.mxu0 0.0
    %1621 = vmatpush1.xpose.msra.mxu0 0.0
    %1622 = vmatprep.subr.mxu0 0.0
    %1623 = vmatpush1.xpose.msra.mxu0 0.0
    %1624 = vmatprep.subr.mxu0 0.0
    %1625 = vmatpush1.xpose.msra.mxu0 0.0
    %1626 = vmatprep.subr.mxu0 0.0
    %1627 = vmatpush1.xpose.msra.mxu0 0.0
    %1628 = vmatprep.subr.mxu0 0.0
    %1629 = vmatpush1.xpose.msra.mxu0 0.0
    %1630 = vmatprep.subr.mxu0 0.0
    %1631 = vmatpush1.xpose.msra.mxu0 0.0
    %1632 = vmatprep.mubr.f32.mxu0 0.0
    %1633 = vmatmul.mubr.f32.gmra.mrb[0].mxu0 %v1549
    %v1634 = vpop.f32.mrb[0].mxu0
    %v1635 = vadd.f32 0.0, %v1634
    %v1636 = vpop.f32.mrb[0].mxu0
    %1637 = vmatprep.mubr.f32.mxu0 0.0
    %1638 = vmatmul.mubr.f32.gmra.mrb[0].mxu0 %v1552
    %v1639 = vpop.f32.mrb[0].mxu0
    %v1640 = vadd.f32 0.0, %v1639
    %v1641 = vpop.f32.mrb[0].mxu0
    %1642 = vmatprep.mubr.f32.mxu0 0.0
    %1643 = vmatmul.mubr.f32.gmra.mrb[0].mxu0 %v1555
    %v1644 = vpop.f32.mrb[0].mxu0
    %v1645 = vadd.f32 0.0, %v1644
    %v1646 = vpop.f32.mrb[0].mxu0
    %1647 = vmatprep.mubr.f32.mxu0 0.0
    %1648 = vmatmul.mubr.f32.gmra.mrb[0].mxu0 %v1558
    %v1649 = vpop.f32.mrb[0].mxu0
    %v1650 = vadd.f32 0.0, %v1649
    %v1651 = vpop.f32.mrb[0].mxu0
    %1652 = vdwg.mxu0
    %v1653 = vmul.f32 %v1635, 0.25
    %v1654 = vmul.f32 %v1640, 0.25
    %v1655 = vmul.f32 %v1645, 0.25
    %v1656 = vmul.f32 %v1650, 0.25
    %v1657 = vadd.f32 %v1653, %v119
    %v1658 = vadd.f32 %v1654, %v120
    %v1659 = vadd.f32 %v1655, %v121
    %v1660 = vadd.f32 %v1656, %v122
    %v1661 = vsel %vm245, %v1657, -inf
    %1662 = vmax.xlane.f32.xlu0 %v1661
    %v1663 = vpop.xlane.xlu0 %1662
    %v1664 = vsel %vm245, %v1658, -inf
    %1665 = vmax.xlane.f32.xlu0 %v1664
    %v1666 = vpop.xlane.xlu0 %1665
    %v1667 = vsel %vm245, %v1659, -inf
    %1668 = vmax.xlane.f32.xlu0 %v1667
    %v1669 = vpop.xlane.xlu0 %1668
    %v1670 = vsel %vm245, %v1660, -inf
    %1671 = vmax.xlane.f32.xlu0 %v1670
    %v1672 = vpop.xlane.xlu0 %1671
    %v1673 = vsub.f32 %v1657, %v1663
    %v1674 = vsub.f32 %v1658, %v1666
    %v1675 = vsub.f32 %v1659, %v1669
    %v1676 = vsub.f32 %v1660, %v1672
    %v1677 = vmul.f32 %v1673, 1.442695
    %v1678 = vpow.pop %v1677
    %v1679 = vmul.f32 %v1674, 1.442695
    %v1680 = vpow.pop %v1679
    %v1681 = vmul.f32 %v1675, 1.442695
    %v1682 = vpow.pop %v1681
    %v1683 = vmul.f32 %v1676, 1.442695
    %v1684 = vpow.pop %v1683
    %v1685 = vsel %vm245, %v1678, 0.0
    %1686 = vadd.xlane.f32.xlu0 %v1685
    %v1687 = vpop.xlane.xlu0 %1686
    %v1688 = vsel %vm245, %v1680, 0.0
    %1689 = vadd.xlane.f32.xlu0 %v1688
    %v1690 = vpop.xlane.xlu0 %1689
    %v1691 = vsel %vm245, %v1682, 0.0
    %1692 = vadd.xlane.f32.xlu0 %v1691
    %v1693 = vpop.xlane.xlu0 %1692
    %v1694 = vsel %vm245, %v1684, 0.0
    %1695 = vadd.xlane.f32.xlu0 %v1694
    %v1696 = vpop.xlane.xlu0 %1695
    %v1697 = vrcp.pop %v1687
    %v1698 = vmul.f32 %v1678, %v1697
    %v1699 = vrcp.pop %v1690
    %v1700 = vmul.f32 %v1680, %v1699
    %v1701 = vrcp.pop %v1693
    %v1702 = vmul.f32 %v1682, %v1701
    %v1703 = vrcp.pop %v1696
    %v1704 = vmul.f32 %v1684, %v1703
    %1706 = vrot.lane.b32.xlu0 %v1531, 64
    %v1707 = vpop.permute.xlu0 %1706
    %v1709 = vmul.f32 %v1510, %v1707
    %v1710 = vmul.f32 %v1515, %v1707
    %v1711 = vmul.f32 %v1520, %v1707
    %v1712 = vmul.f32 %v1525, %v1707
    %v1713 = vlaneseq
    %v1714 = vshrl.u32 %v1713, 7
    %v1715 = vsub.s32 1, %v1714
    %v1716 = vrot.slane %v123, %v1715
    %v1717 = vmul.f32 %v1510, %v1716
    %v1718 = vmul.f32 %v1515, %v1716
    %v1719 = vmul.f32 %v1520, %v1716
    %v1720 = vmul.f32 %v1525, %v1716
    %v1722 = vsel %vm245, %v1717, 0
    %v1725 = vsel %vm245, %v1718, 0
    %v1728 = vsel %vm245, %v1719, 0
    %v1731 = vsel %vm245, %v1720, 0
    %1733 = vmatprep.subr.mxu0 0.0
    %1734 = vmatpush1.xpose.msra.mxu0 %v1560
    %1735 = vmatprep.subr.mxu0 0.0
    %1736 = vmatpush1.xpose.msra.mxu0 %v1562
    %1737 = vmatprep.subr.mxu0 0.0
    %1738 = vmatpush1.xpose.msra.mxu0 %v1564
    %1739 = vmatprep.subr.mxu0 0.0
    %1740 = vmatpush1.xpose.msra.mxu0 %v1566
    %1741 = vmatprep.subr.mxu0 0.0
    %1742 = vmatpush1.xpose.msra.mxu0 0.0
    %1743 = vmatprep.subr.mxu0 0.0
    %1744 = vmatpush1.xpose.msra.mxu0 0.0
    %1745 = vmatprep.subr.mxu0 0.0
    %1746 = vmatpush1.xpose.msra.mxu0 0.0
    %1747 = vmatprep.subr.mxu0 0.0
    %1748 = vmatpush1.xpose.msra.mxu0 0.0
    %1749 = vmatprep.subr.mxu0 0.0
    %1750 = vmatpush1.xpose.msra.mxu0 0.0
    %1751 = vmatprep.subr.mxu0 0.0
    %1752 = vmatpush1.xpose.msra.mxu0 0.0
    %1753 = vmatprep.subr.mxu0 0.0
    %1754 = vmatpush1.xpose.msra.mxu0 0.0
    %1755 = vmatprep.subr.mxu0 0.0
    %1756 = vmatpush1.xpose.msra.mxu0 0.0
    %1757 = vmatprep.subr.mxu0 0.0
    %1758 = vmatpush1.xpose.msra.mxu0 0.0
    %1759 = vmatprep.subr.mxu0 0.0
    %1760 = vmatpush1.xpose.msra.mxu0 0.0
    %1761 = vmatprep.subr.mxu0 0.0
    %1762 = vmatpush1.xpose.msra.mxu0 0.0
    %1763 = vmatprep.subr.mxu0 0.0
    %1764 = vmatpush1.xpose.msra.mxu0 0.0
    %1765 = vmatprep.subr.mxu0 0.0
    %1766 = vmatpush1.xpose.msra.mxu0 0.0
    %1767 = vmatprep.subr.mxu0 0.0
    %1768 = vmatpush1.xpose.msra.mxu0 0.0
    %1769 = vmatprep.subr.mxu0 0.0
    %1770 = vmatpush1.xpose.msra.mxu0 0.0
    %1771 = vmatprep.subr.mxu0 0.0
    %1772 = vmatpush1.xpose.msra.mxu0 0.0
    %1773 = vmatprep.subr.mxu0 0.0
    %1774 = vmatpush1.xpose.msra.mxu0 0.0
    %1775 = vmatprep.subr.mxu0 0.0
    %1776 = vmatpush1.xpose.msra.mxu0 0.0
    %1777 = vmatprep.subr.mxu0 0.0
    %1778 = vmatpush1.xpose.msra.mxu0 0.0
    %1779 = vmatprep.subr.mxu0 0.0
    %1780 = vmatpush1.xpose.msra.mxu0 0.0
    %1781 = vmatprep.subr.mxu0 0.0
    %1782 = vmatpush1.xpose.msra.mxu0 0.0
    %1783 = vmatprep.subr.mxu0 0.0
    %1784 = vmatpush1.xpose.msra.mxu0 0.0
    %1785 = vmatprep.subr.mxu0 0.0
    %1786 = vmatpush1.xpose.msra.mxu0 0.0
    %1787 = vmatprep.subr.mxu0 0.0
    %1788 = vmatpush1.xpose.msra.mxu0 0.0
    %1789 = vmatprep.subr.mxu0 0.0
    %1790 = vmatpush1.xpose.msra.mxu0 0.0
    %1791 = vmatprep.subr.mxu0 0.0
    %1792 = vmatpush1.xpose.msra.mxu0 0.0
    %1793 = vmatprep.subr.mxu0 0.0
    %1794 = vmatpush1.xpose.msra.mxu0 0.0
    %1795 = vmatprep.subr.mxu0 0.0
    %1796 = vmatpush1.xpose.msra.mxu0 0.0
    %1797 = vmatprep.mubr.f32.mxu0 0.0
    %1798 = vmatmul.mubr.f32.gmra.mrb[0].mxu0 %v1722
    %v1799 = vpop.f32.mrb[0].mxu0
    %v1800 = vadd.f32 0.0, %v1799
    %v1801 = vpop.f32.mrb[0].mxu0
    %1802 = vmatprep.mubr.f32.mxu0 0.0
    %1803 = vmatmul.mubr.f32.gmra.mrb[0].mxu0 %v1725
    %v1804 = vpop.f32.mrb[0].mxu0
    %v1805 = vadd.f32 0.0, %v1804
    %v1806 = vpop.f32.mrb[0].mxu0
    %1807 = vmatprep.mubr.f32.mxu0 0.0
    %1808 = vmatmul.mubr.f32.gmra.mrb[0].mxu0 %v1728
    %v1809 = vpop.f32.mrb[0].mxu0
    %v1810 = vadd.f32 0.0, %v1809
    %v1811 = vpop.f32.mrb[0].mxu0
    %1812 = vmatprep.mubr.f32.mxu0 0.0
    %1813 = vmatmul.mubr.f32.gmra.mrb[0].mxu0 %v1731
    %v1814 = vpop.f32.mrb[0].mxu0
    %v1815 = vadd.f32 0.0, %v1814
    %v1816 = vpop.f32.mrb[0].mxu0
    %1817 = vdwg.mxu0
    %v1818 = vmul.f32 %v1800, 0.25
    %v1819 = vmul.f32 %v1805, 0.25
    %v1820 = vmul.f32 %v1810, 0.25
    %v1821 = vmul.f32 %v1815, 0.25
    %v1822 = vadd.f32 %v1818, %v119
    %v1823 = vadd.f32 %v1819, %v120
    %v1824 = vadd.f32 %v1820, %v121
    %v1825 = vadd.f32 %v1821, %v122
    %v1826 = vsel %vm245, %v1822, -inf
    %1827 = vmax.xlane.f32.xlu0 %v1826
    %v1828 = vpop.xlane.xlu0 %1827
    %v1829 = vsel %vm245, %v1823, -inf
    %1830 = vmax.xlane.f32.xlu0 %v1829
    %v1831 = vpop.xlane.xlu0 %1830
    %v1832 = vsel %vm245, %v1824, -inf
    %1833 = vmax.xlane.f32.xlu0 %v1832
    %v1834 = vpop.xlane.xlu0 %1833
    %v1835 = vsel %vm245, %v1825, -inf
    %1836 = vmax.xlane.f32.xlu0 %v1835
    %v1837 = vpop.xlane.xlu0 %1836
    %v1838 = vsub.f32 %v1822, %v1828
    %v1839 = vsub.f32 %v1823, %v1831
    %v1840 = vsub.f32 %v1824, %v1834
    %v1841 = vsub.f32 %v1825, %v1837
    %v1842 = vmul.f32 %v1838, 1.442695
    %v1843 = vpow.pop %v1842
    %v1844 = vmul.f32 %v1839, 1.442695
    %v1845 = vpow.pop %v1844
    %v1846 = vmul.f32 %v1840, 1.442695
    %v1847 = vpow.pop %v1846
    %v1848 = vmul.f32 %v1841, 1.442695
    %v1849 = vpow.pop %v1848
    %v1850 = vsel %vm245, %v1843, 0.0
    %1851 = vadd.xlane.f32.xlu0 %v1850
    %v1852 = vpop.xlane.xlu0 %1851
    %v1853 = vsel %vm245, %v1845, 0.0
    %1854 = vadd.xlane.f32.xlu0 %v1853
    %v1855 = vpop.xlane.xlu0 %1854
    %v1856 = vsel %vm245, %v1847, 0.0
    %1857 = vadd.xlane.f32.xlu0 %v1856
    %v1858 = vpop.xlane.xlu0 %1857
    %v1859 = vsel %vm245, %v1849, 0.0
    %1860 = vadd.xlane.f32.xlu0 %v1859
    %v1861 = vpop.xlane.xlu0 %1860
    %v1862 = vrcp.pop %v1852
    %v1863 = vmul.f32 %v1843, %v1862
    %v1864 = vrcp.pop %v1855
    %v1865 = vmul.f32 %v1845, %v1864
    %v1866 = vrcp.pop %v1858
    %v1867 = vmul.f32 %v1847, %v1866
    %v1868 = vrcp.pop %v1861
    %v1869 = vmul.f32 %v1849, %v1868
    %1871 = vrot.lane.b32.xlu0 %v1716, 64
    %v1872 = vpop.permute.xlu0 %1871
    %v1874 = vmul.f32 %v1510, %v1872
    %v1875 = vmul.f32 %v1515, %v1872
    %v1876 = vmul.f32 %v1520, %v1872
    %v1877 = vmul.f32 %v1525, %v1872
    %1882 = vrot.lane.b32.xlu0 %v1874, 64
    %v1883 = vpop.permute.xlu0 %1882
    %1884 = vrot.lane.b32.xlu0 %v1875, 64
    %v1885 = vpop.permute.xlu0 %1884
    %1886 = vrot.lane.b32.xlu0 %v1876, 64
    %v1887 = vpop.permute.xlu0 %1886
    %1888 = vrot.lane.b32.xlu0 %v1877, 64
    %v1889 = vpop.permute.xlu0 %1888
    %v1895 = vsel %vm245, %v1863, 0
    %v1898 = vsel %vm245, %v1865, 0
    %v1901 = vsel %vm245, %v1867, 0
    %v1904 = vsel %vm245, %v1869, 0
    %1906 = vmatprep.subr.mxu0 0.0
    %1907 = vmatpush1.msra.mxu0 %v1883
    %1908 = vmatprep.subr.mxu0 0.0
    %1909 = vmatpush1.msra.mxu0 %v1885
    %1910 = vmatprep.subr.mxu0 0.0
    %1911 = vmatpush1.msra.mxu0 %v1887
    %1912 = vmatprep.subr.mxu0 0.0
    %1913 = vmatpush1.msra.mxu0 %v1889
    %1914 = vmatprep.subr.mxu0 0.0
    %1915 = vmatpush1.msra.mxu0 0.0
    %1916 = vmatprep.subr.mxu0 0.0
    %1917 = vmatpush1.msra.mxu0 0.0
    %1918 = vmatprep.subr.mxu0 0.0
    %1919 = vmatpush1.msra.mxu0 0.0
    %1920 = vmatprep.subr.mxu0 0.0
    %1921 = vmatpush1.msra.mxu0 0.0
    %1922 = vmatprep.subr.mxu0 0.0
    %1923 = vmatpush1.msra.mxu0 0.0
    %1924 = vmatprep.subr.mxu0 0.0
    %1925 = vmatpush1.msra.mxu0 0.0
    %1926 = vmatprep.subr.mxu0 0.0
    %1927 = vmatpush1.msra.mxu0 0.0
    %1928 = vmatprep.subr.mxu0 0.0
    %1929 = vmatpush1.msra.mxu0 0.0
    %1930 = vmatprep.subr.mxu0 0.0
    %1931 = vmatpush1.msra.mxu0 0.0
    %1932 = vmatprep.subr.mxu0 0.0
    %1933 = vmatpush1.msra.mxu0 0.0
    %1934 = vmatprep.subr.mxu0 0.0
    %1935 = vmatpush1.msra.mxu0 0.0
    %1936 = vmatprep.subr.mxu0 0.0
    %1937 = vmatpush1.msra.mxu0 0.0
    %1938 = vmatprep.subr.mxu0 0.0
    %1939 = vmatpush1.msra.mxu0 0.0
    %1940 = vmatprep.subr.mxu0 0.0
    %1941 = vmatpush1.msra.mxu0 0.0
    %1942 = vmatprep.subr.mxu0 0.0
    %1943 = vmatpush1.msra.mxu0 0.0
    %1944 = vmatprep.subr.mxu0 0.0
    %1945 = vmatpush1.msra.mxu0 0.0
    %1946 = vmatprep.subr.mxu0 0.0
    %1947 = vmatpush1.msra.mxu0 0.0
    %1948 = vmatprep.subr.mxu0 0.0
    %1949 = vmatpush1.msra.mxu0 0.0
    %1950 = vmatprep.subr.mxu0 0.0
    %1951 = vmatpush1.msra.mxu0 0.0
    %1952 = vmatprep.subr.mxu0 0.0
    %1953 = vmatpush1.msra.mxu0 0.0
    %1954 = vmatprep.subr.mxu0 0.0
    %1955 = vmatpush1.msra.mxu0 0.0
    %1956 = vmatprep.subr.mxu0 0.0
    %1957 = vmatpush1.msra.mxu0 0.0
    %1958 = vmatprep.subr.mxu0 0.0
    %1959 = vmatpush1.msra.mxu0 0.0
    %1960 = vmatprep.subr.mxu0 0.0
    %1961 = vmatpush1.msra.mxu0 0.0
    %1962 = vmatprep.subr.mxu0 0.0
    %1963 = vmatpush1.msra.mxu0 0.0
    %1964 = vmatprep.subr.mxu0 0.0
    %1965 = vmatpush1.msra.mxu0 0.0
    %1966 = vmatprep.subr.mxu0 0.0
    %1967 = vmatpush1.msra.mxu0 0.0
    %1968 = vmatprep.subr.mxu0 0.0
    %1969 = vmatpush1.msra.mxu0 0.0
    %1970 = vmatprep.mubr.f32.mxu0 0.0
    %1971 = vmatmul.mubr.f32.gmra.mrb[0].mxu0 %v1895
    %v1972 = vpop.f32.mrb[0].mxu0
    %v1973 = vadd.f32 0.0, %v1972
    %v1974 = vpop.f32.mrb[0].mxu0
    %1975 = vmatprep.mubr.f32.mxu0 0.0
    %1976 = vmatmul.mubr.f32.gmra.mrb[0].mxu0 %v1898
    %v1977 = vpop.f32.mrb[0].mxu0
    %v1978 = vadd.f32 0.0, %v1977
    %v1979 = vpop.f32.mrb[0].mxu0
    %1980 = vmatprep.mubr.f32.mxu0 0.0
    %1981 = vmatmul.mubr.f32.gmra.mrb[0].mxu0 %v1901
    %v1982 = vpop.f32.mrb[0].mxu0
    %v1983 = vadd.f32 0.0, %v1982
    %v1984 = vpop.f32.mrb[0].mxu0
    %1985 = vmatprep.mubr.f32.mxu0 0.0
    %1986 = vmatmul.mubr.f32.gmra.mrb[0].mxu0 %v1904
    %v1987 = vpop.f32.mrb[0].mxu0
    %v1988 = vadd.f32 0.0, %v1987
    %v1989 = vpop.f32.mrb[0].mxu0
    %1990 = vdwg.mxu0
    %1995 = vrot.lane.b32.xlu0 %v1709, 64
    %v1996 = vpop.permute.xlu0 %1995
    %1997 = vrot.lane.b32.xlu0 %v1710, 64
    %v1998 = vpop.permute.xlu0 %1997
    %1999 = vrot.lane.b32.xlu0 %v1711, 64
    %v2000 = vpop.permute.xlu0 %1999
    %2001 = vrot.lane.b32.xlu0 %v1712, 64
    %v2002 = vpop.permute.xlu0 %2001
    %v2008 = vsel %vm245, %v1698, 0
    %v2011 = vsel %vm245, %v1700, 0
    %v2014 = vsel %vm245, %v1702, 0
    %v2017 = vsel %vm245, %v1704, 0
    %2019 = vmatprep.subr.mxu0 0.0
    %2020 = vmatpush1.msra.mxu0 %v1996
    %2021 = vmatprep.subr.mxu0 0.0
    %2022 = vmatpush1.msra.mxu0 %v1998
    %2023 = vmatprep.subr.mxu0 0.0
    %2024 = vmatpush1.msra.mxu0 %v2000
    %2025 = vmatprep.subr.mxu0 0.0
    %2026 = vmatpush1.msra.mxu0 %v2002
    %2027 = vmatprep.subr.mxu0 0.0
    %2028 = vmatpush1.msra.mxu0 0.0
    %2029 = vmatprep.subr.mxu0 0.0
    %2030 = vmatpush1.msra.mxu0 0.0
    %2031 = vmatprep.subr.mxu0 0.0
    %2032 = vmatpush1.msra.mxu0 0.0
    %2033 = vmatprep.subr.mxu0 0.0
    %2034 = vmatpush1.msra.mxu0 0.0
    %2035 = vmatprep.subr.mxu0 0.0
    %2036 = vmatpush1.msra.mxu0 0.0
    %2037 = vmatprep.subr.mxu0 0.0
    %2038 = vmatpush1.msra.mxu0 0.0
    %2039 = vmatprep.subr.mxu0 0.0
    %2040 = vmatpush1.msra.mxu0 0.0
    %2041 = vmatprep.subr.mxu0 0.0
    %2042 = vmatpush1.msra.mxu0 0.0
    %2043 = vmatprep.subr.mxu0 0.0
    %2044 = vmatpush1.msra.mxu0 0.0
    %2045 = vmatprep.subr.mxu0 0.0
    %2046 = vmatpush1.msra.mxu0 0.0
    %2047 = vmatprep.subr.mxu0 0.0
    %2048 = vmatpush1.msra.mxu0 0.0
    %2049 = vmatprep.subr.mxu0 0.0
    %2050 = vmatpush1.msra.mxu0 0.0
    %2051 = vmatprep.subr.mxu0 0.0
    %2052 = vmatpush1.msra.mxu0 0.0
    %2053 = vmatprep.subr.mxu0 0.0
    %2054 = vmatpush1.msra.mxu0 0.0
    %2055 = vmatprep.subr.mxu0 0.0
    %2056 = vmatpush1.msra.mxu0 0.0
    %2057 = vmatprep.subr.mxu0 0.0
    %2058 = vmatpush1.msra.mxu0 0.0
    %2059 = vmatprep.subr.mxu0 0.0
    %2060 = vmatpush1.msra.mxu0 0.0
    %2061 = vmatprep.subr.mxu0 0.0
    %2062 = vmatpush1.msra.mxu0 0.0
    %2063 = vmatprep.subr.mxu0 0.0
    %2064 = vmatpush1.msra.mxu0 0.0
    %2065 = vmatprep.subr.mxu0 0.0
    %2066 = vmatpush1.msra.mxu0 0.0
    %2067 = vmatprep.subr.mxu0 0.0
    %2068 = vmatpush1.msra.mxu0 0.0
    %2069 = vmatprep.subr.mxu0 0.0
    %2070 = vmatpush1.msra.mxu0 0.0
    %2071 = vmatprep.subr.mxu0 0.0
    %2072 = vmatpush1.msra.mxu0 0.0
    %2073 = vmatprep.subr.mxu0 0.0
    %2074 = vmatpush1.msra.mxu0 0.0
    %2075 = vmatprep.subr.mxu0 0.0
    %2076 = vmatpush1.msra.mxu0 0.0
    %2077 = vmatprep.subr.mxu0 0.0
    %2078 = vmatpush1.msra.mxu0 0.0
    %2079 = vmatprep.subr.mxu0 0.0
    %2080 = vmatpush1.msra.mxu0 0.0
    %2081 = vmatprep.subr.mxu0 0.0
    %2082 = vmatpush1.msra.mxu0 0.0
    %2083 = vmatprep.mubr.f32.mxu0 0.0
    %2084 = vmatmul.mubr.f32.gmra.mrb[0].mxu0 %v2008
    %v2085 = vpop.f32.mrb[0].mxu0
    %v2086 = vadd.f32 %v1973, %v2085
    %v2087 = vpop.f32.mrb[0].mxu0
    %2088 = vmatprep.mubr.f32.mxu0 0.0
    %2089 = vmatmul.mubr.f32.gmra.mrb[0].mxu0 %v2011
    %v2090 = vpop.f32.mrb[0].mxu0
    %v2091 = vadd.f32 %v1978, %v2090
    %v2092 = vpop.f32.mrb[0].mxu0
    %2093 = vmatprep.mubr.f32.mxu0 0.0
    %2094 = vmatmul.mubr.f32.gmra.mrb[0].mxu0 %v2014
    %v2095 = vpop.f32.mrb[0].mxu0
    %v2096 = vadd.f32 %v1983, %v2095
    %v2097 = vpop.f32.mrb[0].mxu0
    %2098 = vmatprep.mubr.f32.mxu0 0.0
    %2099 = vmatmul.mubr.f32.gmra.mrb[0].mxu0 %v2017
    %v2100 = vpop.f32.mrb[0].mxu0
    %v2101 = vadd.f32 %v1988, %v2100
    %v2102 = vpop.f32.mrb[0].mxu0
    %2103 = vdwg.mxu0
    %v2104 = vlaneseq
    %v2105 = vshrl.u32 %v2104, 7
    %v2106 = vsub.s32 2, %v2105
    %v2107 = vrot.slane %v123, %v2106
    %v2108 = vmul.f32 %v1510, %v2107
    %v2109 = vmul.f32 %v1515, %v2107
    %v2110 = vmul.f32 %v1520, %v2107
    %v2111 = vmul.f32 %v1525, %v2107
    %v2113 = vsel %vm245, %v2108, 0
    %v2116 = vsel %vm245, %v2109, 0
    %v2119 = vsel %vm245, %v2110, 0
    %v2122 = vsel %vm245, %v2111, 0
    %2124 = vmatprep.subr.mxu0 0.0
    %2125 = vmatpush1.xpose.msra.mxu0 %v1560
    %2126 = vmatprep.subr.mxu0 0.0
    %2127 = vmatpush1.xpose.msra.mxu0 %v1562
    %2128 = vmatprep.subr.mxu0 0.0
    %2129 = vmatpush1.xpose.msra.mxu0 %v1564
    %2130 = vmatprep.subr.mxu0 0.0
    %2131 = vmatpush1.xpose.msra.mxu0 %v1566
    %2132 = vmatprep.subr.mxu0 0.0
    %2133 = vmatpush1.xpose.msra.mxu0 0.0
    %2134 = vmatprep.subr.mxu0 0.0
    %2135 = vmatpush1.xpose.msra.mxu0 0.0
    %2136 = vmatprep.subr.mxu0 0.0
    %2137 = vmatpush1.xpose.msra.mxu0 0.0
    %2138 = vmatprep.subr.mxu0 0.0
    %2139 = vmatpush1.xpose.msra.mxu0 0.0
    %2140 = vmatprep.subr.mxu0 0.0
    %2141 = vmatpush1.xpose.msra.mxu0 0.0
    %2142 = vmatprep.subr.mxu0 0.0
    %2143 = vmatpush1.xpose.msra.mxu0 0.0
    %2144 = vmatprep.subr.mxu0 0.0
    %2145 = vmatpush1.xpose.msra.mxu0 0.0
    %2146 = vmatprep.subr.mxu0 0.0
    %2147 = vmatpush1.xpose.msra.mxu0 0.0
    %2148 = vmatprep.subr.mxu0 0.0
    %2149 = vmatpush1.xpose.msra.mxu0 0.0
    %2150 = vmatprep.subr.mxu0 0.0
    %2151 = vmatpush1.xpose.msra.mxu0 0.0
    %2152 = vmatprep.subr.mxu0 0.0
    %2153 = vmatpush1.xpose.msra.mxu0 0.0
    %2154 = vmatprep.subr.mxu0 0.0
    %2155 = vmatpush1.xpose.msra.mxu0 0.0
    %2156 = vmatprep.subr.mxu0 0.0
    %2157 = vmatpush1.xpose.msra.mxu0 0.0
    %2158 = vmatprep.subr.mxu0 0.0
    %2159 = vmatpush1.xpose.msra.mxu0 0.0
    %2160 = vmatprep.subr.mxu0 0.0
    %2161 = vmatpush1.xpose.msra.mxu0 0.0
    %2162 = vmatprep.subr.mxu0 0.0
    %2163 = vmatpush1.xpose.msra.mxu0 0.0
    %2164 = vmatprep.subr.mxu0 0.0
    %2165 = vmatpush1.xpose.msra.mxu0 0.0
    %2166 = vmatprep.subr.mxu0 0.0
    %2167 = vmatpush1.xpose.msra.mxu0 0.0
    %2168 = vmatprep.subr.mxu0 0.0
    %2169 = vmatpush1.xpose.msra.mxu0 0.0
    %2170 = vmatprep.subr.mxu0 0.0
    %2171 = vmatpush1.xpose.msra.mxu0 0.0
    %2172 = vmatprep.subr.mxu0 0.0
    %2173 = vmatpush1.xpose.msra.mxu0 0.0
    %2174 = vmatprep.subr.mxu0 0.0
    %2175 = vmatpush1.xpose.msra.mxu0 0.0
    %2176 = vmatprep.subr.mxu0 0.0
    %2177 = vmatpush1.xpose.msra.mxu0 0.0
    %2178 = vmatprep.subr.mxu0 0.0
    %2179 = vmatpush1.xpose.msra.mxu0 0.0
    %2180 = vmatprep.subr.mxu0 0.0
    %2181 = vmatpush1.xpose.msra.mxu0 0.0
    %2182 = vmatprep.subr.mxu0 0.0
    %2183 = vmatpush1.xpose.msra.mxu0 0.0
    %2184 = vmatprep.subr.mxu0 0.0
    %2185 = vmatpush1.xpose.msra.mxu0 0.0
    %2186 = vmatprep.subr.mxu0 0.0
    %2187 = vmatpush1.xpose.msra.mxu0 0.0
    %2188 = vmatprep.mubr.f32.mxu0 0.0
    %2189 = vmatmul.mubr.f32.gmra.mrb[0].mxu0 %v2113
    %v2190 = vpop.f32.mrb[0].mxu0
    %v2191 = vadd.f32 0.0, %v2190
    %v2192 = vpop.f32.mrb[0].mxu0
    %2193 = vmatprep.mubr.f32.mxu0 0.0
    %2194 = vmatmul.mubr.f32.gmra.mrb[0].mxu0 %v2116
    %v2195 = vpop.f32.mrb[0].mxu0
    %v2196 = vadd.f32 0.0, %v2195
    %v2197 = vpop.f32.mrb[0].mxu0
    %2198 = vmatprep.mubr.f32.mxu0 0.0
    %2199 = vmatmul.mubr.f32.gmra.mrb[0].mxu0 %v2119
    %v2200 = vpop.f32.mrb[0].mxu0
    %v2201 = vadd.f32 0.0, %v2200
    %v2202 = vpop.f32.mrb[0].mxu0
    %2203 = vmatprep.mubr.f32.mxu0 0.0
    %2204 = vmatmul.mubr.f32.gmra.mrb[0].mxu0 %v2122
    %v2205 = vpop.f32.mrb[0].mxu0
    %v2206 = vadd.f32 0.0, %v2205
    %v2207 = vpop.f32.mrb[0].mxu0
    %2208 = vdwg.mxu0
    %v2209 = vmul.f32 %v2191, 0.25
    %v2210 = vmul.f32 %v2196, 0.25
    %v2211 = vmul.f32 %v2201, 0.25
    %v2212 = vmul.f32 %v2206, 0.25
    %v2213 = vadd.f32 %v2209, %v119
    %v2214 = vadd.f32 %v2210, %v120
    %v2215 = vadd.f32 %v2211, %v121
    %v2216 = vadd.f32 %v2212, %v122
    %v2217 = vsel %vm245, %v2213, -inf
    %2218 = vmax.xlane.f32.xlu0 %v2217
    %v2219 = vpop.xlane.xlu0 %2218
    %v2220 = vsel %vm245, %v2214, -inf
    %2221 = vmax.xlane.f32.xlu0 %v2220
    %v2222 = vpop.xlane.xlu0 %2221
    %v2223 = vsel %vm245, %v2215, -inf
    %2224 = vmax.xlane.f32.xlu0 %v2223
    %v2225 = vpop.xlane.xlu0 %2224
    %v2226 = vsel %vm245, %v2216, -inf
    %2227 = vmax.xlane.f32.xlu0 %v2226
    %v2228 = vpop.xlane.xlu0 %2227
    %v2229 = vsub.f32 %v2213, %v2219
    %v2230 = vsub.f32 %v2214, %v2222
    %v2231 = vsub.f32 %v2215, %v2225
    %v2232 = vsub.f32 %v2216, %v2228
    %v2233 = vmul.f32 %v2229, 1.442695
    %v2234 = vpow.pop %v2233
    %v2235 = vmul.f32 %v2230, 1.442695
    %v2236 = vpow.pop %v2235
    %v2237 = vmul.f32 %v2231, 1.442695
    %v2238 = vpow.pop %v2237
    %v2239 = vmul.f32 %v2232, 1.442695
    %v2240 = vpow.pop %v2239
    %v2241 = vsel %vm245, %v2234, 0.0
    %2242 = vadd.xlane.f32.xlu0 %v2241
    %v2243 = vpop.xlane.xlu0 %2242
    %v2244 = vsel %vm245, %v2236, 0.0
    %2245 = vadd.xlane.f32.xlu0 %v2244
    %v2246 = vpop.xlane.xlu0 %2245
    %v2247 = vsel %vm245, %v2238, 0.0
    %2248 = vadd.xlane.f32.xlu0 %v2247
    %v2249 = vpop.xlane.xlu0 %2248
    %v2250 = vsel %vm245, %v2240, 0.0
    %2251 = vadd.xlane.f32.xlu0 %v2250
    %v2252 = vpop.xlane.xlu0 %2251
    %v2253 = vrcp.pop %v2243
    %v2254 = vmul.f32 %v2234, %v2253
    %v2255 = vrcp.pop %v2246
    %v2256 = vmul.f32 %v2236, %v2255
    %v2257 = vrcp.pop %v2249
    %v2258 = vmul.f32 %v2238, %v2257
    %v2259 = vrcp.pop %v2252
    %v2260 = vmul.f32 %v2240, %v2259
    %2262 = vrot.lane.b32.xlu0 %v2107, 64
    %v2263 = vpop.permute.xlu0 %2262
    %v2265 = vmul.f32 %v1510, %v2263
    %v2266 = vmul.f32 %v1515, %v2263
    %v2267 = vmul.f32 %v1520, %v2263
    %v2268 = vmul.f32 %v1525, %v2263
    %2273 = vrot.lane.b32.xlu0 %v2265, 64
    %v2274 = vpop.permute.xlu0 %2273
    %2275 = vrot.lane.b32.xlu0 %v2266, 64
    %v2276 = vpop.permute.xlu0 %2275
    %2277 = vrot.lane.b32.xlu0 %v2267, 64
    %v2278 = vpop.permute.xlu0 %2277
    %2279 = vrot.lane.b32.xlu0 %v2268, 64
    %v2280 = vpop.permute.xlu0 %2279
    %v2286 = vsel %vm245, %v2254, 0
    %v2289 = vsel %vm245, %v2256, 0
    %v2292 = vsel %vm245, %v2258, 0
    %v2295 = vsel %vm245, %v2260, 0
    %2297 = vmatprep.subr.mxu0 0.0
    %2298 = vmatpush1.msra.mxu0 %v2274
    %2299 = vmatprep.subr.mxu0 0.0
    %2300 = vmatpush1.msra.mxu0 %v2276
    %2301 = vmatprep.subr.mxu0 0.0
    %2302 = vmatpush1.msra.mxu0 %v2278
    %2303 = vmatprep.subr.mxu0 0.0
    %2304 = vmatpush1.msra.mxu0 %v2280
    %2305 = vmatprep.subr.mxu0 0.0
    %2306 = vmatpush1.msra.mxu0 0.0
    %2307 = vmatprep.subr.mxu0 0.0
    %2308 = vmatpush1.msra.mxu0 0.0
    %2309 = vmatprep.subr.mxu0 0.0
    %2310 = vmatpush1.msra.mxu0 0.0
    %2311 = vmatprep.subr.mxu0 0.0
    %2312 = vmatpush1.msra.mxu0 0.0
    %2313 = vmatprep.subr.mxu0 0.0
    %2314 = vmatpush1.msra.mxu0 0.0
    %2315 = vmatprep.subr.mxu0 0.0
    %2316 = vmatpush1.msra.mxu0 0.0
    %2317 = vmatprep.subr.mxu0 0.0
    %2318 = vmatpush1.msra.mxu0 0.0
    %2319 = vmatprep.subr.mxu0 0.0
    %2320 = vmatpush1.msra.mxu0 0.0
    %2321 = vmatprep.subr.mxu0 0.0
    %2322 = vmatpush1.msra.mxu0 0.0
    %2323 = vmatprep.subr.mxu0 0.0
    %2324 = vmatpush1.msra.mxu0 0.0
    %2325 = vmatprep.subr.mxu0 0.0
    %2326 = vmatpush1.msra.mxu0 0.0
    %2327 = vmatprep.subr.mxu0 0.0
    %2328 = vmatpush1.msra.mxu0 0.0
    %2329 = vmatprep.subr.mxu0 0.0
    %2330 = vmatpush1.msra.mxu0 0.0
    %2331 = vmatprep.subr.mxu0 0.0
    %2332 = vmatpush1.msra.mxu0 0.0
    %2333 = vmatprep.subr.mxu0 0.0
    %2334 = vmatpush1.msra.mxu0 0.0
    %2335 = vmatprep.subr.mxu0 0.0
    %2336 = vmatpush1.msra.mxu0 0.0
    %2337 = vmatprep.subr.mxu0 0.0
    %2338 = vmatpush1.msra.mxu0 0.0
    %2339 = vmatprep.subr.mxu0 0.0
    %2340 = vmatpush1.msra.mxu0 0.0
    %2341 = vmatprep.subr.mxu0 0.0
    %2342 = vmatpush1.msra.mxu0 0.0
    %2343 = vmatprep.subr.mxu0 0.0
    %2344 = vmatpush1.msra.mxu0 0.0
    %2345 = vmatprep.subr.mxu0 0.0
    %2346 = vmatpush1.msra.mxu0 0.0
    %2347 = vmatprep.subr.mxu0 0.0
    %2348 = vmatpush1.msra.mxu0 0.0
    %2349 = vmatprep.subr.mxu0 0.0
    %2350 = vmatpush1.msra.mxu0 0.0
    %2351 = vmatprep.subr.mxu0 0.0
    %2352 = vmatpush1.msra.mxu0 0.0
    %2353 = vmatprep.subr.mxu0 0.0
    %2354 = vmatpush1.msra.mxu0 0.0
    %2355 = vmatprep.subr.mxu0 0.0
    %2356 = vmatpush1.msra.mxu0 0.0
    %2357 = vmatprep.subr.mxu0 0.0
    %2358 = vmatpush1.msra.mxu0 0.0
    %2359 = vmatprep.subr.mxu0 0.0
    %2360 = vmatpush1.msra.mxu0 0.0
    %2361 = vmatprep.mubr.f32.mxu0 0.0
    %2362 = vmatmul.mubr.f32.gmra.mrb[0].mxu0 %v2286
    %v2363 = vpop.f32.mrb[0].mxu0
    %v2364 = vadd.f32 0.0, %v2363
    %v2365 = vpop.f32.mrb[0].mxu0
    %2366 = vmatprep.mubr.f32.mxu0 0.0
    %2367 = vmatmul.mubr.f32.gmra.mrb[0].mxu0 %v2289
    %v2368 = vpop.f32.mrb[0].mxu0
    %v2369 = vadd.f32 0.0, %v2368
    %v2370 = vpop.f32.mrb[0].mxu0
    %2371 = vmatprep.mubr.f32.mxu0 0.0
    %2372 = vmatmul.mubr.f32.gmra.mrb[0].mxu0 %v2292
    %v2373 = vpop.f32.mrb[0].mxu0
    %v2374 = vadd.f32 0.0, %v2373
    %v2375 = vpop.f32.mrb[0].mxu0
    %2376 = vmatprep.mubr.f32.mxu0 0.0
    %2377 = vmatmul.mubr.f32.gmra.mrb[0].mxu0 %v2295
    %v2378 = vpop.f32.mrb[0].mxu0
    %v2379 = vadd.f32 0.0, %v2378
    %v2380 = vpop.f32.mrb[0].mxu0
    %2381 = vdwg.mxu0
    %v2382 = vadd.f32 %v2086, %v2364
    %v2383 = vadd.f32 %v2091, %v2369
    %v2384 = vadd.f32 %v2096, %v2374
    %v2385 = vadd.f32 %v2101, %v2379
    %v2386 = vlaneseq
    %v2387 = vshrl.u32 %v2386, 7
    %v2388 = vsub.s32 3, %v2387
    %v2389 = vrot.slane %v123, %v2388
    %v2390 = vmul.f32 %v1510, %v2389
    %v2391 = vmul.f32 %v1515, %v2389
    %v2392 = vmul.f32 %v1520, %v2389
    %v2393 = vmul.f32 %v1525, %v2389
    %v2395 = vsel %vm245, %v2390, 0
    %v2398 = vsel %vm245, %v2391, 0
    %v2401 = vsel %vm245, %v2392, 0
    %v2404 = vsel %vm245, %v2393, 0
    %2406 = vmatprep.subr.mxu0 0.0
    %2407 = vmatpush1.xpose.msra.mxu0 %v1560
    %2408 = vmatprep.subr.mxu0 0.0
    %2409 = vmatpush1.xpose.msra.mxu0 %v1562
    %2410 = vmatprep.subr.mxu0 0.0
    %2411 = vmatpush1.xpose.msra.mxu0 %v1564
    %2412 = vmatprep.subr.mxu0 0.0
    %2413 = vmatpush1.xpose.msra.mxu0 %v1566
    %2414 = vmatprep.subr.mxu0 0.0
    %2415 = vmatpush1.xpose.msra.mxu0 0.0
    %2416 = vmatprep.subr.mxu0 0.0
    %2417 = vmatpush1.xpose.msra.mxu0 0.0
    %2418 = vmatprep.subr.mxu0 0.0
    %2419 = vmatpush1.xpose.msra.mxu0 0.0
    %2420 = vmatprep.subr.mxu0 0.0
    %2421 = vmatpush1.xpose.msra.mxu0 0.0
    %2422 = vmatprep.subr.mxu0 0.0
    %2423 = vmatpush1.xpose.msra.mxu0 0.0
    %2424 = vmatprep.subr.mxu0 0.0
    %2425 = vmatpush1.xpose.msra.mxu0 0.0
    %2426 = vmatprep.subr.mxu0 0.0
    %2427 = vmatpush1.xpose.msra.mxu0 0.0
    %2428 = vmatprep.subr.mxu0 0.0
    %2429 = vmatpush1.xpose.msra.mxu0 0.0
    %2430 = vmatprep.subr.mxu0 0.0
    %2431 = vmatpush1.xpose.msra.mxu0 0.0
    %2432 = vmatprep.subr.mxu0 0.0
    %2433 = vmatpush1.xpose.msra.mxu0 0.0
    %2434 = vmatprep.subr.mxu0 0.0
    %2435 = vmatpush1.xpose.msra.mxu0 0.0
    %2436 = vmatprep.subr.mxu0 0.0
    %2437 = vmatpush1.xpose.msra.mxu0 0.0
    %2438 = vmatprep.subr.mxu0 0.0
    %2439 = vmatpush1.xpose.msra.mxu0 0.0
    %2440 = vmatprep.subr.mxu0 0.0
    %2441 = vmatpush1.xpose.msra.mxu0 0.0
    %2442 = vmatprep.subr.mxu0 0.0
    %2443 = vmatpush1.xpose.msra.mxu0 0.0
    %2444 = vmatprep.subr.mxu0 0.0
    %2445 = vmatpush1.xpose.msra.mxu0 0.0
    %2446 = vmatprep.subr.mxu0 0.0
    %2447 = vmatpush1.xpose.msra.mxu0 0.0
    %2448 = vmatprep.subr.mxu0 0.0
    %2449 = vmatpush1.xpose.msra.mxu0 0.0
    %2450 = vmatprep.subr.mxu0 0.0
    %2451 = vmatpush1.xpose.msra.mxu0 0.0
    %2452 = vmatprep.subr.mxu0 0.0
    %2453 = vmatpush1.xpose.msra.mxu0 0.0
    %2454 = vmatprep.subr.mxu0 0.0
    %2455 = vmatpush1.xpose.msra.mxu0 0.0
    %2456 = vmatprep.subr.mxu0 0.0
    %2457 = vmatpush1.xpose.msra.mxu0 0.0
    %2458 = vmatprep.subr.mxu0 0.0
    %2459 = vmatpush1.xpose.msra.mxu0 0.0
    %2460 = vmatprep.subr.mxu0 0.0
    %2461 = vmatpush1.xpose.msra.mxu0 0.0
    %2462 = vmatprep.subr.mxu0 0.0
    %2463 = vmatpush1.xpose.msra.mxu0 0.0
    %2464 = vmatprep.subr.mxu0 0.0
    %2465 = vmatpush1.xpose.msra.mxu0 0.0
    %2466 = vmatprep.subr.mxu0 0.0
    %2467 = vmatpush1.xpose.msra.mxu0 0.0
    %2468 = vmatprep.subr.mxu0 0.0
    %2469 = vmatpush1.xpose.msra.mxu0 0.0
    %2470 = vmatprep.mubr.f32.mxu0 0.0
    %2471 = vmatmul.mubr.f32.gmra.mrb[0].mxu0 %v2395
    %v2472 = vpop.f32.mrb[0].mxu0
    %v2473 = vadd.f32 0.0, %v2472
    %v2474 = vpop.f32.mrb[0].mxu0
    %2475 = vmatprep.mubr.f32.mxu0 0.0
    %2476 = vmatmul.mubr.f32.gmra.mrb[0].mxu0 %v2398
    %v2477 = vpop.f32.mrb[0].mxu0
    %v2478 = vadd.f32 0.0, %v2477
    %v2479 = vpop.f32.mrb[0].mxu0
    %2480 = vmatprep.mubr.f32.mxu0 0.0
    %2481 = vmatmul.mubr.f32.gmra.mrb[0].mxu0 %v2401
    %v2482 = vpop.f32.mrb[0].mxu0
    %v2483 = vadd.f32 0.0, %v2482
    %v2484 = vpop.f32.mrb[0].mxu0
    %2485 = vmatprep.mubr.f32.mxu0 0.0
    %2486 = vmatmul.mubr.f32.gmra.mrb[0].mxu0 %v2404
    %v2487 = vpop.f32.mrb[0].mxu0
    %v2488 = vadd.f32 0.0, %v2487
    %v2489 = vpop.f32.mrb[0].mxu0
    %2490 = vdwg.mxu0
    %v2491 = vmul.f32 %v2473, 0.25
    %v2492 = vmul.f32 %v2478, 0.25
    %v2493 = vmul.f32 %v2483, 0.25
    %v2494 = vmul.f32 %v2488, 0.25
    %v2495 = vadd.f32 %v2491, %v119
    %v2496 = vadd.f32 %v2492, %v120
    %v2497 = vadd.f32 %v2493, %v121
    %v2498 = vadd.f32 %v2494, %v122
    %v2499 = vsel %vm245, %v2495, -inf
    %2500 = vmax.xlane.f32.xlu0 %v2499
    %v2501 = vpop.xlane.xlu0 %2500
    %v2502 = vsel %vm245, %v2496, -inf
    %2503 = vmax.xlane.f32.xlu0 %v2502
    %v2504 = vpop.xlane.xlu0 %2503
    %v2505 = vsel %vm245, %v2497, -inf
    %2506 = vmax.xlane.f32.xlu0 %v2505
    %v2507 = vpop.xlane.xlu0 %2506
    %v2508 = vsel %vm245, %v2498, -inf
    %2509 = vmax.xlane.f32.xlu0 %v2508
    %v2510 = vpop.xlane.xlu0 %2509
    %v2511 = vsub.f32 %v2495, %v2501
    %v2512 = vsub.f32 %v2496, %v2504
    %v2513 = vsub.f32 %v2497, %v2507
    %v2514 = vsub.f32 %v2498, %v2510
    %v2515 = vmul.f32 %v2511, 1.442695
    %v2516 = vpow.pop %v2515
    %v2517 = vmul.f32 %v2512, 1.442695
    %v2518 = vpow.pop %v2517
    %v2519 = vmul.f32 %v2513, 1.442695
    %v2520 = vpow.pop %v2519
    %v2521 = vmul.f32 %v2514, 1.442695
    %v2522 = vpow.pop %v2521
    %v2523 = vsel %vm245, %v2516, 0.0
    %2524 = vadd.xlane.f32.xlu0 %v2523
    %v2525 = vpop.xlane.xlu0 %2524
    %v2526 = vsel %vm245, %v2518, 0.0
    %2527 = vadd.xlane.f32.xlu0 %v2526
    %v2528 = vpop.xlane.xlu0 %2527
    %v2529 = vsel %vm245, %v2520, 0.0
    %2530 = vadd.xlane.f32.xlu0 %v2529
    %v2531 = vpop.xlane.xlu0 %2530
    %v2532 = vsel %vm245, %v2522, 0.0
    %2533 = vadd.xlane.f32.xlu0 %v2532
    %v2534 = vpop.xlane.xlu0 %2533
    %v2535 = vrcp.pop %v2525
    %v2536 = vmul.f32 %v2516, %v2535
    %v2537 = vrcp.pop %v2528
    %v2538 = vmul.f32 %v2518, %v2537
    %v2539 = vrcp.pop %v2531
    %v2540 = vmul.f32 %v2520, %v2539
    %v2541 = vrcp.pop %v2534
    %v2542 = vmul.f32 %v2522, %v2541
    %2544 = vrot.lane.b32.xlu0 %v2389, 64
    %v2545 = vpop.permute.xlu0 %2544
    %v2547 = vmul.f32 %v1510, %v2545
    %v2548 = vmul.f32 %v1515, %v2545
    %v2549 = vmul.f32 %v1520, %v2545
    %v2550 = vmul.f32 %v1525, %v2545
    %2555 = vrot.lane.b32.xlu0 %v2547, 64
    %v2556 = vpop.permute.xlu0 %2555
    %2557 = vrot.lane.b32.xlu0 %v2548, 64
    %v2558 = vpop.permute.xlu0 %2557
    %2559 = vrot.lane.b32.xlu0 %v2549, 64
    %v2560 = vpop.permute.xlu0 %2559
    %2561 = vrot.lane.b32.xlu0 %v2550, 64
    %v2562 = vpop.permute.xlu0 %2561
    %v2568 = vsel %vm245, %v2536, 0
    %v2571 = vsel %vm245, %v2538, 0
    %v2574 = vsel %vm245, %v2540, 0
    %v2577 = vsel %vm245, %v2542, 0
    %2579 = vmatprep.subr.mxu0 0.0
    %2580 = vmatpush1.msra.mxu0 %v2556
    %2581 = vmatprep.subr.mxu0 0.0
    %2582 = vmatpush1.msra.mxu0 %v2558
    %2583 = vmatprep.subr.mxu0 0.0
    %2584 = vmatpush1.msra.mxu0 %v2560
    %2585 = vmatprep.subr.mxu0 0.0
    %2586 = vmatpush1.msra.mxu0 %v2562
    %2587 = vmatprep.subr.mxu0 0.0
    %2588 = vmatpush1.msra.mxu0 0.0
    %2589 = vmatprep.subr.mxu0 0.0
    %2590 = vmatpush1.msra.mxu0 0.0
    %2591 = vmatprep.subr.mxu0 0.0
    %2592 = vmatpush1.msra.mxu0 0.0
    %2593 = vmatprep.subr.mxu0 0.0
    %2594 = vmatpush1.msra.mxu0 0.0
    %2595 = vmatprep.subr.mxu0 0.0
    %2596 = vmatpush1.msra.mxu0 0.0
    %2597 = vmatprep.subr.mxu0 0.0
    %2598 = vmatpush1.msra.mxu0 0.0
    %2599 = vmatprep.subr.mxu0 0.0
    %2600 = vmatpush1.msra.mxu0 0.0
    %2601 = vmatprep.subr.mxu0 0.0
    %2602 = vmatpush1.msra.mxu0 0.0
    %2603 = vmatprep.subr.mxu0 0.0
    %2604 = vmatpush1.msra.mxu0 0.0
    %2605 = vmatprep.subr.mxu0 0.0
    %2606 = vmatpush1.msra.mxu0 0.0
    %2607 = vmatprep.subr.mxu0 0.0
    %2608 = vmatpush1.msra.mxu0 0.0
    %2609 = vmatprep.subr.mxu0 0.0
    %2610 = vmatpush1.msra.mxu0 0.0
    %2611 = vmatprep.subr.mxu0 0.0
    %2612 = vmatpush1.msra.mxu0 0.0
    %2613 = vmatprep.subr.mxu0 0.0
    %2614 = vmatpush1.msra.mxu0 0.0
    %2615 = vmatprep.subr.mxu0 0.0
    %2616 = vmatpush1.msra.mxu0 0.0
    %2617 = vmatprep.subr.mxu0 0.0
    %2618 = vmatpush1.msra.mxu0 0.0
    %2619 = vmatprep.subr.mxu0 0.0
    %2620 = vmatpush1.msra.mxu0 0.0
    %2621 = vmatprep.subr.mxu0 0.0
    %2622 = vmatpush1.msra.mxu0 0.0
    %2623 = vmatprep.subr.mxu0 0.0
    %2624 = vmatpush1.msra.mxu0 0.0
    %2625 = vmatprep.subr.mxu0 0.0
    %2626 = vmatpush1.msra.mxu0 0.0
    %2627 = vmatprep.subr.mxu0 0.0
    %2628 = vmatpush1.msra.mxu0 0.0
    %2629 = vmatprep.subr.mxu0 0.0
    %2630 = vmatpush1.msra.mxu0 0.0
    %2631 = vmatprep.subr.mxu0 0.0
    %2632 = vmatpush1.msra.mxu0 0.0
    %2633 = vmatprep.subr.mxu0 0.0
    %2634 = vmatpush1.msra.mxu0 0.0
    %2635 = vmatprep.subr.mxu0 0.0
    %2636 = vmatpush1.msra.mxu0 0.0
    %2637 = vmatprep.subr.mxu0 0.0
    %2638 = vmatpush1.msra.mxu0 0.0
    %2639 = vmatprep.subr.mxu0 0.0
    %2640 = vmatpush1.msra.mxu0 0.0
    %2641 = vmatprep.subr.mxu0 0.0
    %2642 = vmatpush1.msra.mxu0 0.0
    %2643 = vmatprep.mubr.f32.mxu0 0.0
    %2644 = vmatmul.mubr.f32.gmra.mrb[0].mxu0 %v2568
    %v2645 = vpop.f32.mrb[0].mxu0
    %v2646 = vadd.f32 0.0, %v2645
    %v2647 = vpop.f32.mrb[0].mxu0
    %2648 = vmatprep.mubr.f32.mxu0 0.0
    %2649 = vmatmul.mubr.f32.gmra.mrb[0].mxu0 %v2571
    %v2650 = vpop.f32.mrb[0].mxu0
    %v2651 = vadd.f32 0.0, %v2650
    %v2652 = vpop.f32.mrb[0].mxu0
    %2653 = vmatprep.mubr.f32.mxu0 0.0
    %2654 = vmatmul.mubr.f32.gmra.mrb[0].mxu0 %v2574
    %v2655 = vpop.f32.mrb[0].mxu0
    %v2656 = vadd.f32 0.0, %v2655
    %v2657 = vpop.f32.mrb[0].mxu0
    %2658 = vmatprep.mubr.f32.mxu0 0.0
    %2659 = vmatmul.mubr.f32.gmra.mrb[0].mxu0 %v2577
    %v2660 = vpop.f32.mrb[0].mxu0
    %v2661 = vadd.f32 0.0, %v2660
    %v2662 = vpop.f32.mrb[0].mxu0
    %2663 = vdwg.mxu0
    %v2664 = vadd.f32 %v2382, %v2646
    %v2665 = vadd.f32 %v2383, %v2651
    %v2666 = vadd.f32 %v2384, %v2656
    %v2667 = vadd.f32 %v2385, %v2661
    %v2668 = vadd.f32 %v2664, %v1423
    %v2669 = vadd.f32 %v2665, %v1424
    %v2670 = vadd.f32 %v2666, %v1425
    %v2671 = vadd.f32 %v2667, %v1426
    %s2672 = scalar_lea.vmem %s8, 32
    %v2673 = vld [vmem:[%s2672] sm:$0xff]
    %v2674 = vld [vmem:[%s2672 + $0x8] sm:$0xff]
    %v2675 = vld [vmem:[%s2672 + $0x10] sm:$0xff]
    %v2676 = vld [vmem:[%s2672 + $0x18] sm:$0xff]
    %s2677 = scalar_lea.vmem %s9, 1
    %v2678 = vld [vmem:[%s2677] sm:$0x1]
    %v2680 = vlaneseq
    %v2681 = vshrl.u32 %v2680, 7
    %v2682 = vsub.s32 0, %v2681
    %v2683 = vrot.slane %v2678, %v2682
    %2685 = vmatprep.subr.mxu0 0.0
    %2686 = vmatpush1.msra.mxu0 %v2673
    %2687 = vmatprep.subr.mxu0 0.0
    %2688 = vmatpush1.msra.mxu0 %v2674
    %2689 = vmatprep.subr.mxu0 0.0
    %2690 = vmatpush1.msra.mxu0 %v2675
    %2691 = vmatprep.subr.mxu0 0.0
    %2692 = vmatpush1.msra.mxu0 %v2676
    %2693 = vmatprep.subr.mxu0 0.0
    %2694 = vmatpush1.msra.mxu0 0.0
    %2695 = vmatprep.subr.mxu0 0.0
    %2696 = vmatpush1.msra.mxu0 0.0
    %2697 = vmatprep.subr.mxu0 0.0
    %2698 = vmatpush1.msra.mxu0 0.0
    %2699 = vmatprep.subr.mxu0 0.0
    %2700 = vmatpush1.msra.mxu0 0.0
    %2701 = vmatprep.subr.mxu0 0.0
    %2702 = vmatpush1.msra.mxu0 0.0
    %2703 = vmatprep.subr.mxu0 0.0
    %2704 = vmatpush1.msra.mxu0 0.0
    %2705 = vmatprep.subr.mxu0 0.0
    %2706 = vmatpush1.msra.mxu0 0.0
    %2707 = vmatprep.subr.mxu0 0.0
    %2708 = vmatpush1.msra.mxu0 0.0
    %2709 = vmatprep.subr.mxu0 0.0
    %2710 = vmatpush1.msra.mxu0 0.0
    %2711 = vmatprep.subr.mxu0 0.0
    %2712 = vmatpush1.msra.mxu0 0.0
    %2713 = vmatprep.subr.mxu0 0.0
    %2714 = vmatpush1.msra.mxu0 0.0
    %2715 = vmatprep.subr.mxu0 0.0
    %2716 = vmatpush1.msra.mxu0 0.0
    %2717 = vmatprep.subr.mxu0 0.0
    %2718 = vmatpush1.msra.mxu0 0.0
    %2719 = vmatprep.subr.mxu0 0.0
    %2720 = vmatpush1.msra.mxu0 0.0
    %2721 = vmatprep.subr.mxu0 0.0
    %2722 = vmatpush1.msra.mxu0 0.0
    %2723 = vmatprep.subr.mxu0 0.0
    %2724 = vmatpush1.msra.mxu0 0.0
    %2725 = vmatprep.subr.mxu0 0.0
    %2726 = vmatpush1.msra.mxu0 0.0
    %2727 = vmatprep.subr.mxu0 0.0
    %2728 = vmatpush1.msra.mxu0 0.0
    %2729 = vmatprep.subr.mxu0 0.0
    %2730 = vmatpush1.msra.mxu0 0.0
    %2731 = vmatprep.subr.mxu0 0.0
    %2732 = vmatpush1.msra.mxu0 0.0
    %2733 = vmatprep.subr.mxu0 0.0
    %2734 = vmatpush1.msra.mxu0 0.0
    %2735 = vmatprep.subr.mxu0 0.0
    %2736 = vmatpush1.msra.mxu0 0.0
    %2737 = vmatprep.subr.mxu0 0.0
    %2738 = vmatpush1.msra.mxu0 0.0
    %2739 = vmatprep.subr.mxu0 0.0
    %2740 = vmatpush1.msra.mxu0 0.0
    %2741 = vmatprep.subr.mxu0 0.0
    %2742 = vmatpush1.msra.mxu0 0.0
    %2743 = vmatprep.subr.mxu0 0.0
    %2744 = vmatpush1.msra.mxu0 0.0
    %2745 = vmatprep.subr.mxu0 0.0
    %2746 = vmatpush1.msra.mxu0 0.0
    %2747 = vmatprep.subr.mxu0 0.0
    %2748 = vmatpush1.msra.mxu0 0.0
    %2749 = vmatprep.mubr.f32.mxu0 0.0
    %2750 = vmatmul.mubr.f32.gmra.mrb[0].mxu0 %v247
    %v2751 = vpop.f32.mrb[0].mxu0
    %v2752 = vadd.f32 %v2683, %v2751
    %v2753 = vpop.f32.mrb[0].mxu0
    %2754 = vmatprep.mubr.f32.mxu0 0.0
    %2755 = vmatmul.mubr.f32.gmra.mrb[0].mxu0 %v250
    %v2756 = vpop.f32.mrb[0].mxu0
    %v2757 = vadd.f32 %v2683, %v2756
    %v2758 = vpop.f32.mrb[0].mxu0
    %2759 = vmatprep.mubr.f32.mxu0 0.0
    %2760 = vmatmul.mubr.f32.gmra.mrb[0].mxu0 %v253
    %v2761 = vpop.f32.mrb[0].mxu0
    %v2762 = vadd.f32 %v2683, %v2761
    %v2763 = vpop.f32.mrb[0].mxu0
    %2764 = vmatprep.mubr.f32.mxu0 0.0
    %2765 = vmatmul.mubr.f32.gmra.mrb[0].mxu0 %v256
    %v2766 = vpop.f32.mrb[0].mxu0
    %v2767 = vadd.f32 %v2683, %v2766
    %v2768 = vpop.f32.mrb[0].mxu0
    %2769 = vmatprep.mubr.f32.mxu0 0.0
    %2770 = vmatmul.mubr.f32.gmra.mrb[0].mxu0 %v259
    %v2771 = vpop.f32.mrb[0].mxu0
    %v2772 = vadd.f32 %v2683, %v2771
    %v2773 = vpop.f32.mrb[0].mxu0
    %2774 = vmatprep.mubr.f32.mxu0 0.0
    %2775 = vmatmul.mubr.f32.gmra.mrb[0].mxu0 %v262
    %v2776 = vpop.f32.mrb[0].mxu0
    %v2777 = vadd.f32 %v2683, %v2776
    %v2778 = vpop.f32.mrb[0].mxu0
    %2779 = vmatprep.mubr.f32.mxu0 0.0
    %2780 = vmatmul.mubr.f32.gmra.mrb[0].mxu0 %v265
    %v2781 = vpop.f32.mrb[0].mxu0
    %v2782 = vadd.f32 %v2683, %v2781
    %v2783 = vpop.f32.mrb[0].mxu0
    %2784 = vmatprep.mubr.f32.mxu0 0.0
    %2785 = vmatmul.mubr.f32.gmra.mrb[0].mxu0 %v268
    %v2786 = vpop.f32.mrb[0].mxu0
    %v2787 = vadd.f32 %v2683, %v2786
    %v2788 = vpop.f32.mrb[0].mxu0
    %2789 = vmatprep.mubr.f32.mxu0 0.0
    %2790 = vmatmul.mubr.f32.gmra.mrb[0].mxu0 %v271
    %v2791 = vpop.f32.mrb[0].mxu0
    %v2792 = vadd.f32 %v2683, %v2791
    %v2793 = vpop.f32.mrb[0].mxu0
    %2794 = vmatprep.mubr.f32.mxu0 0.0
    %2795 = vmatmul.mubr.f32.gmra.mrb[0].mxu0 %v274
    %v2796 = vpop.f32.mrb[0].mxu0
    %v2797 = vadd.f32 %v2683, %v2796
    %v2798 = vpop.f32.mrb[0].mxu0
    %2799 = vmatprep.mubr.f32.mxu0 0.0
    %2800 = vmatmul.mubr.f32.gmra.mrb[0].mxu0 %v277
    %v2801 = vpop.f32.mrb[0].mxu0
    %v2802 = vadd.f32 %v2683, %v2801
    %v2803 = vpop.f32.mrb[0].mxu0
    %2804 = vmatprep.mubr.f32.mxu0 0.0
    %2805 = vmatmul.mubr.f32.gmra.mrb[0].mxu0 %v280
    %v2806 = vpop.f32.mrb[0].mxu0
    %v2807 = vadd.f32 %v2683, %v2806
    %v2808 = vpop.f32.mrb[0].mxu0
    %2809 = vmatprep.mubr.f32.mxu0 0.0
    %2810 = vmatmul.mubr.f32.gmra.mrb[0].mxu0 %v283
    %v2811 = vpop.f32.mrb[0].mxu0
    %v2812 = vadd.f32 %v2683, %v2811
    %v2813 = vpop.f32.mrb[0].mxu0
    %2814 = vmatprep.mubr.f32.mxu0 0.0
    %2815 = vmatmul.mubr.f32.gmra.mrb[0].mxu0 %v286
    %v2816 = vpop.f32.mrb[0].mxu0
    %v2817 = vadd.f32 %v2683, %v2816
    %v2818 = vpop.f32.mrb[0].mxu0
    %2819 = vmatprep.mubr.f32.mxu0 0.0
    %2820 = vmatmul.mubr.f32.gmra.mrb[0].mxu0 %v289
    %v2821 = vpop.f32.mrb[0].mxu0
    %v2822 = vadd.f32 %v2683, %v2821
    %v2823 = vpop.f32.mrb[0].mxu0
    %2824 = vmatprep.mubr.f32.mxu0 0.0
    %2825 = vmatmul.mubr.f32.gmra.mrb[0].mxu0 %v292
    %v2826 = vpop.f32.mrb[0].mxu0
    %v2827 = vadd.f32 %v2683, %v2826
    %v2828 = vpop.f32.mrb[0].mxu0
    %2829 = vmatprep.mubr.f32.mxu0 0.0
    %2830 = vmatmul.mubr.f32.gmra.mrb[0].mxu0 %v295
    %v2831 = vpop.f32.mrb[0].mxu0
    %v2832 = vadd.f32 %v2683, %v2831
    %v2833 = vpop.f32.mrb[0].mxu0
    %2834 = vmatprep.mubr.f32.mxu0 0.0
    %2835 = vmatmul.mubr.f32.gmra.mrb[0].mxu0 %v298
    %v2836 = vpop.f32.mrb[0].mxu0
    %v2837 = vadd.f32 %v2683, %v2836
    %v2838 = vpop.f32.mrb[0].mxu0
    %2839 = vmatprep.mubr.f32.mxu0 0.0
    %2840 = vmatmul.mubr.f32.gmra.mrb[0].mxu0 %v301
    %v2841 = vpop.f32.mrb[0].mxu0
    %v2842 = vadd.f32 %v2683, %v2841
    %v2843 = vpop.f32.mrb[0].mxu0
    %2844 = vmatprep.mubr.f32.mxu0 0.0
    %2845 = vmatmul.mubr.f32.gmra.mrb[0].mxu0 %v304
    %v2846 = vpop.f32.mrb[0].mxu0
    %v2847 = vadd.f32 %v2683, %v2846
    %v2848 = vpop.f32.mrb[0].mxu0
    %2849 = vmatprep.mubr.f32.mxu0 0.0
    %2850 = vmatmul.mubr.f32.gmra.mrb[0].mxu0 %v307
    %v2851 = vpop.f32.mrb[0].mxu0
    %v2852 = vadd.f32 %v2683, %v2851
    %v2853 = vpop.f32.mrb[0].mxu0
    %2854 = vmatprep.mubr.f32.mxu0 0.0
    %2855 = vmatmul.mubr.f32.gmra.mrb[0].mxu0 %v310
    %v2856 = vpop.f32.mrb[0].mxu0
    %v2857 = vadd.f32 %v2683, %v2856
    %v2858 = vpop.f32.mrb[0].mxu0
    %2859 = vmatprep.mubr.f32.mxu0 0.0
    %2860 = vmatmul.mubr.f32.gmra.mrb[0].mxu0 %v313
    %v2861 = vpop.f32.mrb[0].mxu0
    %v2862 = vadd.f32 %v2683, %v2861
    %v2863 = vpop.f32.mrb[0].mxu0
    %2864 = vmatprep.mubr.f32.mxu0 0.0
    %2865 = vmatmul.mubr.f32.gmra.mrb[0].mxu0 %v316
    %v2866 = vpop.f32.mrb[0].mxu0
    %v2867 = vadd.f32 %v2683, %v2866
    %v2868 = vpop.f32.mrb[0].mxu0
    %2869 = vmatprep.mubr.f32.mxu0 0.0
    %2870 = vmatmul.mubr.f32.gmra.mrb[0].mxu0 %v319
    %v2871 = vpop.f32.mrb[0].mxu0
    %v2872 = vadd.f32 %v2683, %v2871
    %v2873 = vpop.f32.mrb[0].mxu0
    %2874 = vmatprep.mubr.f32.mxu0 0.0
    %2875 = vmatmul.mubr.f32.gmra.mrb[0].mxu0 %v322
    %v2876 = vpop.f32.mrb[0].mxu0
    %v2877 = vadd.f32 %v2683, %v2876
    %v2878 = vpop.f32.mrb[0].mxu0
    %2879 = vmatprep.mubr.f32.mxu0 0.0
    %2880 = vmatmul.mubr.f32.gmra.mrb[0].mxu0 %v325
    %v2881 = vpop.f32.mrb[0].mxu0
    %v2882 = vadd.f32 %v2683, %v2881
    %v2883 = vpop.f32.mrb[0].mxu0
    %2884 = vmatprep.mubr.f32.mxu0 0.0
    %2885 = vmatmul.mubr.f32.gmra.mrb[0].mxu0 %v328
    %v2886 = vpop.f32.mrb[0].mxu0
    %v2887 = vadd.f32 %v2683, %v2886
    %v2888 = vpop.f32.mrb[0].mxu0
    %2889 = vmatprep.mubr.f32.mxu0 0.0
    %2890 = vmatmul.mubr.f32.gmra.mrb[0].mxu0 %v331
    %v2891 = vpop.f32.mrb[0].mxu0
    %v2892 = vadd.f32 %v2683, %v2891
    %v2893 = vpop.f32.mrb[0].mxu0
    %2894 = vmatprep.mubr.f32.mxu0 0.0
    %2895 = vmatmul.mubr.f32.gmra.mrb[0].mxu0 %v334
    %v2896 = vpop.f32.mrb[0].mxu0
    %v2897 = vadd.f32 %v2683, %v2896
    %v2898 = vpop.f32.mrb[0].mxu0
    %2899 = vmatprep.mubr.f32.mxu0 0.0
    %2900 = vmatmul.mubr.f32.gmra.mrb[0].mxu0 %v337
    %v2901 = vpop.f32.mrb[0].mxu0
    %v2902 = vadd.f32 %v2683, %v2901
    %v2903 = vpop.f32.mrb[0].mxu0
    %2904 = vmatprep.mubr.f32.mxu0 0.0
    %2905 = vmatmul.mubr.f32.gmra.mrb[0].mxu0 %v340
    %v2906 = vpop.f32.mrb[0].mxu0
    %v2907 = vadd.f32 %v2683, %v2906
    %v2908 = vpop.f32.mrb[0].mxu0
    %2909 = vdwg.mxu0
    %vm2910 = vcmp.gt.f32.partialorder %v2752, 0.0
    %vm2911 = vcmp.gt.f32.partialorder %v2757, 0.0
    %vm2912 = vcmp.gt.f32.partialorder %v2762, 0.0
    %vm2913 = vcmp.gt.f32.partialorder %v2767, 0.0
    %vm2914 = vcmp.gt.f32.partialorder %v2772, 0.0
    %vm2915 = vcmp.gt.f32.partialorder %v2777, 0.0
    %vm2916 = vcmp.gt.f32.partialorder %v2782, 0.0
    %vm2917 = vcmp.gt.f32.partialorder %v2787, 0.0
    %vm2918 = vcmp.gt.f32.partialorder %v2792, 0.0
    %vm2919 = vcmp.gt.f32.partialorder %v2797, 0.0
    %vm2920 = vcmp.gt.f32.partialorder %v2802, 0.0
    %vm2921 = vcmp.gt.f32.partialorder %v2807, 0.0
    %vm2922 = vcmp.gt.f32.partialorder %v2812, 0.0
    %vm2923 = vcmp.gt.f32.partialorder %v2817, 0.0
    %vm2924 = vcmp.gt.f32.partialorder %v2822, 0.0
    %vm2925 = vcmp.gt.f32.partialorder %v2827, 0.0
    %vm2926 = vcmp.gt.f32.partialorder %v2832, 0.0
    %vm2927 = vcmp.gt.f32.partialorder %v2837, 0.0
    %vm2928 = vcmp.gt.f32.partialorder %v2842, 0.0
    %vm2929 = vcmp.gt.f32.partialorder %v2847, 0.0
    %vm2930 = vcmp.gt.f32.partialorder %v2852, 0.0
    %vm2931 = vcmp.gt.f32.partialorder %v2857, 0.0
    %vm2932 = vcmp.gt.f32.partialorder %v2862, 0.0
    %vm2933 = vcmp.gt.f32.partialorder %v2867, 0.0
    %vm2934 = vcmp.gt.f32.partialorder %v2872, 0.0
    %vm2935 = vcmp.gt.f32.partialorder %v2877, 0.0
    %vm2936 = vcmp.gt.f32.partialorder %v2882, 0.0
    %vm2937 = vcmp.gt.f32.partialorder %v2887, 0.0
    %vm2938 = vcmp.gt.f32.partialorder %v2892, 0.0
    %vm2939 = vcmp.gt.f32.partialorder %v2897, 0.0
    %vm2940 = vcmp.gt.f32.partialorder %v2902, 0.0
    %vm2941 = vcmp.gt.f32.partialorder %v2907, 0.0
    %v2942 = vmin.f32 %v2752, 0.0
    %v2943 = vmin.f32 %v2757, 0.0
    %v2944 = vmin.f32 %v2762, 0.0
    %v2945 = vmin.f32 %v2767, 0.0
    %v2946 = vmin.f32 %v2772, 0.0
    %v2947 = vmin.f32 %v2777, 0.0
    %v2948 = vmin.f32 %v2782, 0.0
    %v2949 = vmin.f32 %v2787, 0.0
    %v2950 = vmin.f32 %v2792, 0.0
    %v2951 = vmin.f32 %v2797, 0.0
    %v2952 = vmin.f32 %v2802, 0.0
    %v2953 = vmin.f32 %v2807, 0.0
    %v2954 = vmin.f32 %v2812, 0.0
    %v2955 = vmin.f32 %v2817, 0.0
    %v2956 = vmin.f32 %v2822, 0.0
    %v2957 = vmin.f32 %v2827, 0.0
    %v2958 = vmin.f32 %v2832, 0.0
    %v2959 = vmin.f32 %v2837, 0.0
    %v2960 = vmin.f32 %v2842, 0.0
    %v2961 = vmin.f32 %v2847, 0.0
    %v2962 = vmin.f32 %v2852, 0.0
    %v2963 = vmin.f32 %v2857, 0.0
    %v2964 = vmin.f32 %v2862, 0.0
    %v2965 = vmin.f32 %v2867, 0.0
    %v2966 = vmin.f32 %v2872, 0.0
    %v2967 = vmin.f32 %v2877, 0.0
    %v2968 = vmin.f32 %v2882, 0.0
    %v2969 = vmin.f32 %v2887, 0.0
    %v2970 = vmin.f32 %v2892, 0.0
    %v2971 = vmin.f32 %v2897, 0.0
    %v2972 = vmin.f32 %v2902, 0.0
    %v2973 = vmin.f32 %v2907, 0.0
    %v2974 = vmul.f32 %v2942, 1.442695
    %v2975 = vpow.pop %v2974
    %v2976 = vmul.f32 %v2943, 1.442695
    %v2977 = vpow.pop %v2976
    %v2978 = vmul.f32 %v2944, 1.442695
    %v2979 = vpow.pop %v2978
    %v2980 = vmul.f32 %v2945, 1.442695
    %v2981 = vpow.pop %v2980
    %v2982 = vmul.f32 %v2946, 1.442695
    %v2983 = vpow.pop %v2982
    %v2984 = vmul.f32 %v2947, 1.442695
    %v2985 = vpow.pop %v2984
    %v2986 = vmul.f32 %v2948, 1.442695
    %v2987 = vpow.pop %v2986
    %v2988 = vmul.f32 %v2949, 1.442695
    %v2989 = vpow.pop %v2988
    %v2990 = vmul.f32 %v2950, 1.442695
    %v2991 = vpow.pop %v2990
    %v2992 = vmul.f32 %v2951, 1.442695
    %v2993 = vpow.pop %v2992
    %v2994 = vmul.f32 %v2952, 1.442695
    %v2995 = vpow.pop %v2994
    %v2996 = vmul.f32 %v2953, 1.442695
    %v2997 = vpow.pop %v2996
    %v2998 = vmul.f32 %v2954, 1.442695
    %v2999 = vpow.pop %v2998
    %v3000 = vmul.f32 %v2955, 1.442695
    %v3001 = vpow.pop %v3000
    %v3002 = vmul.f32 %v2956, 1.442695
    %v3003 = vpow.pop %v3002
    %v3004 = vmul.f32 %v2957, 1.442695
    %v3005 = vpow.pop %v3004
    %v3006 = vmul.f32 %v2958, 1.442695
    %v3007 = vpow.pop %v3006
    %v3008 = vmul.f32 %v2959, 1.442695
    %v3009 = vpow.pop %v3008
    %v3010 = vmul.f32 %v2960, 1.442695
    %v3011 = vpow.pop %v3010
    %v3012 = vmul.f32 %v2961, 1.442695
    %v3013 = vpow.pop %v3012
    %v3014 = vmul.f32 %v2962, 1.442695
    %v3015 = vpow.pop %v3014
    %v3016 = vmul.f32 %v2963, 1.442695
    %v3017 = vpow.pop %v3016
    %v3018 = vmul.f32 %v2964, 1.442695
    %v3019 = vpow.pop %v3018
    %v3020 = vmul.f32 %v2965, 1.442695
    %v3021 = vpow.pop %v3020
    %v3022 = vmul.f32 %v2966, 1.442695
    %v3023 = vpow.pop %v3022
    %v3024 = vmul.f32 %v2967, 1.442695
    %v3025 = vpow.pop %v3024
    %v3026 = vmul.f32 %v2968, 1.442695
    %v3027 = vpow.pop %v3026
    %v3028 = vmul.f32 %v2969, 1.442695
    %v3029 = vpow.pop %v3028
    %v3030 = vmul.f32 %v2970, 1.442695
    %v3031 = vpow.pop %v3030
    %v3032 = vmul.f32 %v2971, 1.442695
    %v3033 = vpow.pop %v3032
    %v3034 = vmul.f32 %v2972, 1.442695
    %v3035 = vpow.pop %v3034
    %v3036 = vmul.f32 %v2973, 1.442695
    %v3037 = vpow.pop %v3036
    %v3038 = vsub.f32 %v2975, 1.0
    %v3039 = vsub.f32 %v2977, 1.0
    %v3040 = vsub.f32 %v2979, 1.0
    %v3041 = vsub.f32 %v2981, 1.0
    %v3042 = vsub.f32 %v2983, 1.0
    %v3043 = vsub.f32 %v2985, 1.0
    %v3044 = vsub.f32 %v2987, 1.0
    %v3045 = vsub.f32 %v2989, 1.0
    %v3046 = vsub.f32 %v2991, 1.0
    %v3047 = vsub.f32 %v2993, 1.0
    %v3048 = vsub.f32 %v2995, 1.0
    %v3049 = vsub.f32 %v2997, 1.0
    %v3050 = vsub.f32 %v2999, 1.0
    %v3051 = vsub.f32 %v3001, 1.0
    %v3052 = vsub.f32 %v3003, 1.0
    %v3053 = vsub.f32 %v3005, 1.0
    %v3054 = vsub.f32 %v3007, 1.0
    %v3055 = vsub.f32 %v3009, 1.0
    %v3056 = vsub.f32 %v3011, 1.0
    %v3057 = vsub.f32 %v3013, 1.0
    %v3058 = vsub.f32 %v3015, 1.0
    %v3059 = vsub.f32 %v3017, 1.0
    %v3060 = vsub.f32 %v3019, 1.0
    %v3061 = vsub.f32 %v3021, 1.0
    %v3062 = vsub.f32 %v3023, 1.0
    %v3063 = vsub.f32 %v3025, 1.0
    %v3064 = vsub.f32 %v3027, 1.0
    %v3065 = vsub.f32 %v3029, 1.0
    %v3066 = vsub.f32 %v3031, 1.0
    %v3067 = vsub.f32 %v3033, 1.0
    %v3068 = vsub.f32 %v3035, 1.0
    %v3069 = vsub.f32 %v3037, 1.0
    %v3070 = vmul.f32 %v3038, 1.6732632
    %v3071 = vmul.f32 %v3039, 1.6732632
    %v3072 = vmul.f32 %v3040, 1.6732632
    %v3073 = vmul.f32 %v3041, 1.6732632
    %v3074 = vmul.f32 %v3042, 1.6732632
    %v3075 = vmul.f32 %v3043, 1.6732632
    %v3076 = vmul.f32 %v3044, 1.6732632
    %v3077 = vmul.f32 %v3045, 1.6732632
    %v3078 = vmul.f32 %v3046, 1.6732632
    %v3079 = vmul.f32 %v3047, 1.6732632
    %v3080 = vmul.f32 %v3048, 1.6732632
    %v3081 = vmul.f32 %v3049, 1.6732632
    %v3082 = vmul.f32 %v3050, 1.6732632
    %v3083 = vmul.f32 %v3051, 1.6732632
    %v3084 = vmul.f32 %v3052, 1.6732632
    %v3085 = vmul.f32 %v3053, 1.6732632
    %v3086 = vmul.f32 %v3054, 1.6732632
    %v3087 = vmul.f32 %v3055, 1.6732632
    %v3088 = vmul.f32 %v3056, 1.6732632
    %v3089 = vmul.f32 %v3057, 1.6732632
    %v3090 = vmul.f32 %v3058, 1.6732632
    %v3091 = vmul.f32 %v3059, 1.6732632
    %v3092 = vmul.f32 %v3060, 1.6732632
    %v3093 = vmul.f32 %v3061, 1.6732632
    %v3094 = vmul.f32 %v3062, 1.6732632
    %v3095 = vmul.f32 %v3063, 1.6732632
    %v3096 = vmul.f32 %v3064, 1.6732632
    %v3097 = vmul.f32 %v3065, 1.6732632
    %v3098 = vmul.f32 %v3066, 1.6732632
    %v3099 = vmul.f32 %v3067, 1.6732632
    %v3100 = vmul.f32 %v3068, 1.6732632
    %v3101 = vmul.f32 %v3069, 1.6732632
    %v3102 = vsel %vm2910, %v2752, %v3070
    %v3103 = vsel %vm2911, %v2757, %v3071
    %v3104 = vsel %vm2912, %v2762, %v3072
    %v3105 = vsel %vm2913, %v2767, %v3073
    %v3106 = vsel %vm2914, %v2772, %v3074
    %v3107 = vsel %vm2915, %v2777, %v3075
    %v3108 = vsel %vm2916, %v2782, %v3076
    %v3109 = vsel %vm2917, %v2787, %v3077
    %v3110 = vsel %vm2918, %v2792, %v3078
    %v3111 = vsel %vm2919, %v2797, %v3079
    %v3112 = vsel %vm2920, %v2802, %v3080
    %v3113 = vsel %vm2921, %v2807, %v3081
    %v3114 = vsel %vm2922, %v2812, %v3082
    %v3115 = vsel %vm2923, %v2817, %v3083
    %v3116 = vsel %vm2924, %v2822, %v3084
    %v3117 = vsel %vm2925, %v2827, %v3085
    %v3118 = vsel %vm2926, %v2832, %v3086
    %v3119 = vsel %vm2927, %v2837, %v3087
    %v3120 = vsel %vm2928, %v2842, %v3088
    %v3121 = vsel %vm2929, %v2847, %v3089
    %v3122 = vsel %vm2930, %v2852, %v3090
    %v3123 = vsel %vm2931, %v2857, %v3091
    %v3124 = vsel %vm2932, %v2862, %v3092
    %v3125 = vsel %vm2933, %v2867, %v3093
    %v3126 = vsel %vm2934, %v2872, %v3094
    %v3127 = vsel %vm2935, %v2877, %v3095
    %v3128 = vsel %vm2936, %v2882, %v3096
    %v3129 = vsel %vm2937, %v2887, %v3097
    %v3130 = vsel %vm2938, %v2892, %v3098
    %v3131 = vsel %vm2939, %v2897, %v3099
    %v3132 = vsel %vm2940, %v2902, %v3100
    %v3133 = vsel %vm2941, %v2907, %v3101
    %v3134 = vmul.f32 %v3102, 1.050701
    %v3135 = vmul.f32 %v3103, 1.050701
    %v3136 = vmul.f32 %v3104, 1.050701
    %v3137 = vmul.f32 %v3105, 1.050701
    %v3138 = vmul.f32 %v3106, 1.050701
    %v3139 = vmul.f32 %v3107, 1.050701
    %v3140 = vmul.f32 %v3108, 1.050701
    %v3141 = vmul.f32 %v3109, 1.050701
    %v3142 = vmul.f32 %v3110, 1.050701
    %v3143 = vmul.f32 %v3111, 1.050701
    %v3144 = vmul.f32 %v3112, 1.050701
    %v3145 = vmul.f32 %v3113, 1.050701
    %v3146 = vmul.f32 %v3114, 1.050701
    %v3147 = vmul.f32 %v3115, 1.050701
    %v3148 = vmul.f32 %v3116, 1.050701
    %v3149 = vmul.f32 %v3117, 1.050701
    %v3150 = vmul.f32 %v3118, 1.050701
    %v3151 = vmul.f32 %v3119, 1.050701
    %v3152 = vmul.f32 %v3120, 1.050701
    %v3153 = vmul.f32 %v3121, 1.050701
    %v3154 = vmul.f32 %v3122, 1.050701
    %v3155 = vmul.f32 %v3123, 1.050701
    %v3156 = vmul.f32 %v3124, 1.050701
    %v3157 = vmul.f32 %v3125, 1.050701
    %v3158 = vmul.f32 %v3126, 1.050701
    %v3159 = vmul.f32 %v3127, 1.050701
    %v3160 = vmul.f32 %v3128, 1.050701
    %v3161 = vmul.f32 %v3129, 1.050701
    %v3162 = vmul.f32 %v3130, 1.050701
    %v3163 = vmul.f32 %v3131, 1.050701
    %v3164 = vmul.f32 %v3132, 1.050701
    %v3165 = vmul.f32 %v3133, 1.050701
    %v3166 = vmul.f32 %v3134, %v83
    %v3167 = vmul.f32 %v3135, %v84
    %v3168 = vmul.f32 %v3136, %v85
    %v3169 = vmul.f32 %v3137, %v86
    %v3170 = vmul.f32 %v3138, %v87
    %v3171 = vmul.f32 %v3139, %v88
    %v3172 = vmul.f32 %v3140, %v89
    %v3173 = vmul.f32 %v3141, %v90
    %v3174 = vmul.f32 %v3142, %v91
    %v3175 = vmul.f32 %v3143, %v92
    %v3176 = vmul.f32 %v3144, %v93
    %v3177 = vmul.f32 %v3145, %v94
    %v3178 = vmul.f32 %v3146, %v95
    %v3179 = vmul.f32 %v3147, %v96
    %v3180 = vmul.f32 %v3148, %v97
    %v3181 = vmul.f32 %v3149, %v98
    %v3182 = vmul.f32 %v3150, %v99
    %v3183 = vmul.f32 %v3151, %v100
    %v3184 = vmul.f32 %v3152, %v101
    %v3185 = vmul.f32 %v3153, %v102
    %v3186 = vmul.f32 %v3154, %v103
    %v3187 = vmul.f32 %v3155, %v104
    %v3188 = vmul.f32 %v3156, %v105
    %v3189 = vmul.f32 %v3157, %v106
    %v3190 = vmul.f32 %v3158, %v107
    %v3191 = vmul.f32 %v3159, %v108
    %v3192 = vmul.f32 %v3160, %v109
    %v3193 = vmul.f32 %v3161, %v110
    %v3194 = vmul.f32 %v3162, %v111
    %v3195 = vmul.f32 %v3163, %v112
    %v3196 = vmul.f32 %v3164, %v113
    %v3197 = vmul.f32 %v3165, %v114
    %v3198 = vmul.f32 %v3166, %v2668
    %v3199 = vmul.f32 %v3167, %v2668
    %v3200 = vmul.f32 %v3168, %v2668
    %v3201 = vmul.f32 %v3169, %v2668
    %v3202 = vmul.f32 %v3170, %v2668
    %v3203 = vmul.f32 %v3171, %v2668
    %v3204 = vmul.f32 %v3172, %v2668
    %v3205 = vmul.f32 %v3173, %v2668
    %v3206 = vmul.f32 %v3174, %v2669
    %v3207 = vmul.f32 %v3175, %v2669
    %v3208 = vmul.f32 %v3176, %v2669
    %v3209 = vmul.f32 %v3177, %v2669
    %v3210 = vmul.f32 %v3178, %v2669
    %v3211 = vmul.f32 %v3179, %v2669
    %v3212 = vmul.f32 %v3180, %v2669
    %v3213 = vmul.f32 %v3181, %v2669
    %v3214 = vmul.f32 %v3182, %v2670
    %v3215 = vmul.f32 %v3183, %v2670
    %v3216 = vmul.f32 %v3184, %v2670
    %v3217 = vmul.f32 %v3185, %v2670
    %v3218 = vmul.f32 %v3186, %v2670
    %v3219 = vmul.f32 %v3187, %v2670
    %v3220 = vmul.f32 %v3188, %v2670
    %v3221 = vmul.f32 %v3189, %v2670
    %v3222 = vmul.f32 %v3190, %v2671
    %v3223 = vmul.f32 %v3191, %v2671
    %v3224 = vmul.f32 %v3192, %v2671
    %v3225 = vmul.f32 %v3193, %v2671
    %v3226 = vmul.f32 %v3194, %v2671
    %v3227 = vmul.f32 %v3195, %v2671
    %v3228 = vmul.f32 %v3196, %v2671
    %v3229 = vmul.f32 %v3197, %v2671
    %v3230 = vsel %vm245, %v3198, 0.0
    %v3231 = vrot.slane %v3230, 4
    %v3232 = vadd.f32 %v3230, %v3231
    %v3233 = vrot.slane %v3232, 2
    %v3234 = vadd.f32 %v3232, %v3233
    %v3235 = vrot.slane %v3234, 1
    %v3236 = vadd.f32 %v3234, %v3235
    %v3237 = vsel %vm245, %v3199, 0.0
    %v3238 = vrot.slane %v3237, 4
    %v3239 = vadd.f32 %v3237, %v3238
    %v3240 = vrot.slane %v3239, 2
    %v3241 = vadd.f32 %v3239, %v3240
    %v3242 = vrot.slane %v3241, 1
    %v3243 = vadd.f32 %v3241, %v3242
    %v3244 = vsel %vm245, %v3200, 0.0
    %v3245 = vrot.slane %v3244, 4
    %v3246 = vadd.f32 %v3244, %v3245
    %v3247 = vrot.slane %v3246, 2
    %v3248 = vadd.f32 %v3246, %v3247
    %v3249 = vrot.slane %v3248, 1
    %v3250 = vadd.f32 %v3248, %v3249
    %v3251 = vsel %vm245, %v3201, 0.0
    %v3252 = vrot.slane %v3251, 4
    %v3253 = vadd.f32 %v3251, %v3252
    %v3254 = vrot.slane %v3253, 2
    %v3255 = vadd.f32 %v3253, %v3254
    %v3256 = vrot.slane %v3255, 1
    %v3257 = vadd.f32 %v3255, %v3256
    %v3258 = vsel %vm245, %v3202, 0.0
    %v3259 = vrot.slane %v3258, 4
    %v3260 = vadd.f32 %v3258, %v3259
    %v3261 = vrot.slane %v3260, 2
    %v3262 = vadd.f32 %v3260, %v3261
    %v3263 = vrot.slane %v3262, 1
    %v3264 = vadd.f32 %v3262, %v3263
    %v3265 = vsel %vm245, %v3203, 0.0
    %v3266 = vrot.slane %v3265, 4
    %v3267 = vadd.f32 %v3265, %v3266
    %v3268 = vrot.slane %v3267, 2
    %v3269 = vadd.f32 %v3267, %v3268
    %v3270 = vrot.slane %v3269, 1
    %v3271 = vadd.f32 %v3269, %v3270
    %v3272 = vsel %vm245, %v3204, 0.0
    %v3273 = vrot.slane %v3272, 4
    %v3274 = vadd.f32 %v3272, %v3273
    %v3275 = vrot.slane %v3274, 2
    %v3276 = vadd.f32 %v3274, %v3275
    %v3277 = vrot.slane %v3276, 1
    %v3278 = vadd.f32 %v3276, %v3277
    %v3279 = vsel %vm245, %v3205, 0.0
    %v3280 = vrot.slane %v3279, 4
    %v3281 = vadd.f32 %v3279, %v3280
    %v3282 = vrot.slane %v3281, 2
    %v3283 = vadd.f32 %v3281, %v3282
    %v3284 = vrot.slane %v3283, 1
    %v3285 = vadd.f32 %v3283, %v3284
    %v3286 = vsel %vm245, %v3206, 0.0
    %v3287 = vrot.slane %v3286, 4
    %v3288 = vadd.f32 %v3286, %v3287
    %v3289 = vrot.slane %v3288, 2
    %v3290 = vadd.f32 %v3288, %v3289
    %v3291 = vrot.slane %v3290, 1
    %v3292 = vadd.f32 %v3290, %v3291
    %v3293 = vsel %vm245, %v3207, 0.0
    %v3294 = vrot.slane %v3293, 4
    %v3295 = vadd.f32 %v3293, %v3294
    %v3296 = vrot.slane %v3295, 2
    %v3297 = vadd.f32 %v3295, %v3296
    %v3298 = vrot.slane %v3297, 1
    %v3299 = vadd.f32 %v3297, %v3298
    %v3300 = vsel %vm245, %v3208, 0.0
    %v3301 = vrot.slane %v3300, 4
    %v3302 = vadd.f32 %v3300, %v3301
    %v3303 = vrot.slane %v3302, 2
    %v3304 = vadd.f32 %v3302, %v3303
    %v3305 = vrot.slane %v3304, 1
    %v3306 = vadd.f32 %v3304, %v3305
    %v3307 = vsel %vm245, %v3209, 0.0
    %v3308 = vrot.slane %v3307, 4
    %v3309 = vadd.f32 %v3307, %v3308
    %v3310 = vrot.slane %v3309, 2
    %v3311 = vadd.f32 %v3309, %v3310
    %v3312 = vrot.slane %v3311, 1
    %v3313 = vadd.f32 %v3311, %v3312
    %v3314 = vsel %vm245, %v3210, 0.0
    %v3315 = vrot.slane %v3314, 4
    %v3316 = vadd.f32 %v3314, %v3315
    %v3317 = vrot.slane %v3316, 2
    %v3318 = vadd.f32 %v3316, %v3317
    %v3319 = vrot.slane %v3318, 1
    %v3320 = vadd.f32 %v3318, %v3319
    %v3321 = vsel %vm245, %v3211, 0.0
    %v3322 = vrot.slane %v3321, 4
    %v3323 = vadd.f32 %v3321, %v3322
    %v3324 = vrot.slane %v3323, 2
    %v3325 = vadd.f32 %v3323, %v3324
    %v3326 = vrot.slane %v3325, 1
    %v3327 = vadd.f32 %v3325, %v3326
    %v3328 = vsel %vm245, %v3212, 0.0
    %v3329 = vrot.slane %v3328, 4
    %v3330 = vadd.f32 %v3328, %v3329
    %v3331 = vrot.slane %v3330, 2
    %v3332 = vadd.f32 %v3330, %v3331
    %v3333 = vrot.slane %v3332, 1
    %v3334 = vadd.f32 %v3332, %v3333
    %v3335 = vsel %vm245, %v3213, 0.0
    %v3336 = vrot.slane %v3335, 4
    %v3337 = vadd.f32 %v3335, %v3336
    %v3338 = vrot.slane %v3337, 2
    %v3339 = vadd.f32 %v3337, %v3338
    %v3340 = vrot.slane %v3339, 1
    %v3341 = vadd.f32 %v3339, %v3340
    %v3342 = vsel %vm245, %v3214, 0.0
    %v3343 = vrot.slane %v3342, 4
    %v3344 = vadd.f32 %v3342, %v3343
    %v3345 = vrot.slane %v3344, 2
    %v3346 = vadd.f32 %v3344, %v3345
    %v3347 = vrot.slane %v3346, 1
    %v3348 = vadd.f32 %v3346, %v3347
    %v3349 = vsel %vm245, %v3215, 0.0
    %v3350 = vrot.slane %v3349, 4
    %v3351 = vadd.f32 %v3349, %v3350
    %v3352 = vrot.slane %v3351, 2
    %v3353 = vadd.f32 %v3351, %v3352
    %v3354 = vrot.slane %v3353, 1
    %v3355 = vadd.f32 %v3353, %v3354
    %v3356 = vsel %vm245, %v3216, 0.0
    %v3357 = vrot.slane %v3356, 4
    %v3358 = vadd.f32 %v3356, %v3357
    %v3359 = vrot.slane %v3358, 2
    %v3360 = vadd.f32 %v3358, %v3359
    %v3361 = vrot.slane %v3360, 1
    %v3362 = vadd.f32 %v3360, %v3361
    %v3363 = vsel %vm245, %v3217, 0.0
    %v3364 = vrot.slane %v3363, 4
    %v3365 = vadd.f32 %v3363, %v3364
    %v3366 = vrot.slane %v3365, 2
    %v3367 = vadd.f32 %v3365, %v3366
    %v3368 = vrot.slane %v3367, 1
    %v3369 = vadd.f32 %v3367, %v3368
    %v3370 = vsel %vm245, %v3218, 0.0
    %v3371 = vrot.slane %v3370, 4
    %v3372 = vadd.f32 %v3370, %v3371
    %v3373 = vrot.slane %v3372, 2
    %v3374 = vadd.f32 %v3372, %v3373
    %v3375 = vrot.slane %v3374, 1
    %v3376 = vadd.f32 %v3374, %v3375
    %v3377 = vsel %vm245, %v3219, 0.0
    %v3378 = vrot.slane %v3377, 4
    %v3379 = vadd.f32 %v3377, %v3378
    %v3380 = vrot.slane %v3379, 2
    %v3381 = vadd.f32 %v3379, %v3380
    %v3382 = vrot.slane %v3381, 1
    %v3383 = vadd.f32 %v3381, %v3382
    %v3384 = vsel %vm245, %v3220, 0.0
    %v3385 = vrot.slane %v3384, 4
    %v3386 = vadd.f32 %v3384, %v3385
    %v3387 = vrot.slane %v3386, 2
    %v3388 = vadd.f32 %v3386, %v3387
    %v3389 = vrot.slane %v3388, 1
    %v3390 = vadd.f32 %v3388, %v3389
    %v3391 = vsel %vm245, %v3221, 0.0
    %v3392 = vrot.slane %v3391, 4
    %v3393 = vadd.f32 %v3391, %v3392
    %v3394 = vrot.slane %v3393, 2
    %v3395 = vadd.f32 %v3393, %v3394
    %v3396 = vrot.slane %v3395, 1
    %v3397 = vadd.f32 %v3395, %v3396
    %v3398 = vsel %vm245, %v3222, 0.0
    %v3399 = vrot.slane %v3398, 4
    %v3400 = vadd.f32 %v3398, %v3399
    %v3401 = vrot.slane %v3400, 2
    %v3402 = vadd.f32 %v3400, %v3401
    %v3403 = vrot.slane %v3402, 1
    %v3404 = vadd.f32 %v3402, %v3403
    %v3405 = vsel %vm245, %v3223, 0.0
    %v3406 = vrot.slane %v3405, 4
    %v3407 = vadd.f32 %v3405, %v3406
    %v3408 = vrot.slane %v3407, 2
    %v3409 = vadd.f32 %v3407, %v3408
    %v3410 = vrot.slane %v3409, 1
    %v3411 = vadd.f32 %v3409, %v3410
    %v3412 = vsel %vm245, %v3224, 0.0
    %v3413 = vrot.slane %v3412, 4
    %v3414 = vadd.f32 %v3412, %v3413
    %v3415 = vrot.slane %v3414, 2
    %v3416 = vadd.f32 %v3414, %v3415
    %v3417 = vrot.slane %v3416, 1
    %v3418 = vadd.f32 %v3416, %v3417
    %v3419 = vsel %vm245, %v3225, 0.0
    %v3420 = vrot.slane %v3419, 4
    %v3421 = vadd.f32 %v3419, %v3420
    %v3422 = vrot.slane %v3421, 2
    %v3423 = vadd.f32 %v3421, %v3422
    %v3424 = vrot.slane %v3423, 1
    %v3425 = vadd.f32 %v3423, %v3424
    %v3426 = vsel %vm245, %v3226, 0.0
    %v3427 = vrot.slane %v3426, 4
    %v3428 = vadd.f32 %v3426, %v3427
    %v3429 = vrot.slane %v3428, 2
    %v3430 = vadd.f32 %v3428, %v3429
    %v3431 = vrot.slane %v3430, 1
    %v3432 = vadd.f32 %v3430, %v3431
    %v3433 = vsel %vm245, %v3227, 0.0
    %v3434 = vrot.slane %v3433, 4
    %v3435 = vadd.f32 %v3433, %v3434
    %v3436 = vrot.slane %v3435, 2
    %v3437 = vadd.f32 %v3435, %v3436
    %v3438 = vrot.slane %v3437, 1
    %v3439 = vadd.f32 %v3437, %v3438
    %v3440 = vsel %vm245, %v3228, 0.0
    %v3441 = vrot.slane %v3440, 4
    %v3442 = vadd.f32 %v3440, %v3441
    %v3443 = vrot.slane %v3442, 2
    %v3444 = vadd.f32 %v3442, %v3443
    %v3445 = vrot.slane %v3444, 1
    %v3446 = vadd.f32 %v3444, %v3445
    %v3447 = vsel %vm245, %v3229, 0.0
    %v3448 = vrot.slane %v3447, 4
    %v3449 = vadd.f32 %v3447, %v3448
    %v3450 = vrot.slane %v3449, 2
    %v3451 = vadd.f32 %v3449, %v3450
    %v3452 = vrot.slane %v3451, 1
    %v3453 = vadd.f32 %v3451, %v3452
    %s3454 = scalar_lea.vmem %s10, 32
    %v3455 = vld [vmem:[%s3454] sm:$0xff]
    %v3456 = vld [vmem:[%s3454 + $0x8] sm:$0xff]
    %v3457 = vld [vmem:[%s3454 + $0x10] sm:$0xff]
    %v3458 = vld [vmem:[%s3454 + $0x18] sm:$0xff]
    %s3459 = scalar_lea.vmem %s11, 32
    %v3460 = vld [vmem:[%s3459] sm:$0xff]
    %v3461 = vld [vmem:[%s3459 + $0x8] sm:$0xff]
    %v3462 = vld [vmem:[%s3459 + $0x10] sm:$0xff]
    %v3463 = vld [vmem:[%s3459 + $0x18] sm:$0xff]
    %v3496 = vsel %vm1151, %v3243, %v3236
    %v3497 = vsel %vm1153, %v3250, %v3496
    %v3498 = vsel %vm1155, %v3257, %v3497
    %v3499 = vsel %vm1157, %v3264, %v3498
    %v3500 = vsel %vm1159, %v3271, %v3499
    %v3501 = vsel %vm1161, %v3278, %v3500
    %v3502 = vsel %vm1163, %v3285, %v3501
    %v3503 = vsel %vm1151, %v3299, %v3292
    %v3504 = vsel %vm1153, %v3306, %v3503
    %v3505 = vsel %vm1155, %v3313, %v3504
    %v3506 = vsel %vm1157, %v3320, %v3505
    %v3507 = vsel %vm1159, %v3327, %v3506
    %v3508 = vsel %vm1161, %v3334, %v3507
    %v3509 = vsel %vm1163, %v3341, %v3508
    %v3510 = vsel %vm1151, %v3355, %v3348
    %v3511 = vsel %vm1153, %v3362, %v3510
    %v3512 = vsel %vm1155, %v3369, %v3511
    %v3513 = vsel %vm1157, %v3376, %v3512
    %v3514 = vsel %vm1159, %v3383, %v3513
    %v3515 = vsel %vm1161, %v3390, %v3514
    %v3516 = vsel %vm1163, %v3397, %v3515
    %v3517 = vsel %vm1151, %v3411, %v3404
    %v3518 = vsel %vm1153, %v3418, %v3517
    %v3519 = vsel %vm1155, %v3425, %v3518
    %v3520 = vsel %vm1157, %v3432, %v3519
    %v3521 = vsel %vm1159, %v3439, %v3520
    %v3522 = vsel %vm1161, %v3446, %v3521
    %v3523 = vsel %vm1163, %v3453, %v3522
    %v3524 = vsel %vm245, %v3502, 0
    %v3526 = vsel %vm245, %v3509, 0
    %v3528 = vsel %vm245, %v3516, 0
    %v3530 = vsel %vm245, %v3523, 0
    %3532 = vmatprep.subr.mxu0 0.0
    %3533 = vmatpush1.msra.mxu0 %v3460
    %3534 = vmatprep.subr.mxu0 0.0
    %3535 = vmatpush1.msra.mxu0 %v3461
    %3536 = vmatprep.subr.mxu0 0.0
    %3537 = vmatpush1.msra.mxu0 %v3462
    %3538 = vmatprep.subr.mxu0 0.0
    %3539 = vmatpush1.msra.mxu0 %v3463
    %3540 = vmatprep.subr.mxu0 0.0
    %3541 = vmatpush1.msra.mxu0 0.0
    %3542 = vmatprep.subr.mxu0 0.0
    %3543 = vmatpush1.msra.mxu0 0.0
    %3544 = vmatprep.subr.mxu0 0.0
    %3545 = vmatpush1.msra.mxu0 0.0
    %3546 = vmatprep.subr.mxu0 0.0
    %3547 = vmatpush1.msra.mxu0 0.0
    %3548 = vmatprep.subr.mxu0 0.0
    %3549 = vmatpush1.msra.mxu0 0.0
    %3550 = vmatprep.subr.mxu0 0.0
    %3551 = vmatpush1.msra.mxu0 0.0
    %3552 = vmatprep.subr.mxu0 0.0
    %3553 = vmatpush1.msra.mxu0 0.0
    %3554 = vmatprep.subr.mxu0 0.0
    %3555 = vmatpush1.msra.mxu0 0.0
    %3556 = vmatprep.subr.mxu0 0.0
    %3557 = vmatpush1.msra.mxu0 0.0
    %3558 = vmatprep.subr.mxu0 0.0
    %3559 = vmatpush1.msra.mxu0 0.0
    %3560 = vmatprep.subr.mxu0 0.0
    %3561 = vmatpush1.msra.mxu0 0.0
    %3562 = vmatprep.subr.mxu0 0.0
    %3563 = vmatpush1.msra.mxu0 0.0
    %3564 = vmatprep.subr.mxu0 0.0
    %3565 = vmatpush1.msra.mxu0 0.0
    %3566 = vmatprep.subr.mxu0 0.0
    %3567 = vmatpush1.msra.mxu0 0.0
    %3568 = vmatprep.subr.mxu0 0.0
    %3569 = vmatpush1.msra.mxu0 0.0
    %3570 = vmatprep.subr.mxu0 0.0
    %3571 = vmatpush1.msra.mxu0 0.0
    %3572 = vmatprep.subr.mxu0 0.0
    %3573 = vmatpush1.msra.mxu0 0.0
    %3574 = vmatprep.subr.mxu0 0.0
    %3575 = vmatpush1.msra.mxu0 0.0
    %3576 = vmatprep.subr.mxu0 0.0
    %3577 = vmatpush1.msra.mxu0 0.0
    %3578 = vmatprep.subr.mxu0 0.0
    %3579 = vmatpush1.msra.mxu0 0.0
    %3580 = vmatprep.subr.mxu0 0.0
    %3581 = vmatpush1.msra.mxu0 0.0
    %3582 = vmatprep.subr.mxu0 0.0
    %3583 = vmatpush1.msra.mxu0 0.0
    %3584 = vmatprep.subr.mxu0 0.0
    %3585 = vmatpush1.msra.mxu0 0.0
    %3586 = vmatprep.subr.mxu0 0.0
    %3587 = vmatpush1.msra.mxu0 0.0
    %3588 = vmatprep.subr.mxu0 0.0
    %3589 = vmatpush1.msra.mxu0 0.0
    %3590 = vmatprep.subr.mxu0 0.0
    %3591 = vmatpush1.msra.mxu0 0.0
    %3592 = vmatprep.subr.mxu0 0.0
    %3593 = vmatpush1.msra.mxu0 0.0
    %3594 = vmatprep.subr.mxu0 0.0
    %3595 = vmatpush1.msra.mxu0 0.0
    %3596 = vmatprep.mubr.f32.mxu0 0.0
    %3597 = vmatmul.mubr.f32.gmra.mrb[0].mxu0 %v3524
    %v3598 = vpop.f32.mrb[0].mxu0
    %v3599 = vadd.f32 0.0, %v3598
    %v3600 = vpop.f32.mrb[0].mxu0
    %3601 = vmatprep.mubr.f32.mxu0 0.0
    %3602 = vmatmul.mubr.f32.gmra.mrb[0].mxu0 %v3526
    %v3603 = vpop.f32.mrb[0].mxu0
    %v3604 = vadd.f32 0.0, %v3603
    %v3605 = vpop.f32.mrb[0].mxu0
    %3606 = vmatprep.mubr.f32.mxu0 0.0
    %3607 = vmatmul.mubr.f32.gmra.mrb[0].mxu0 %v3528
    %v3608 = vpop.f32.mrb[0].mxu0
    %v3609 = vadd.f32 0.0, %v3608
    %v3610 = vpop.f32.mrb[0].mxu0
    %3611 = vmatprep.mubr.f32.mxu0 0.0
    %3612 = vmatmul.mubr.f32.gmra.mrb[0].mxu0 %v3530
    %v3613 = vpop.f32.mrb[0].mxu0
    %v3614 = vadd.f32 0.0, %v3613
    %v3615 = vpop.f32.mrb[0].mxu0
    %3616 = vdwg.mxu0
    %v3618 = vsel %vm245, %v2668, 0
    %v3621 = vsel %vm245, %v2669, 0
    %v3624 = vsel %vm245, %v2670, 0
    %v3627 = vsel %vm245, %v2671, 0
    %3629 = vmatprep.subr.mxu0 0.0
    %3630 = vmatpush1.msra.mxu0 %v3455
    %3631 = vmatprep.subr.mxu0 0.0
    %3632 = vmatpush1.msra.mxu0 %v3456
    %3633 = vmatprep.subr.mxu0 0.0
    %3634 = vmatpush1.msra.mxu0 %v3457
    %3635 = vmatprep.subr.mxu0 0.0
    %3636 = vmatpush1.msra.mxu0 %v3458
    %3637 = vmatprep.subr.mxu0 0.0
    %3638 = vmatpush1.msra.mxu0 0.0
    %3639 = vmatprep.subr.mxu0 0.0
    %3640 = vmatpush1.msra.mxu0 0.0
    %3641 = vmatprep.subr.mxu0 0.0
    %3642 = vmatpush1.msra.mxu0 0.0
    %3643 = vmatprep.subr.mxu0 0.0
    %3644 = vmatpush1.msra.mxu0 0.0
    %3645 = vmatprep.subr.mxu0 0.0
    %3646 = vmatpush1.msra.mxu0 0.0
    %3647 = vmatprep.subr.mxu0 0.0
    %3648 = vmatpush1.msra.mxu0 0.0
    %3649 = vmatprep.subr.mxu0 0.0
    %3650 = vmatpush1.msra.mxu0 0.0
    %3651 = vmatprep.subr.mxu0 0.0
    %3652 = vmatpush1.msra.mxu0 0.0
    %3653 = vmatprep.subr.mxu0 0.0
    %3654 = vmatpush1.msra.mxu0 0.0
    %3655 = vmatprep.subr.mxu0 0.0
    %3656 = vmatpush1.msra.mxu0 0.0
    %3657 = vmatprep.subr.mxu0 0.0
    %3658 = vmatpush1.msra.mxu0 0.0
    %3659 = vmatprep.subr.mxu0 0.0
    %3660 = vmatpush1.msra.mxu0 0.0
    %3661 = vmatprep.subr.mxu0 0.0
    %3662 = vmatpush1.msra.mxu0 0.0
    %3663 = vmatprep.subr.mxu0 0.0
    %3664 = vmatpush1.msra.mxu0 0.0
    %3665 = vmatprep.subr.mxu0 0.0
    %3666 = vmatpush1.msra.mxu0 0.0
    %3667 = vmatprep.subr.mxu0 0.0
    %3668 = vmatpush1.msra.mxu0 0.0
    %3669 = vmatprep.subr.mxu0 0.0
    %3670 = vmatpush1.msra.mxu0 0.0
    %3671 = vmatprep.subr.mxu0 0.0
    %3672 = vmatpush1.msra.mxu0 0.0
    %3673 = vmatprep.subr.mxu0 0.0
    %3674 = vmatpush1.msra.mxu0 0.0
    %3675 = vmatprep.subr.mxu0 0.0
    %3676 = vmatpush1.msra.mxu0 0.0
    %3677 = vmatprep.subr.mxu0 0.0
    %3678 = vmatpush1.msra.mxu0 0.0
    %3679 = vmatprep.subr.mxu0 0.0
    %3680 = vmatpush1.msra.mxu0 0.0
    %3681 = vmatprep.subr.mxu0 0.0
    %3682 = vmatpush1.msra.mxu0 0.0
    %3683 = vmatprep.subr.mxu0 0.0
    %3684 = vmatpush1.msra.mxu0 0.0
    %3685 = vmatprep.subr.mxu0 0.0
    %3686 = vmatpush1.msra.mxu0 0.0
    %3687 = vmatprep.subr.mxu0 0.0
    %3688 = vmatpush1.msra.mxu0 0.0
    %3689 = vmatprep.subr.mxu0 0.0
    %3690 = vmatpush1.msra.mxu0 0.0
    %3691 = vmatprep.subr.mxu0 0.0
    %3692 = vmatpush1.msra.mxu0 0.0
    %3693 = vmatprep.mubr.f32.mxu0 0.0
    %3694 = vmatmul.mubr.f32.gmra.mrb[0].mxu0 %v3618
    %v3695 = vpop.f32.mrb[0].mxu0
    %v3696 = vadd.f32 %v3599, %v3695
    %v3697 = vpop.f32.mrb[0].mxu0
    %3698 = vmatprep.mubr.f32.mxu0 0.0
    %3699 = vmatmul.mubr.f32.gmra.mrb[0].mxu0 %v3621
    %v3700 = vpop.f32.mrb[0].mxu0
    %v3701 = vadd.f32 %v3604, %v3700
    %v3702 = vpop.f32.mrb[0].mxu0
    %3703 = vmatprep.mubr.f32.mxu0 0.0
    %3704 = vmatmul.mubr.f32.gmra.mrb[0].mxu0 %v3624
    %v3705 = vpop.f32.mrb[0].mxu0
    %v3706 = vadd.f32 %v3609, %v3705
    %v3707 = vpop.f32.mrb[0].mxu0
    %3708 = vmatprep.mubr.f32.mxu0 0.0
    %3709 = vmatmul.mubr.f32.gmra.mrb[0].mxu0 %v3627
    %v3710 = vpop.f32.mrb[0].mxu0
    %v3711 = vadd.f32 %v3614, %v3710
    %v3712 = vpop.f32.mrb[0].mxu0
    %3713 = vdwg.mxu0
    %s3714 = scalar_lea.vmem %s12, 1
    %v3715 = vld [vmem:[%s3714] sm:$0x1]
    %v3717 = vlaneseq
    %v3718 = vshrl.u32 %v3717, 7
    %v3719 = vsub.s32 0, %v3718
    %v3720 = vrot.slane %v3715, %v3719
    %v3722 = vadd.f32 %v3696, %v3720
    %v3723 = vadd.f32 %v3701, %v3720
    %v3724 = vadd.f32 %v3706, %v3720
    %v3725 = vadd.f32 %v3711, %v3720
    %vm3726 = vcmp.gt.f32.partialorder %v3722, 0.0
    %vm3727 = vcmp.gt.f32.partialorder %v3723, 0.0
    %vm3728 = vcmp.gt.f32.partialorder %v3724, 0.0
    %vm3729 = vcmp.gt.f32.partialorder %v3725, 0.0
    %v3730 = vmin.f32 %v3722, 0.0
    %v3731 = vmin.f32 %v3723, 0.0
    %v3732 = vmin.f32 %v3724, 0.0
    %v3733 = vmin.f32 %v3725, 0.0
    %v3734 = vmul.f32 %v3730, 1.442695
    %v3735 = vpow.pop %v3734
    %v3736 = vmul.f32 %v3731, 1.442695
    %v3737 = vpow.pop %v3736
    %v3738 = vmul.f32 %v3732, 1.442695
    %v3739 = vpow.pop %v3738
    %v3740 = vmul.f32 %v3733, 1.442695
    %v3741 = vpow.pop %v3740
    %v3742 = vsub.f32 %v3735, 1.0
    %v3743 = vsub.f32 %v3737, 1.0
    %v3744 = vsub.f32 %v3739, 1.0
    %v3745 = vsub.f32 %v3741, 1.0
    %v3746 = vmul.f32 %v3742, 1.6732632
    %v3747 = vmul.f32 %v3743, 1.6732632
    %v3748 = vmul.f32 %v3744, 1.6732632
    %v3749 = vmul.f32 %v3745, 1.6732632
    %v3750 = vsel %vm3726, %v3722, %v3746
    %v3751 = vsel %vm3727, %v3723, %v3747
    %v3752 = vsel %vm3728, %v3724, %v3748
    %v3753 = vsel %vm3729, %v3725, %v3749
    %v3754 = vmul.f32 %v3750, 1.050701
    %v3755 = vmul.f32 %v3751, 1.050701
    %v3756 = vmul.f32 %v3752, 1.050701
    %v3757 = vmul.f32 %v3753, 1.050701
    %v3758 = vmul.f32 %v3754, %v115
    %v3759 = vmul.f32 %v3755, %v116
    %v3760 = vmul.f32 %v3756, %v117
    %v3761 = vmul.f32 %v3757, %v118
    %v3762 = vadd.f32 %v3758, %v2668
    %v3763 = vadd.f32 %v3759, %v2669
    %v3764 = vadd.f32 %v3760, %v2670
    %v3765 = vadd.f32 %v3761, %v2671
    %s3766 = scalar_lea.vmem %s13, 32
    %v3767 = vld [vmem:[%s3766] sm:$0xff]
    %v3768 = vld [vmem:[%s3766 + $0x8] sm:$0xff]
    %v3769 = vld [vmem:[%s3766 + $0x10] sm:$0xff]
    %v3770 = vld [vmem:[%s3766 + $0x18] sm:$0xff]
    %v3772 = vsel %vm245, %v3762, 0
    %v3775 = vsel %vm245, %v3763, 0
    %v3778 = vsel %vm245, %v3764, 0
    %v3781 = vsel %vm245, %v3765, 0
    %3783 = vmatprep.subr.mxu0 0.0
    %3784 = vmatpush1.msra.mxu0 %v3767
    %3785 = vmatprep.subr.mxu0 0.0
    %3786 = vmatpush1.msra.mxu0 %v3768
    %3787 = vmatprep.subr.mxu0 0.0
    %3788 = vmatpush1.msra.mxu0 %v3769
    %3789 = vmatprep.subr.mxu0 0.0
    %3790 = vmatpush1.msra.mxu0 %v3770
    %3791 = vmatprep.subr.mxu0 0.0
    %3792 = vmatpush1.msra.mxu0 0.0
    %3793 = vmatprep.subr.mxu0 0.0
    %3794 = vmatpush1.msra.mxu0 0.0
    %3795 = vmatprep.subr.mxu0 0.0
    %3796 = vmatpush1.msra.mxu0 0.0
    %3797 = vmatprep.subr.mxu0 0.0
    %3798 = vmatpush1.msra.mxu0 0.0
    %3799 = vmatprep.subr.mxu0 0.0
    %3800 = vmatpush1.msra.mxu0 0.0
    %3801 = vmatprep.subr.mxu0 0.0
    %3802 = vmatpush1.msra.mxu0 0.0
    %3803 = vmatprep.subr.mxu0 0.0
    %3804 = vmatpush1.msra.mxu0 0.0
    %3805 = vmatprep.subr.mxu0 0.0
    %3806 = vmatpush1.msra.mxu0 0.0
    %3807 = vmatprep.subr.mxu0 0.0
    %3808 = vmatpush1.msra.mxu0 0.0
    %3809 = vmatprep.subr.mxu0 0.0
    %3810 = vmatpush1.msra.mxu0 0.0
    %3811 = vmatprep.subr.mxu0 0.0
    %3812 = vmatpush1.msra.mxu0 0.0
    %3813 = vmatprep.subr.mxu0 0.0
    %3814 = vmatpush1.msra.mxu0 0.0
    %3815 = vmatprep.subr.mxu0 0.0
    %3816 = vmatpush1.msra.mxu0 0.0
    %3817 = vmatprep.subr.mxu0 0.0
    %3818 = vmatpush1.msra.mxu0 0.0
    %3819 = vmatprep.subr.mxu0 0.0
    %3820 = vmatpush1.msra.mxu0 0.0
    %3821 = vmatprep.subr.mxu0 0.0
    %3822 = vmatpush1.msra.mxu0 0.0
    %3823 = vmatprep.subr.mxu0 0.0
    %3824 = vmatpush1.msra.mxu0 0.0
    %3825 = vmatprep.subr.mxu0 0.0
    %3826 = vmatpush1.msra.mxu0 0.0
    %3827 = vmatprep.subr.mxu0 0.0
    %3828 = vmatpush1.msra.mxu0 0.0
    %3829 = vmatprep.subr.mxu0 0.0
    %3830 = vmatpush1.msra.mxu0 0.0
    %3831 = vmatprep.subr.mxu0 0.0
    %3832 = vmatpush1.msra.mxu0 0.0
    %3833 = vmatprep.subr.mxu0 0.0
    %3834 = vmatpush1.msra.mxu0 0.0
    %3835 = vmatprep.subr.mxu0 0.0
    %3836 = vmatpush1.msra.mxu0 0.0
    %3837 = vmatprep.subr.mxu0 0.0
    %3838 = vmatpush1.msra.mxu0 0.0
    %3839 = vmatprep.subr.mxu0 0.0
    %3840 = vmatpush1.msra.mxu0 0.0
    %3841 = vmatprep.subr.mxu0 0.0
    %3842 = vmatpush1.msra.mxu0 0.0
    %3843 = vmatprep.subr.mxu0 0.0
    %3844 = vmatpush1.msra.mxu0 0.0
    %3845 = vmatprep.subr.mxu0 0.0
    %3846 = vmatpush1.msra.mxu0 0.0
    %3847 = vmatprep.mubr.f32.mxu0 0.0
    %3848 = vmatmul.mubr.f32.gmra.mrb[0].mxu0 %v3772
    %v3849 = vpop.f32.mrb[0].mxu0
    %v3850 = vadd.f32 0.0, %v3849
    %v3851 = vpop.f32.mrb[0].mxu0
    %3852 = vmatprep.mubr.f32.mxu0 0.0
    %3853 = vmatmul.mubr.f32.gmra.mrb[0].mxu0 %v3775
    %v3854 = vpop.f32.mrb[0].mxu0
    %v3855 = vadd.f32 0.0, %v3854
    %v3856 = vpop.f32.mrb[0].mxu0
    %3857 = vmatprep.mubr.f32.mxu0 0.0
    %3858 = vmatmul.mubr.f32.gmra.mrb[0].mxu0 %v3778
    %v3859 = vpop.f32.mrb[0].mxu0
    %v3860 = vadd.f32 0.0, %v3859
    %v3861 = vpop.f32.mrb[0].mxu0
    %3862 = vmatprep.mubr.f32.mxu0 0.0
    %3863 = vmatmul.mubr.f32.gmra.mrb[0].mxu0 %v3781
    %v3864 = vpop.f32.mrb[0].mxu0
    %v3865 = vadd.f32 0.0, %v3864
    %v3866 = vpop.f32.mrb[0].mxu0
    %3867 = vdwg.mxu0
    %v3868 = vmul.f32 %v3850, %v1531
    %v3869 = vmul.f32 %v3855, %v1531
    %v3870 = vmul.f32 %v3860, %v1531
    %v3871 = vmul.f32 %v3865, %v1531
    %3876 = vrot.lane.b32.xlu0 %v3850, 96
    %v3877 = vpop.permute.xlu0 %3876
    %3878 = vrot.lane.b32.xlu0 %v3855, 96
    %v3879 = vpop.permute.xlu0 %3878
    %3880 = vrot.lane.b32.xlu0 %v3860, 96
    %v3881 = vpop.permute.xlu0 %3880
    %3882 = vrot.lane.b32.xlu0 %v3865, 96
    %v3883 = vpop.permute.xlu0 %3882
    %v3885 = vsel %vm245, %v3868, 0
    %v3888 = vsel %vm245, %v3869, 0
    %v3891 = vsel %vm245, %v3870, 0
    %v3894 = vsel %vm245, %v3871, 0
    %v3896 = vsel %vm245, %v3877, 0
    %v3898 = vsel %vm245, %v3879, 0
    %v3900 = vsel %vm245, %v3881, 0
    %v3902 = vsel %vm245, %v3883, 0
    %3904 = vmatprep.subr.mxu0 0.0
    %3905 = vmatpush1.xpose.msra.mxu0 %v3896
    %3906 = vmatprep.subr.mxu0 0.0
    %3907 = vmatpush1.xpose.msra.mxu0 %v3898
    %3908 = vmatprep.subr.mxu0 0.0
    %3909 = vmatpush1.xpose.msra.mxu0 %v3900
    %3910 = vmatprep.subr.mxu0 0.0
    %3911 = vmatpush1.xpose.msra.mxu0 %v3902
    %3912 = vmatprep.subr.mxu0 0.0
    %3913 = vmatpush1.xpose.msra.mxu0 0.0
    %3914 = vmatprep.subr.mxu0 0.0
    %3915 = vmatpush1.xpose.msra.mxu0 0.0
    %3916 = vmatprep.subr.mxu0 0.0
    %3917 = vmatpush1.xpose.msra.mxu0 0.0
    %3918 = vmatprep.subr.mxu0 0.0
    %3919 = vmatpush1.xpose.msra.mxu0 0.0
    %3920 = vmatprep.subr.mxu0 0.0
    %3921 = vmatpush1.xpose.msra.mxu0 0.0
    %3922 = vmatprep.subr.mxu0 0.0
    %3923 = vmatpush1.xpose.msra.mxu0 0.0
    %3924 = vmatprep.subr.mxu0 0.0
    %3925 = vmatpush1.xpose.msra.mxu0 0.0
    %3926 = vmatprep.subr.mxu0 0.0
    %3927 = vmatpush1.xpose.msra.mxu0 0.0
    %3928 = vmatprep.subr.mxu0 0.0
    %3929 = vmatpush1.xpose.msra.mxu0 0.0
    %3930 = vmatprep.subr.mxu0 0.0
    %3931 = vmatpush1.xpose.msra.mxu0 0.0
    %3932 = vmatprep.subr.mxu0 0.0
    %3933 = vmatpush1.xpose.msra.mxu0 0.0
    %3934 = vmatprep.subr.mxu0 0.0
    %3935 = vmatpush1.xpose.msra.mxu0 0.0
    %3936 = vmatprep.subr.mxu0 0.0
    %3937 = vmatpush1.xpose.msra.mxu0 0.0
    %3938 = vmatprep.subr.mxu0 0.0
    %3939 = vmatpush1.xpose.msra.mxu0 0.0
    %3940 = vmatprep.subr.mxu0 0.0
    %3941 = vmatpush1.xpose.msra.mxu0 0.0
    %3942 = vmatprep.subr.mxu0 0.0
    %3943 = vmatpush1.xpose.msra.mxu0 0.0
    %3944 = vmatprep.subr.mxu0 0.0
    %3945 = vmatpush1.xpose.msra.mxu0 0.0
    %3946 = vmatprep.subr.mxu0 0.0
    %3947 = vmatpush1.xpose.msra.mxu0 0.0
    %3948 = vmatprep.subr.mxu0 0.0
    %3949 = vmatpush1.xpose.msra.mxu0 0.0
    %3950 = vmatprep.subr.mxu0 0.0
    %3951 = vmatpush1.xpose.msra.mxu0 0.0
    %3952 = vmatprep.subr.mxu0 0.0
    %3953 = vmatpush1.xpose.msra.mxu0 0.0
    %3954 = vmatprep.subr.mxu0 0.0
    %3955 = vmatpush1.xpose.msra.mxu0 0.0
    %3956 = vmatprep.subr.mxu0 0.0
    %3957 = vmatpush1.xpose.msra.mxu0 0.0
    %3958 = vmatprep.subr.mxu0 0.0
    %3959 = vmatpush1.xpose.msra.mxu0 0.0
    %3960 = vmatprep.subr.mxu0 0.0
    %3961 = vmatpush1.xpose.msra.mxu0 0.0
    %3962 = vmatprep.subr.mxu0 0.0
    %3963 = vmatpush1.xpose.msra.mxu0 0.0
    %3964 = vmatprep.subr.mxu0 0.0
    %3965 = vmatpush1.xpose.msra.mxu0 0.0
    %3966 = vmatprep.subr.mxu0 0.0
    %3967 = vmatpush1.xpose.msra.mxu0 0.0
    %3968 = vmatprep.mubr.f32.mxu0 0.0
    %3969 = vmatmul.mubr.f32.gmra.mrb[0].mxu0 %v3885
    %v3970 = vpop.f32.mrb[0].mxu0
    %v3971 = vadd.f32 0.0, %v3970
    %v3972 = vpop.f32.mrb[0].mxu0
    %3973 = vmatprep.mubr.f32.mxu0 0.0
    %3974 = vmatmul.mubr.f32.gmra.mrb[0].mxu0 %v3888
    %v3975 = vpop.f32.mrb[0].mxu0
    %v3976 = vadd.f32 0.0, %v3975
    %v3977 = vpop.f32.mrb[0].mxu0
    %3978 = vmatprep.mubr.f32.mxu0 0.0
    %3979 = vmatmul.mubr.f32.gmra.mrb[0].mxu0 %v3891
    %v3980 = vpop.f32.mrb[0].mxu0
    %v3981 = vadd.f32 0.0, %v3980
    %v3982 = vpop.f32.mrb[0].mxu0
    %3983 = vmatprep.mubr.f32.mxu0 0.0
    %3984 = vmatmul.mubr.f32.gmra.mrb[0].mxu0 %v3894
    %v3985 = vpop.f32.mrb[0].mxu0
    %v3986 = vadd.f32 0.0, %v3985
    %v3987 = vpop.f32.mrb[0].mxu0
    %3988 = vdwg.mxu0
    %v3989 = vmul.f32 %v3971, 0.25
    %v3990 = vmul.f32 %v3976, 0.25
    %v3991 = vmul.f32 %v3981, 0.25
    %v3992 = vmul.f32 %v3986, 0.25
    %v3993 = vadd.f32 %v3989, %v119
    %v3994 = vadd.f32 %v3990, %v120
    %v3995 = vadd.f32 %v3991, %v121
    %v3996 = vadd.f32 %v3992, %v122
    %v3997 = vsel %vm245, %v3993, -inf
    %3998 = vmax.xlane.f32.xlu0 %v3997
    %v3999 = vpop.xlane.xlu0 %3998
    %v4000 = vsel %vm245, %v3994, -inf
    %4001 = vmax.xlane.f32.xlu0 %v4000
    %v4002 = vpop.xlane.xlu0 %4001
    %v4003 = vsel %vm245, %v3995, -inf
    %4004 = vmax.xlane.f32.xlu0 %v4003
    %v4005 = vpop.xlane.xlu0 %4004
    %v4006 = vsel %vm245, %v3996, -inf
    %4007 = vmax.xlane.f32.xlu0 %v4006
    %v4008 = vpop.xlane.xlu0 %4007
    %v4009 = vsub.f32 %v3993, %v3999
    %v4010 = vsub.f32 %v3994, %v4002
    %v4011 = vsub.f32 %v3995, %v4005
    %v4012 = vsub.f32 %v3996, %v4008
    %v4013 = vmul.f32 %v4009, 1.442695
    %v4014 = vpow.pop %v4013
    %v4015 = vmul.f32 %v4010, 1.442695
    %v4016 = vpow.pop %v4015
    %v4017 = vmul.f32 %v4011, 1.442695
    %v4018 = vpow.pop %v4017
    %v4019 = vmul.f32 %v4012, 1.442695
    %v4020 = vpow.pop %v4019
    %v4021 = vsel %vm245, %v4014, 0.0
    %4022 = vadd.xlane.f32.xlu0 %v4021
    %v4023 = vpop.xlane.xlu0 %4022
    %v4024 = vsel %vm245, %v4016, 0.0
    %4025 = vadd.xlane.f32.xlu0 %v4024
    %v4026 = vpop.xlane.xlu0 %4025
    %v4027 = vsel %vm245, %v4018, 0.0
    %4028 = vadd.xlane.f32.xlu0 %v4027
    %v4029 = vpop.xlane.xlu0 %4028
    %v4030 = vsel %vm245, %v4020, 0.0
    %4031 = vadd.xlane.f32.xlu0 %v4030
    %v4032 = vpop.xlane.xlu0 %4031
    %v4033 = vrcp.pop %v4023
    %v4034 = vmul.f32 %v4014, %v4033
    %v4035 = vrcp.pop %v4026
    %v4036 = vmul.f32 %v4016, %v4035
    %v4037 = vrcp.pop %v4029
    %v4038 = vmul.f32 %v4018, %v4037
    %v4039 = vrcp.pop %v4032
    %v4040 = vmul.f32 %v4020, %v4039
    %v4041 = vmul.f32 %v3850, %v1707
    %v4042 = vmul.f32 %v3855, %v1707
    %v4043 = vmul.f32 %v3860, %v1707
    %v4044 = vmul.f32 %v3865, %v1707
    %v4045 = vmul.f32 %v3850, %v1716
    %v4046 = vmul.f32 %v3855, %v1716
    %v4047 = vmul.f32 %v3860, %v1716
    %v4048 = vmul.f32 %v3865, %v1716
    %v4050 = vsel %vm245, %v4045, 0
    %v4053 = vsel %vm245, %v4046, 0
    %v4056 = vsel %vm245, %v4047, 0
    %v4059 = vsel %vm245, %v4048, 0
    %4061 = vmatprep.subr.mxu0 0.0
    %4062 = vmatpush1.xpose.msra.mxu0 %v3896
    %4063 = vmatprep.subr.mxu0 0.0
    %4064 = vmatpush1.xpose.msra.mxu0 %v3898
    %4065 = vmatprep.subr.mxu0 0.0
    %4066 = vmatpush1.xpose.msra.mxu0 %v3900
    %4067 = vmatprep.subr.mxu0 0.0
    %4068 = vmatpush1.xpose.msra.mxu0 %v3902
    %4069 = vmatprep.subr.mxu0 0.0
    %4070 = vmatpush1.xpose.msra.mxu0 0.0
    %4071 = vmatprep.subr.mxu0 0.0
    %4072 = vmatpush1.xpose.msra.mxu0 0.0
    %4073 = vmatprep.subr.mxu0 0.0
    %4074 = vmatpush1.xpose.msra.mxu0 0.0
    %4075 = vmatprep.subr.mxu0 0.0
    %4076 = vmatpush1.xpose.msra.mxu0 0.0
    %4077 = vmatprep.subr.mxu0 0.0
    %4078 = vmatpush1.xpose.msra.mxu0 0.0
    %4079 = vmatprep.subr.mxu0 0.0
    %4080 = vmatpush1.xpose.msra.mxu0 0.0
    %4081 = vmatprep.subr.mxu0 0.0
    %4082 = vmatpush1.xpose.msra.mxu0 0.0
    %4083 = vmatprep.subr.mxu0 0.0
    %4084 = vmatpush1.xpose.msra.mxu0 0.0
    %4085 = vmatprep.subr.mxu0 0.0
    %4086 = vmatpush1.xpose.msra.mxu0 0.0
    %4087 = vmatprep.subr.mxu0 0.0
    %4088 = vmatpush1.xpose.msra.mxu0 0.0
    %4089 = vmatprep.subr.mxu0 0.0
    %4090 = vmatpush1.xpose.msra.mxu0 0.0
    %4091 = vmatprep.subr.mxu0 0.0
    %4092 = vmatpush1.xpose.msra.mxu0 0.0
    %4093 = vmatprep.subr.mxu0 0.0
    %4094 = vmatpush1.xpose.msra.mxu0 0.0
    %4095 = vmatprep.subr.mxu0 0.0
    %4096 = vmatpush1.xpose.msra.mxu0 0.0
    %4097 = vmatprep.subr.mxu0 0.0
    %4098 = vmatpush1.xpose.msra.mxu0 0.0
    %4099 = vmatprep.subr.mxu0 0.0
    %4100 = vmatpush1.xpose.msra.mxu0 0.0
    %4101 = vmatprep.subr.mxu0 0.0
    %4102 = vmatpush1.xpose.msra.mxu0 0.0
    %4103 = vmatprep.subr.mxu0 0.0
    %4104 = vmatpush1.xpose.msra.mxu0 0.0
    %4105 = vmatprep.subr.mxu0 0.0
    %4106 = vmatpush1.xpose.msra.mxu0 0.0
    %4107 = vmatprep.subr.mxu0 0.0
    %4108 = vmatpush1.xpose.msra.mxu0 0.0
    %4109 = vmatprep.subr.mxu0 0.0
    %4110 = vmatpush1.xpose.msra.mxu0 0.0
    %4111 = vmatprep.subr.mxu0 0.0
    %4112 = vmatpush1.xpose.msra.mxu0 0.0
    %4113 = vmatprep.subr.mxu0 0.0
    %4114 = vmatpush1.xpose.msra.mxu0 0.0
    %4115 = vmatprep.subr.mxu0 0.0
    %4116 = vmatpush1.xpose.msra.mxu0 0.0
    %4117 = vmatprep.subr.mxu0 0.0
    %4118 = vmatpush1.xpose.msra.mxu0 0.0
    %4119 = vmatprep.subr.mxu0 0.0
    %4120 = vmatpush1.xpose.msra.mxu0 0.0
    %4121 = vmatprep.subr.mxu0 0.0
    %4122 = vmatpush1.xpose.msra.mxu0 0.0
    %4123 = vmatprep.subr.mxu0 0.0
    %4124 = vmatpush1.xpose.msra.mxu0 0.0
    %4125 = vmatprep.mubr.f32.mxu0 0.0
    %4126 = vmatmul.mubr.f32.gmra.mrb[0].mxu0 %v4050
    %v4127 = vpop.f32.mrb[0].mxu0
    %v4128 = vadd.f32 0.0, %v4127
    %v4129 = vpop.f32.mrb[0].mxu0
    %4130 = vmatprep.mubr.f32.mxu0 0.0
    %4131 = vmatmul.mubr.f32.gmra.mrb[0].mxu0 %v4053
    %v4132 = vpop.f32.mrb[0].mxu0
    %v4133 = vadd.f32 0.0, %v4132
    %v4134 = vpop.f32.mrb[0].mxu0
    %4135 = vmatprep.mubr.f32.mxu0 0.0
    %4136 = vmatmul.mubr.f32.gmra.mrb[0].mxu0 %v4056
    %v4137 = vpop.f32.mrb[0].mxu0
    %v4138 = vadd.f32 0.0, %v4137
    %v4139 = vpop.f32.mrb[0].mxu0
    %4140 = vmatprep.mubr.f32.mxu0 0.0
    %4141 = vmatmul.mubr.f32.gmra.mrb[0].mxu0 %v4059
    %v4142 = vpop.f32.mrb[0].mxu0
    %v4143 = vadd.f32 0.0, %v4142
    %v4144 = vpop.f32.mrb[0].mxu0
    %4145 = vdwg.mxu0
    %v4146 = vmul.f32 %v4128, 0.25
    %v4147 = vmul.f32 %v4133, 0.25
    %v4148 = vmul.f32 %v4138, 0.25
    %v4149 = vmul.f32 %v4143, 0.25
    %v4150 = vadd.f32 %v4146, %v119
    %v4151 = vadd.f32 %v4147, %v120
    %v4152 = vadd.f32 %v4148, %v121
    %v4153 = vadd.f32 %v4149, %v122
    %v4154 = vsel %vm245, %v4150, -inf
    %4155 = vmax.xlane.f32.xlu0 %v4154
    %v4156 = vpop.xlane.xlu0 %4155
    %v4157 = vsel %vm245, %v4151, -inf
    %4158 = vmax.xlane.f32.xlu0 %v4157
    %v4159 = vpop.xlane.xlu0 %4158
    %v4160 = vsel %vm245, %v4152, -inf
    %4161 = vmax.xlane.f32.xlu0 %v4160
    %v4162 = vpop.xlane.xlu0 %4161
    %v4163 = vsel %vm245, %v4153, -inf
    %4164 = vmax.xlane.f32.xlu0 %v4163
    %v4165 = vpop.xlane.xlu0 %4164
    %v4166 = vsub.f32 %v4150, %v4156
    %v4167 = vsub.f32 %v4151, %v4159
    %v4168 = vsub.f32 %v4152, %v4162
    %v4169 = vsub.f32 %v4153, %v4165
    %v4170 = vmul.f32 %v4166, 1.442695
    %v4171 = vpow.pop %v4170
    %v4172 = vmul.f32 %v4167, 1.442695
    %v4173 = vpow.pop %v4172
    %v4174 = vmul.f32 %v4168, 1.442695
    %v4175 = vpow.pop %v4174
    %v4176 = vmul.f32 %v4169, 1.442695
    %v4177 = vpow.pop %v4176
    %v4178 = vsel %vm245, %v4171, 0.0
    %4179 = vadd.xlane.f32.xlu0 %v4178
    %v4180 = vpop.xlane.xlu0 %4179
    %v4181 = vsel %vm245, %v4173, 0.0
    %4182 = vadd.xlane.f32.xlu0 %v4181
    %v4183 = vpop.xlane.xlu0 %4182
    %v4184 = vsel %vm245, %v4175, 0.0
    %4185 = vadd.xlane.f32.xlu0 %v4184
    %v4186 = vpop.xlane.xlu0 %4185
    %v4187 = vsel %vm245, %v4177, 0.0
    %4188 = vadd.xlane.f32.xlu0 %v4187
    %v4189 = vpop.xlane.xlu0 %4188
    %v4190 = vrcp.pop %v4180
    %v4191 = vmul.f32 %v4171, %v4190
    %v4192 = vrcp.pop %v4183
    %v4193 = vmul.f32 %v4173, %v4192
    %v4194 = vrcp.pop %v4186
    %v4195 = vmul.f32 %v4175, %v4194
    %v4196 = vrcp.pop %v4189
    %v4197 = vmul.f32 %v4177, %v4196
    %v4198 = vmul.f32 %v3850, %v1872
    %v4199 = vmul.f32 %v3855, %v1872
    %v4200 = vmul.f32 %v3860, %v1872
    %v4201 = vmul.f32 %v3865, %v1872
    %4206 = vrot.lane.b32.xlu0 %v4198, 64
    %v4207 = vpop.permute.xlu0 %4206
    %4208 = vrot.lane.b32.xlu0 %v4199, 64
    %v4209 = vpop.permute.xlu0 %4208
    %4210 = vrot.lane.b32.xlu0 %v4200, 64
    %v4211 = vpop.permute.xlu0 %4210
    %4212 = vrot.lane.b32.xlu0 %v4201, 64
    %v4213 = vpop.permute.xlu0 %4212
    %v4219 = vsel %vm245, %v4191, 0
    %v4222 = vsel %vm245, %v4193, 0
    %v4225 = vsel %vm245, %v4195, 0
    %v4228 = vsel %vm245, %v4197, 0
    %4230 = vmatprep.subr.mxu0 0.0
    %4231 = vmatpush1.msra.mxu0 %v4207
    %4232 = vmatprep.subr.mxu0 0.0
    %4233 = vmatpush1.msra.mxu0 %v4209
    %4234 = vmatprep.subr.mxu0 0.0
    %4235 = vmatpush1.msra.mxu0 %v4211
    %4236 = vmatprep.subr.mxu0 0.0
    %4237 = vmatpush1.msra.mxu0 %v4213
    %4238 = vmatprep.subr.mxu0 0.0
    %4239 = vmatpush1.msra.mxu0 0.0
    %4240 = vmatprep.subr.mxu0 0.0
    %4241 = vmatpush1.msra.mxu0 0.0
    %4242 = vmatprep.subr.mxu0 0.0
    %4243 = vmatpush1.msra.mxu0 0.0
    %4244 = vmatprep.subr.mxu0 0.0
    %4245 = vmatpush1.msra.mxu0 0.0
    %4246 = vmatprep.subr.mxu0 0.0
    %4247 = vmatpush1.msra.mxu0 0.0
    %4248 = vmatprep.subr.mxu0 0.0
    %4249 = vmatpush1.msra.mxu0 0.0
    %4250 = vmatprep.subr.mxu0 0.0
    %4251 = vmatpush1.msra.mxu0 0.0
    %4252 = vmatprep.subr.mxu0 0.0
    %4253 = vmatpush1.msra.mxu0 0.0
    %4254 = vmatprep.subr.mxu0 0.0
    %4255 = vmatpush1.msra.mxu0 0.0
    %4256 = vmatprep.subr.mxu0 0.0
    %4257 = vmatpush1.msra.mxu0 0.0
    %4258 = vmatprep.subr.mxu0 0.0
    %4259 = vmatpush1.msra.mxu0 0.0
    %4260 = vmatprep.subr.mxu0 0.0
    %4261 = vmatpush1.msra.mxu0 0.0
    %4262 = vmatprep.subr.mxu0 0.0
    %4263 = vmatpush1.msra.mxu0 0.0
    %4264 = vmatprep.subr.mxu0 0.0
    %4265 = vmatpush1.msra.mxu0 0.0
    %4266 = vmatprep.subr.mxu0 0.0
    %4267 = vmatpush1.msra.mxu0 0.0
    %4268 = vmatprep.subr.mxu0 0.0
    %4269 = vmatpush1.msra.mxu0 0.0
    %4270 = vmatprep.subr.mxu0 0.0
    %4271 = vmatpush1.msra.mxu0 0.0
    %4272 = vmatprep.subr.mxu0 0.0
    %4273 = vmatpush1.msra.mxu0 0.0
    %4274 = vmatprep.subr.mxu0 0.0
    %4275 = vmatpush1.msra.mxu0 0.0
    %4276 = vmatprep.subr.mxu0 0.0
    %4277 = vmatpush1.msra.mxu0 0.0
    %4278 = vmatprep.subr.mxu0 0.0
    %4279 = vmatpush1.msra.mxu0 0.0
    %4280 = vmatprep.subr.mxu0 0.0
    %4281 = vmatpush1.msra.mxu0 0.0
    %4282 = vmatprep.subr.mxu0 0.0
    %4283 = vmatpush1.msra.mxu0 0.0
    %4284 = vmatprep.subr.mxu0 0.0
    %4285 = vmatpush1.msra.mxu0 0.0
    %4286 = vmatprep.subr.mxu0 0.0
    %4287 = vmatpush1.msra.mxu0 0.0
    %4288 = vmatprep.subr.mxu0 0.0
    %4289 = vmatpush1.msra.mxu0 0.0
    %4290 = vmatprep.subr.mxu0 0.0
    %4291 = vmatpush1.msra.mxu0 0.0
    %4292 = vmatprep.subr.mxu0 0.0
    %4293 = vmatpush1.msra.mxu0 0.0
    %4294 = vmatprep.mubr.f32.mxu0 0.0
    %4295 = vmatmul.mubr.f32.gmra.mrb[0].mxu0 %v4219
    %v4296 = vpop.f32.mrb[0].mxu0
    %v4297 = vadd.f32 0.0, %v4296
    %v4298 = vpop.f32.mrb[0].mxu0
    %4299 = vmatprep.mubr.f32.mxu0 0.0
    %4300 = vmatmul.mubr.f32.gmra.mrb[0].mxu0 %v4222
    %v4301 = vpop.f32.mrb[0].mxu0
    %v4302 = vadd.f32 0.0, %v4301
    %v4303 = vpop.f32.mrb[0].mxu0
    %4304 = vmatprep.mubr.f32.mxu0 0.0
    %4305 = vmatmul.mubr.f32.gmra.mrb[0].mxu0 %v4225
    %v4306 = vpop.f32.mrb[0].mxu0
    %v4307 = vadd.f32 0.0, %v4306
    %v4308 = vpop.f32.mrb[0].mxu0
    %4309 = vmatprep.mubr.f32.mxu0 0.0
    %4310 = vmatmul.mubr.f32.gmra.mrb[0].mxu0 %v4228
    %v4311 = vpop.f32.mrb[0].mxu0
    %v4312 = vadd.f32 0.0, %v4311
    %v4313 = vpop.f32.mrb[0].mxu0
    %4314 = vdwg.mxu0
    %4319 = vrot.lane.b32.xlu0 %v4041, 64
    %v4320 = vpop.permute.xlu0 %4319
    %4321 = vrot.lane.b32.xlu0 %v4042, 64
    %v4322 = vpop.permute.xlu0 %4321
    %4323 = vrot.lane.b32.xlu0 %v4043, 64
    %v4324 = vpop.permute.xlu0 %4323
    %4325 = vrot.lane.b32.xlu0 %v4044, 64
    %v4326 = vpop.permute.xlu0 %4325
    %v4332 = vsel %vm245, %v4034, 0
    %v4335 = vsel %vm245, %v4036, 0
    %v4338 = vsel %vm245, %v4038, 0
    %v4341 = vsel %vm245, %v4040, 0
    %4343 = vmatprep.subr.mxu0 0.0
    %4344 = vmatpush1.msra.mxu0 %v4320
    %4345 = vmatprep.subr.mxu0 0.0
    %4346 = vmatpush1.msra.mxu0 %v4322
    %4347 = vmatprep.subr.mxu0 0.0
    %4348 = vmatpush1.msra.mxu0 %v4324
    %4349 = vmatprep.subr.mxu0 0.0
    %4350 = vmatpush1.msra.mxu0 %v4326
    %4351 = vmatprep.subr.mxu0 0.0
    %4352 = vmatpush1.msra.mxu0 0.0
    %4353 = vmatprep.subr.mxu0 0.0
    %4354 = vmatpush1.msra.mxu0 0.0
    %4355 = vmatprep.subr.mxu0 0.0
    %4356 = vmatpush1.msra.mxu0 0.0
    %4357 = vmatprep.subr.mxu0 0.0
    %4358 = vmatpush1.msra.mxu0 0.0
    %4359 = vmatprep.subr.mxu0 0.0
    %4360 = vmatpush1.msra.mxu0 0.0
    %4361 = vmatprep.subr.mxu0 0.0
    %4362 = vmatpush1.msra.mxu0 0.0
    %4363 = vmatprep.subr.mxu0 0.0
    %4364 = vmatpush1.msra.mxu0 0.0
    %4365 = vmatprep.subr.mxu0 0.0
    %4366 = vmatpush1.msra.mxu0 0.0
    %4367 = vmatprep.subr.mxu0 0.0
    %4368 = vmatpush1.msra.mxu0 0.0
    %4369 = vmatprep.subr.mxu0 0.0
    %4370 = vmatpush1.msra.mxu0 0.0
    %4371 = vmatprep.subr.mxu0 0.0
    %4372 = vmatpush1.msra.mxu0 0.0
    %4373 = vmatprep.subr.mxu0 0.0
    %4374 = vmatpush1.msra.mxu0 0.0
    %4375 = vmatprep.subr.mxu0 0.0
    %4376 = vmatpush1.msra.mxu0 0.0
    %4377 = vmatprep.subr.mxu0 0.0
    %4378 = vmatpush1.msra.mxu0 0.0
    %4379 = vmatprep.subr.mxu0 0.0
    %4380 = vmatpush1.msra.mxu0 0.0
    %4381 = vmatprep.subr.mxu0 0.0
    %4382 = vmatpush1.msra.mxu0 0.0
    %4383 = vmatprep.subr.mxu0 0.0
    %4384 = vmatpush1.msra.mxu0 0.0
    %4385 = vmatprep.subr.mxu0 0.0
    %4386 = vmatpush1.msra.mxu0 0.0
    %4387 = vmatprep.subr.mxu0 0.0
    %4388 = vmatpush1.msra.mxu0 0.0
    %4389 = vmatprep.subr.mxu0 0.0
    %4390 = vmatpush1.msra.mxu0 0.0
    %4391 = vmatprep.subr.mxu0 0.0
    %4392 = vmatpush1.msra.mxu0 0.0
    %4393 = vmatprep.subr.mxu0 0.0
    %4394 = vmatpush1.msra.mxu0 0.0
    %4395 = vmatprep.subr.mxu0 0.0
    %4396 = vmatpush1.msra.mxu0 0.0
    %4397 = vmatprep.subr.mxu0 0.0
    %4398 = vmatpush1.msra.mxu0 0.0
    %4399 = vmatprep.subr.mxu0 0.0
    %4400 = vmatpush1.msra.mxu0 0.0
    %4401 = vmatprep.subr.mxu0 0.0
    %4402 = vmatpush1.msra.mxu0 0.0
    %4403 = vmatprep.subr.mxu0 0.0
    %4404 = vmatpush1.msra.mxu0 0.0
    %4405 = vmatprep.subr.mxu0 0.0
    %4406 = vmatpush1.msra.mxu0 0.0
    %4407 = vmatprep.mubr.f32.mxu0 0.0
    %4408 = vmatmul.mubr.f32.gmra.mrb[0].mxu0 %v4332
    %v4409 = vpop.f32.mrb[0].mxu0
    %v4410 = vadd.f32 %v4297, %v4409
    %v4411 = vpop.f32.mrb[0].mxu0
    %4412 = vmatprep.mubr.f32.mxu0 0.0
    %4413 = vmatmul.mubr.f32.gmra.mrb[0].mxu0 %v4335
    %v4414 = vpop.f32.mrb[0].mxu0
    %v4415 = vadd.f32 %v4302, %v4414
    %v4416 = vpop.f32.mrb[0].mxu0
    %4417 = vmatprep.mubr.f32.mxu0 0.0
    %4418 = vmatmul.mubr.f32.gmra.mrb[0].mxu0 %v4338
    %v4419 = vpop.f32.mrb[0].mxu0
    %v4420 = vadd.f32 %v4307, %v4419
    %v4421 = vpop.f32.mrb[0].mxu0
    %4422 = vmatprep.mubr.f32.mxu0 0.0
    %4423 = vmatmul.mubr.f32.gmra.mrb[0].mxu0 %v4341
    %v4424 = vpop.f32.mrb[0].mxu0
    %v4425 = vadd.f32 %v4312, %v4424
    %v4426 = vpop.f32.mrb[0].mxu0
    %4427 = vdwg.mxu0
    %v4428 = vmul.f32 %v3850, %v2107
    %v4429 = vmul.f32 %v3855, %v2107
    %v4430 = vmul.f32 %v3860, %v2107
    %v4431 = vmul.f32 %v3865, %v2107
    %v4433 = vsel %vm245, %v4428, 0
    %v4436 = vsel %vm245, %v4429, 0
    %v4439 = vsel %vm245, %v4430, 0
    %v4442 = vsel %vm245, %v4431, 0
    %4444 = vmatprep.subr.mxu0 0.0
    %4445 = vmatpush1.xpose.msra.mxu0 %v3896
    %4446 = vmatprep.subr.mxu0 0.0
    %4447 = vmatpush1.xpose.msra.mxu0 %v3898
    %4448 = vmatprep.subr.mxu0 0.0
    %4449 = vmatpush1.xpose.msra.mxu0 %v3900
    %4450 = vmatprep.subr.mxu0 0.0
    %4451 = vmatpush1.xpose.msra.mxu0 %v3902
    %4452 = vmatprep.subr.mxu0 0.0
    %4453 = vmatpush1.xpose.msra.mxu0 0.0
    %4454 = vmatprep.subr.mxu0 0.0
    %4455 = vmatpush1.xpose.msra.mxu0 0.0
    %4456 = vmatprep.subr.mxu0 0.0
    %4457 = vmatpush1.xpose.msra.mxu0 0.0
    %4458 = vmatprep.subr.mxu0 0.0
    %4459 = vmatpush1.xpose.msra.mxu0 0.0
    %4460 = vmatprep.subr.mxu0 0.0
    %4461 = vmatpush1.xpose.msra.mxu0 0.0
    %4462 = vmatprep.subr.mxu0 0.0
    %4463 = vmatpush1.xpose.msra.mxu0 0.0
    %4464 = vmatprep.subr.mxu0 0.0
    %4465 = vmatpush1.xpose.msra.mxu0 0.0
    %4466 = vmatprep.subr.mxu0 0.0
    %4467 = vmatpush1.xpose.msra.mxu0 0.0
    %4468 = vmatprep.subr.mxu0 0.0
    %4469 = vmatpush1.xpose.msra.mxu0 0.0
    %4470 = vmatprep.subr.mxu0 0.0
    %4471 = vmatpush1.xpose.msra.mxu0 0.0
    %4472 = vmatprep.subr.mxu0 0.0
    %4473 = vmatpush1.xpose.msra.mxu0 0.0
    %4474 = vmatprep.subr.mxu0 0.0
    %4475 = vmatpush1.xpose.msra.mxu0 0.0
    %4476 = vmatprep.subr.mxu0 0.0
    %4477 = vmatpush1.xpose.msra.mxu0 0.0
    %4478 = vmatprep.subr.mxu0 0.0
    %4479 = vmatpush1.xpose.msra.mxu0 0.0
    %4480 = vmatprep.subr.mxu0 0.0
    %4481 = vmatpush1.xpose.msra.mxu0 0.0
    %4482 = vmatprep.subr.mxu0 0.0
    %4483 = vmatpush1.xpose.msra.mxu0 0.0
    %4484 = vmatprep.subr.mxu0 0.0
    %4485 = vmatpush1.xpose.msra.mxu0 0.0
    %4486 = vmatprep.subr.mxu0 0.0
    %4487 = vmatpush1.xpose.msra.mxu0 0.0
    %4488 = vmatprep.subr.mxu0 0.0
    %4489 = vmatpush1.xpose.msra.mxu0 0.0
    %4490 = vmatprep.subr.mxu0 0.0
    %4491 = vmatpush1.xpose.msra.mxu0 0.0
    %4492 = vmatprep.subr.mxu0 0.0
    %4493 = vmatpush1.xpose.msra.mxu0 0.0
    %4494 = vmatprep.subr.mxu0 0.0
    %4495 = vmatpush1.xpose.msra.mxu0 0.0
    %4496 = vmatprep.subr.mxu0 0.0
    %4497 = vmatpush1.xpose.msra.mxu0 0.0
    %4498 = vmatprep.subr.mxu0 0.0
    %4499 = vmatpush1.xpose.msra.mxu0 0.0
    %4500 = vmatprep.subr.mxu0 0.0
    %4501 = vmatpush1.xpose.msra.mxu0 0.0
    %4502 = vmatprep.subr.mxu0 0.0
    %4503 = vmatpush1.xpose.msra.mxu0 0.0
    %4504 = vmatprep.subr.mxu0 0.0
    %4505 = vmatpush1.xpose.msra.mxu0 0.0
    %4506 = vmatprep.subr.mxu0 0.0
    %4507 = vmatpush1.xpose.msra.mxu0 0.0
    %4508 = vmatprep.mubr.f32.mxu0 0.0
    %4509 = vmatmul.mubr.f32.gmra.mrb[0].mxu0 %v4433
    %v4510 = vpop.f32.mrb[0].mxu0
    %v4511 = vadd.f32 0.0, %v4510
    %v4512 = vpop.f32.mrb[0].mxu0
    %4513 = vmatprep.mubr.f32.mxu0 0.0
    %4514 = vmatmul.mubr.f32.gmra.mrb[0].mxu0 %v4436
    %v4515 = vpop.f32.mrb[0].mxu0
    %v4516 = vadd.f32 0.0, %v4515
    %v4517 = vpop.f32.mrb[0].mxu0
    %4518 = vmatprep.mubr.f32.mxu0 0.0
    %4519 = vmatmul.mubr.f32.gmra.mrb[0].mxu0 %v4439
    %v4520 = vpop.f32.mrb[0].mxu0
    %v4521 = vadd.f32 0.0, %v4520
    %v4522 = vpop.f32.mrb[0].mxu0
    %4523 = vmatprep.mubr.f32.mxu0 0.0
    %4524 = vmatmul.mubr.f32.gmra.mrb[0].mxu0 %v4442
    %v4525 = vpop.f32.mrb[0].mxu0
    %v4526 = vadd.f32 0.0, %v4525
    %v4527 = vpop.f32.mrb[0].mxu0
    %4528 = vdwg.mxu0
    %v4529 = vmul.f32 %v4511, 0.25
    %v4530 = vmul.f32 %v4516, 0.25
    %v4531 = vmul.f32 %v4521, 0.25
    %v4532 = vmul.f32 %v4526, 0.25
    %v4533 = vadd.f32 %v4529, %v119
    %v4534 = vadd.f32 %v4530, %v120
    %v4535 = vadd.f32 %v4531, %v121
    %v4536 = vadd.f32 %v4532, %v122
    %v4537 = vsel %vm245, %v4533, -inf
    %4538 = vmax.xlane.f32.xlu0 %v4537
    %v4539 = vpop.xlane.xlu0 %4538
    %v4540 = vsel %vm245, %v4534, -inf
    %4541 = vmax.xlane.f32.xlu0 %v4540
    %v4542 = vpop.xlane.xlu0 %4541
    %v4543 = vsel %vm245, %v4535, -inf
    %4544 = vmax.xlane.f32.xlu0 %v4543
    %v4545 = vpop.xlane.xlu0 %4544
    %v4546 = vsel %vm245, %v4536, -inf
    %4547 = vmax.xlane.f32.xlu0 %v4546
    %v4548 = vpop.xlane.xlu0 %4547
    %v4549 = vsub.f32 %v4533, %v4539
    %v4550 = vsub.f32 %v4534, %v4542
    %v4551 = vsub.f32 %v4535, %v4545
    %v4552 = vsub.f32 %v4536, %v4548
    %v4553 = vmul.f32 %v4549, 1.442695
    %v4554 = vpow.pop %v4553
    %v4555 = vmul.f32 %v4550, 1.442695
    %v4556 = vpow.pop %v4555
    %v4557 = vmul.f32 %v4551, 1.442695
    %v4558 = vpow.pop %v4557
    %v4559 = vmul.f32 %v4552, 1.442695
    %v4560 = vpow.pop %v4559
    %v4561 = vsel %vm245, %v4554, 0.0
    %4562 = vadd.xlane.f32.xlu0 %v4561
    %v4563 = vpop.xlane.xlu0 %4562
    %v4564 = vsel %vm245, %v4556, 0.0
    %4565 = vadd.xlane.f32.xlu0 %v4564
    %v4566 = vpop.xlane.xlu0 %4565
    %v4567 = vsel %vm245, %v4558, 0.0
    %4568 = vadd.xlane.f32.xlu0 %v4567
    %v4569 = vpop.xlane.xlu0 %4568
    %v4570 = vsel %vm245, %v4560, 0.0
    %4571 = vadd.xlane.f32.xlu0 %v4570
    %v4572 = vpop.xlane.xlu0 %4571
    %v4573 = vrcp.pop %v4563
    %v4574 = vmul.f32 %v4554, %v4573
    %v4575 = vrcp.pop %v4566
    %v4576 = vmul.f32 %v4556, %v4575
    %v4577 = vrcp.pop %v4569
    %v4578 = vmul.f32 %v4558, %v4577
    %v4579 = vrcp.pop %v4572
    %v4580 = vmul.f32 %v4560, %v4579
    %v4581 = vmul.f32 %v3850, %v2263
    %v4582 = vmul.f32 %v3855, %v2263
    %v4583 = vmul.f32 %v3860, %v2263
    %v4584 = vmul.f32 %v3865, %v2263
    %4589 = vrot.lane.b32.xlu0 %v4581, 64
    %v4590 = vpop.permute.xlu0 %4589
    %4591 = vrot.lane.b32.xlu0 %v4582, 64
    %v4592 = vpop.permute.xlu0 %4591
    %4593 = vrot.lane.b32.xlu0 %v4583, 64
    %v4594 = vpop.permute.xlu0 %4593
    %4595 = vrot.lane.b32.xlu0 %v4584, 64
    %v4596 = vpop.permute.xlu0 %4595
    %v4602 = vsel %vm245, %v4574, 0
    %v4605 = vsel %vm245, %v4576, 0
    %v4608 = vsel %vm245, %v4578, 0
    %v4611 = vsel %vm245, %v4580, 0
    %4613 = vmatprep.subr.mxu0 0.0
    %4614 = vmatpush1.msra.mxu0 %v4590
    %4615 = vmatprep.subr.mxu0 0.0
    %4616 = vmatpush1.msra.mxu0 %v4592
    %4617 = vmatprep.subr.mxu0 0.0
    %4618 = vmatpush1.msra.mxu0 %v4594
    %4619 = vmatprep.subr.mxu0 0.0
    %4620 = vmatpush1.msra.mxu0 %v4596
    %4621 = vmatprep.subr.mxu0 0.0
    %4622 = vmatpush1.msra.mxu0 0.0
    %4623 = vmatprep.subr.mxu0 0.0
    %4624 = vmatpush1.msra.mxu0 0.0
    %4625 = vmatprep.subr.mxu0 0.0
    %4626 = vmatpush1.msra.mxu0 0.0
    %4627 = vmatprep.subr.mxu0 0.0
    %4628 = vmatpush1.msra.mxu0 0.0
    %4629 = vmatprep.subr.mxu0 0.0
    %4630 = vmatpush1.msra.mxu0 0.0
    %4631 = vmatprep.subr.mxu0 0.0
    %4632 = vmatpush1.msra.mxu0 0.0
    %4633 = vmatprep.subr.mxu0 0.0
    %4634 = vmatpush1.msra.mxu0 0.0
    %4635 = vmatprep.subr.mxu0 0.0
    %4636 = vmatpush1.msra.mxu0 0.0
    %4637 = vmatprep.subr.mxu0 0.0
    %4638 = vmatpush1.msra.mxu0 0.0
    %4639 = vmatprep.subr.mxu0 0.0
    %4640 = vmatpush1.msra.mxu0 0.0
    %4641 = vmatprep.subr.mxu0 0.0
    %4642 = vmatpush1.msra.mxu0 0.0
    %4643 = vmatprep.subr.mxu0 0.0
    %4644 = vmatpush1.msra.mxu0 0.0
    %4645 = vmatprep.subr.mxu0 0.0
    %4646 = vmatpush1.msra.mxu0 0.0
    %4647 = vmatprep.subr.mxu0 0.0
    %4648 = vmatpush1.msra.mxu0 0.0
    %4649 = vmatprep.subr.mxu0 0.0
    %4650 = vmatpush1.msra.mxu0 0.0
    %4651 = vmatprep.subr.mxu0 0.0
    %4652 = vmatpush1.msra.mxu0 0.0
    %4653 = vmatprep.subr.mxu0 0.0
    %4654 = vmatpush1.msra.mxu0 0.0
    %4655 = vmatprep.subr.mxu0 0.0
    %4656 = vmatpush1.msra.mxu0 0.0
    %4657 = vmatprep.subr.mxu0 0.0
    %4658 = vmatpush1.msra.mxu0 0.0
    %4659 = vmatprep.subr.mxu0 0.0
    %4660 = vmatpush1.msra.mxu0 0.0
    %4661 = vmatprep.subr.mxu0 0.0
    %4662 = vmatpush1.msra.mxu0 0.0
    %4663 = vmatprep.subr.mxu0 0.0
    %4664 = vmatpush1.msra.mxu0 0.0
    %4665 = vmatprep.subr.mxu0 0.0
    %4666 = vmatpush1.msra.mxu0 0.0
    %4667 = vmatprep.subr.mxu0 0.0
    %4668 = vmatpush1.msra.mxu0 0.0
    %4669 = vmatprep.subr.mxu0 0.0
    %4670 = vmatpush1.msra.mxu0 0.0
    %4671 = vmatprep.subr.mxu0 0.0
    %4672 = vmatpush1.msra.mxu0 0.0
    %4673 = vmatprep.subr.mxu0 0.0
    %4674 = vmatpush1.msra.mxu0 0.0
    %4675 = vmatprep.subr.mxu0 0.0
    %4676 = vmatpush1.msra.mxu0 0.0
    %4677 = vmatprep.mubr.f32.mxu0 0.0
    %4678 = vmatmul.mubr.f32.gmra.mrb[0].mxu0 %v4602
    %v4679 = vpop.f32.mrb[0].mxu0
    %v4680 = vadd.f32 0.0, %v4679
    %v4681 = vpop.f32.mrb[0].mxu0
    %4682 = vmatprep.mubr.f32.mxu0 0.0
    %4683 = vmatmul.mubr.f32.gmra.mrb[0].mxu0 %v4605
    %v4684 = vpop.f32.mrb[0].mxu0
    %v4685 = vadd.f32 0.0, %v4684
    %v4686 = vpop.f32.mrb[0].mxu0
    %4687 = vmatprep.mubr.f32.mxu0 0.0
    %4688 = vmatmul.mubr.f32.gmra.mrb[0].mxu0 %v4608
    %v4689 = vpop.f32.mrb[0].mxu0
    %v4690 = vadd.f32 0.0, %v4689
    %v4691 = vpop.f32.mrb[0].mxu0
    %4692 = vmatprep.mubr.f32.mxu0 0.0
    %4693 = vmatmul.mubr.f32.gmra.mrb[0].mxu0 %v4611
    %v4694 = vpop.f32.mrb[0].mxu0
    %v4695 = vadd.f32 0.0, %v4694
    %v4696 = vpop.f32.mrb[0].mxu0
    %4697 = vdwg.mxu0
    %v4698 = vadd.f32 %v4410, %v4680
    %v4699 = vadd.f32 %v4415, %v4685
    %v4700 = vadd.f32 %v4420, %v4690
    %v4701 = vadd.f32 %v4425, %v4695
    %v4702 = vmul.f32 %v3850, %v2389
    %v4703 = vmul.f32 %v3855, %v2389
    %v4704 = vmul.f32 %v3860, %v2389
    %v4705 = vmul.f32 %v3865, %v2389
    %v4707 = vsel %vm245, %v4702, 0
    %v4710 = vsel %vm245, %v4703, 0
    %v4713 = vsel %vm245, %v4704, 0
    %v4716 = vsel %vm245, %v4705, 0
    %4718 = vmatprep.subr.mxu0 0.0
    %4719 = vmatpush1.xpose.msra.mxu0 %v3896
    %4720 = vmatprep.subr.mxu0 0.0
    %4721 = vmatpush1.xpose.msra.mxu0 %v3898
    %4722 = vmatprep.subr.mxu0 0.0
    %4723 = vmatpush1.xpose.msra.mxu0 %v3900
    %4724 = vmatprep.subr.mxu0 0.0
    %4725 = vmatpush1.xpose.msra.mxu0 %v3902
    %4726 = vmatprep.subr.mxu0 0.0
    %4727 = vmatpush1.xpose.msra.mxu0 0.0
    %4728 = vmatprep.subr.mxu0 0.0
    %4729 = vmatpush1.xpose.msra.mxu0 0.0
    %4730 = vmatprep.subr.mxu0 0.0
    %4731 = vmatpush1.xpose.msra.mxu0 0.0
    %4732 = vmatprep.subr.mxu0 0.0
    %4733 = vmatpush1.xpose.msra.mxu0 0.0
    %4734 = vmatprep.subr.mxu0 0.0
    %4735 = vmatpush1.xpose.msra.mxu0 0.0
    %4736 = vmatprep.subr.mxu0 0.0
    %4737 = vmatpush1.xpose.msra.mxu0 0.0
    %4738 = vmatprep.subr.mxu0 0.0
    %4739 = vmatpush1.xpose.msra.mxu0 0.0
    %4740 = vmatprep.subr.mxu0 0.0
    %4741 = vmatpush1.xpose.msra.mxu0 0.0
    %4742 = vmatprep.subr.mxu0 0.0
    %4743 = vmatpush1.xpose.msra.mxu0 0.0
    %4744 = vmatprep.subr.mxu0 0.0
    %4745 = vmatpush1.xpose.msra.mxu0 0.0
    %4746 = vmatprep.subr.mxu0 0.0
    %4747 = vmatpush1.xpose.msra.mxu0 0.0
    %4748 = vmatprep.subr.mxu0 0.0
    %4749 = vmatpush1.xpose.msra.mxu0 0.0
    %4750 = vmatprep.subr.mxu0 0.0
    %4751 = vmatpush1.xpose.msra.mxu0 0.0
    %4752 = vmatprep.subr.mxu0 0.0
    %4753 = vmatpush1.xpose.msra.mxu0 0.0
    %4754 = vmatprep.subr.mxu0 0.0
    %4755 = vmatpush1.xpose.msra.mxu0 0.0
    %4756 = vmatprep.subr.mxu0 0.0
    %4757 = vmatpush1.xpose.msra.mxu0 0.0
    %4758 = vmatprep.subr.mxu0 0.0
    %4759 = vmatpush1.xpose.msra.mxu0 0.0
    %4760 = vmatprep.subr.mxu0 0.0
    %4761 = vmatpush1.xpose.msra.mxu0 0.0
    %4762 = vmatprep.subr.mxu0 0.0
    %4763 = vmatpush1.xpose.msra.mxu0 0.0
    %4764 = vmatprep.subr.mxu0 0.0
    %4765 = vmatpush1.xpose.msra.mxu0 0.0
    %4766 = vmatprep.subr.mxu0 0.0
    %4767 = vmatpush1.xpose.msra.mxu0 0.0
    %4768 = vmatprep.subr.mxu0 0.0
    %4769 = vmatpush1.xpose.msra.mxu0 0.0
    %4770 = vmatprep.subr.mxu0 0.0
    %4771 = vmatpush1.xpose.msra.mxu0 0.0
    %4772 = vmatprep.subr.mxu0 0.0
    %4773 = vmatpush1.xpose.msra.mxu0 0.0
    %4774 = vmatprep.subr.mxu0 0.0
    %4775 = vmatpush1.xpose.msra.mxu0 0.0
    %4776 = vmatprep.subr.mxu0 0.0
    %4777 = vmatpush1.xpose.msra.mxu0 0.0
    %4778 = vmatprep.subr.mxu0 0.0
    %4779 = vmatpush1.xpose.msra.mxu0 0.0
    %4780 = vmatprep.subr.mxu0 0.0
    %4781 = vmatpush1.xpose.msra.mxu0 0.0
    %4782 = vmatprep.mubr.f32.mxu0 0.0
    %4783 = vmatmul.mubr.f32.gmra.mrb[0].mxu0 %v4707
    %v4784 = vpop.f32.mrb[0].mxu0
    %v4785 = vadd.f32 0.0, %v4784
    %v4786 = vpop.f32.mrb[0].mxu0
    %4787 = vmatprep.mubr.f32.mxu0 0.0
    %4788 = vmatmul.mubr.f32.gmra.mrb[0].mxu0 %v4710
    %v4789 = vpop.f32.mrb[0].mxu0
    %v4790 = vadd.f32 0.0, %v4789
    %v4791 = vpop.f32.mrb[0].mxu0
    %4792 = vmatprep.mubr.f32.mxu0 0.0
    %4793 = vmatmul.mubr.f32.gmra.mrb[0].mxu0 %v4713
    %v4794 = vpop.f32.mrb[0].mxu0
    %v4795 = vadd.f32 0.0, %v4794
    %v4796 = vpop.f32.mrb[0].mxu0
    %4797 = vmatprep.mubr.f32.mxu0 0.0
    %4798 = vmatmul.mubr.f32.gmra.mrb[0].mxu0 %v4716
    %v4799 = vpop.f32.mrb[0].mxu0
    %v4800 = vadd.f32 0.0, %v4799
    %v4801 = vpop.f32.mrb[0].mxu0
    %4802 = vdwg.mxu0
    %v4803 = vmul.f32 %v4785, 0.25
    %v4804 = vmul.f32 %v4790, 0.25
    %v4805 = vmul.f32 %v4795, 0.25
    %v4806 = vmul.f32 %v4800, 0.25
    %v4807 = vadd.f32 %v4803, %v119
    %v4808 = vadd.f32 %v4804, %v120
    %v4809 = vadd.f32 %v4805, %v121
    %v4810 = vadd.f32 %v4806, %v122
    %v4811 = vsel %vm245, %v4807, -inf
    %4812 = vmax.xlane.f32.xlu0 %v4811
    %v4813 = vpop.xlane.xlu0 %4812
    %v4814 = vsel %vm245, %v4808, -inf
    %4815 = vmax.xlane.f32.xlu0 %v4814
    %v4816 = vpop.xlane.xlu0 %4815
    %v4817 = vsel %vm245, %v4809, -inf
    %4818 = vmax.xlane.f32.xlu0 %v4817
    %v4819 = vpop.xlane.xlu0 %4818
    %v4820 = vsel %vm245, %v4810, -inf
    %4821 = vmax.xlane.f32.xlu0 %v4820
    %v4822 = vpop.xlane.xlu0 %4821
    %v4823 = vsub.f32 %v4807, %v4813
    %v4824 = vsub.f32 %v4808, %v4816
    %v4825 = vsub.f32 %v4809, %v4819
    %v4826 = vsub.f32 %v4810, %v4822
    %v4827 = vmul.f32 %v4823, 1.442695
    %v4828 = vpow.pop %v4827
    %v4829 = vmul.f32 %v4824, 1.442695
    %v4830 = vpow.pop %v4829
    %v4831 = vmul.f32 %v4825, 1.442695
    %v4832 = vpow.pop %v4831
    %v4833 = vmul.f32 %v4826, 1.442695
    %v4834 = vpow.pop %v4833
    %v4835 = vsel %vm245, %v4828, 0.0
    %4836 = vadd.xlane.f32.xlu0 %v4835
    %v4837 = vpop.xlane.xlu0 %4836
    %v4838 = vsel %vm245, %v4830, 0.0
    %4839 = vadd.xlane.f32.xlu0 %v4838
    %v4840 = vpop.xlane.xlu0 %4839
    %v4841 = vsel %vm245, %v4832, 0.0
    %4842 = vadd.xlane.f32.xlu0 %v4841
    %v4843 = vpop.xlane.xlu0 %4842
    %v4844 = vsel %vm245, %v4834, 0.0
    %4845 = vadd.xlane.f32.xlu0 %v4844
    %v4846 = vpop.xlane.xlu0 %4845
    %v4847 = vrcp.pop %v4837
    %v4848 = vmul.f32 %v4828, %v4847
    %v4849 = vrcp.pop %v4840
    %v4850 = vmul.f32 %v4830, %v4849
    %v4851 = vrcp.pop %v4843
    %v4852 = vmul.f32 %v4832, %v4851
    %v4853 = vrcp.pop %v4846
    %v4854 = vmul.f32 %v4834, %v4853
    %v4855 = vmul.f32 %v3850, %v2545
    %v4856 = vmul.f32 %v3855, %v2545
    %v4857 = vmul.f32 %v3860, %v2545
    %v4858 = vmul.f32 %v3865, %v2545
    %4863 = vrot.lane.b32.xlu0 %v4855, 64
    %v4864 = vpop.permute.xlu0 %4863
    %4865 = vrot.lane.b32.xlu0 %v4856, 64
    %v4866 = vpop.permute.xlu0 %4865
    %4867 = vrot.lane.b32.xlu0 %v4857, 64
    %v4868 = vpop.permute.xlu0 %4867
    %4869 = vrot.lane.b32.xlu0 %v4858, 64
    %v4870 = vpop.permute.xlu0 %4869
    %v4876 = vsel %vm245, %v4848, 0
    %v4879 = vsel %vm245, %v4850, 0
    %v4882 = vsel %vm245, %v4852, 0
    %v4885 = vsel %vm245, %v4854, 0
    %4887 = vmatprep.subr.mxu0 0.0
    %4888 = vmatpush1.msra.mxu0 %v4864
    %4889 = vmatprep.subr.mxu0 0.0
    %4890 = vmatpush1.msra.mxu0 %v4866
    %4891 = vmatprep.subr.mxu0 0.0
    %4892 = vmatpush1.msra.mxu0 %v4868
    %4893 = vmatprep.subr.mxu0 0.0
    %4894 = vmatpush1.msra.mxu0 %v4870
    %4895 = vmatprep.subr.mxu0 0.0
    %4896 = vmatpush1.msra.mxu0 0.0
    %4897 = vmatprep.subr.mxu0 0.0
    %4898 = vmatpush1.msra.mxu0 0.0
    %4899 = vmatprep.subr.mxu0 0.0
    %4900 = vmatpush1.msra.mxu0 0.0
    %4901 = vmatprep.subr.mxu0 0.0
    %4902 = vmatpush1.msra.mxu0 0.0
    %4903 = vmatprep.subr.mxu0 0.0
    %4904 = vmatpush1.msra.mxu0 0.0
    %4905 = vmatprep.subr.mxu0 0.0
    %4906 = vmatpush1.msra.mxu0 0.0
    %4907 = vmatprep.subr.mxu0 0.0
    %4908 = vmatpush1.msra.mxu0 0.0
    %4909 = vmatprep.subr.mxu0 0.0
    %4910 = vmatpush1.msra.mxu0 0.0
    %4911 = vmatprep.subr.mxu0 0.0
    %4912 = vmatpush1.msra.mxu0 0.0
    %4913 = vmatprep.subr.mxu0 0.0
    %4914 = vmatpush1.msra.mxu0 0.0
    %4915 = vmatprep.subr.mxu0 0.0
    %4916 = vmatpush1.msra.mxu0 0.0
    %4917 = vmatprep.subr.mxu0 0.0
    %4918 = vmatpush1.msra.mxu0 0.0
    %4919 = vmatprep.subr.mxu0 0.0
    %4920 = vmatpush1.msra.mxu0 0.0
    %4921 = vmatprep.subr.mxu0 0.0
    %4922 = vmatpush1.msra.mxu0 0.0
    %4923 = vmatprep.subr.mxu0 0.0
    %4924 = vmatpush1.msra.mxu0 0.0
    %4925 = vmatprep.subr.mxu0 0.0
    %4926 = vmatpush1.msra.mxu0 0.0
    %4927 = vmatprep.subr.mxu0 0.0
    %4928 = vmatpush1.msra.mxu0 0.0
    %4929 = vmatprep.subr.mxu0 0.0
    %4930 = vmatpush1.msra.mxu0 0.0
    %4931 = vmatprep.subr.mxu0 0.0
    %4932 = vmatpush1.msra.mxu0 0.0
    %4933 = vmatprep.subr.mxu0 0.0
    %4934 = vmatpush1.msra.mxu0 0.0
    %4935 = vmatprep.subr.mxu0 0.0
    %4936 = vmatpush1.msra.mxu0 0.0
    %4937 = vmatprep.subr.mxu0 0.0
    %4938 = vmatpush1.msra.mxu0 0.0
    %4939 = vmatprep.subr.mxu0 0.0
    %4940 = vmatpush1.msra.mxu0 0.0
    %4941 = vmatprep.subr.mxu0 0.0
    %4942 = vmatpush1.msra.mxu0 0.0
    %4943 = vmatprep.subr.mxu0 0.0
    %4944 = vmatpush1.msra.mxu0 0.0
    %4945 = vmatprep.subr.mxu0 0.0
    %4946 = vmatpush1.msra.mxu0 0.0
    %4947 = vmatprep.subr.mxu0 0.0
    %4948 = vmatpush1.msra.mxu0 0.0
    %4949 = vmatprep.subr.mxu0 0.0
    %4950 = vmatpush1.msra.mxu0 0.0
    %4951 = vmatprep.mubr.f32.mxu0 0.0
    %4952 = vmatmul.mubr.f32.gmra.mrb[0].mxu0 %v4876
    %v4953 = vpop.f32.mrb[0].mxu0
    %v4954 = vadd.f32 0.0, %v4953
    %v4955 = vpop.f32.mrb[0].mxu0
    %4956 = vmatprep.mubr.f32.mxu0 0.0
    %4957 = vmatmul.mubr.f32.gmra.mrb[0].mxu0 %v4879
    %v4958 = vpop.f32.mrb[0].mxu0
    %v4959 = vadd.f32 0.0, %v4958
    %v4960 = vpop.f32.mrb[0].mxu0
    %4961 = vmatprep.mubr.f32.mxu0 0.0
    %4962 = vmatmul.mubr.f32.gmra.mrb[0].mxu0 %v4882
    %v4963 = vpop.f32.mrb[0].mxu0
    %v4964 = vadd.f32 0.0, %v4963
    %v4965 = vpop.f32.mrb[0].mxu0
    %4966 = vmatprep.mubr.f32.mxu0 0.0
    %4967 = vmatmul.mubr.f32.gmra.mrb[0].mxu0 %v4885
    %v4968 = vpop.f32.mrb[0].mxu0
    %v4969 = vadd.f32 0.0, %v4968
    %v4970 = vpop.f32.mrb[0].mxu0
    %4971 = vdwg.mxu0
    %v4972 = vadd.f32 %v4698, %v4954
    %v4973 = vadd.f32 %v4699, %v4959
    %v4974 = vadd.f32 %v4700, %v4964
    %v4975 = vadd.f32 %v4701, %v4969
    %v4976 = vadd.f32 %v4972, %v3762
    %v4977 = vadd.f32 %v4973, %v3763
    %v4978 = vadd.f32 %v4974, %v3764
    %v4979 = vadd.f32 %v4975, %v3765
    %v4980 = vld [vmem:[%s14] sm:$0xff]
    %v4981 = vld [vmem:[%s14 + $0x8] sm:$0xff]
    %v4982 = vld [vmem:[%s14 + $0x10] sm:$0xff]
    %v4983 = vld [vmem:[%s14 + $0x18] sm:$0xff]
    %v4985 = vsel %vm245, %v4976, 0
    %v4988 = vsel %vm245, %v4977, 0
    %v4991 = vsel %vm245, %v4978, 0
    %v4994 = vsel %vm245, %v4979, 0
    %4996 = vmatprep.subr.mxu0 0.0
    %4997 = vmatpush1.msra.mxu0 %v4980
    %4998 = vmatprep.subr.mxu0 0.0
    %4999 = vmatpush1.msra.mxu0 %v4981
    %5000 = vmatprep.subr.mxu0 0.0
    %5001 = vmatpush1.msra.mxu0 %v4982
    %5002 = vmatprep.subr.mxu0 0.0
    %5003 = vmatpush1.msra.mxu0 %v4983
    %5004 = vmatprep.subr.mxu0 0.0
    %5005 = vmatpush1.msra.mxu0 0.0
    %5006 = vmatprep.subr.mxu0 0.0
    %5007 = vmatpush1.msra.mxu0 0.0
    %5008 = vmatprep.subr.mxu0 0.0
    %5009 = vmatpush1.msra.mxu0 0.0
    %5010 = vmatprep.subr.mxu0 0.0
    %5011 = vmatpush1.msra.mxu0 0.0
    %5012 = vmatprep.subr.mxu0 0.0
    %5013 = vmatpush1.msra.mxu0 0.0
    %5014 = vmatprep.subr.mxu0 0.0
    %5015 = vmatpush1.msra.mxu0 0.0
    %5016 = vmatprep.subr.mxu0 0.0
    %5017 = vmatpush1.msra.mxu0 0.0
    %5018 = vmatprep.subr.mxu0 0.0
    %5019 = vmatpush1.msra.mxu0 0.0
    %5020 = vmatprep.subr.mxu0 0.0
    %5021 = vmatpush1.msra.mxu0 0.0
    %5022 = vmatprep.subr.mxu0 0.0
    %5023 = vmatpush1.msra.mxu0 0.0
    %5024 = vmatprep.subr.mxu0 0.0
    %5025 = vmatpush1.msra.mxu0 0.0
    %5026 = vmatprep.subr.mxu0 0.0
    %5027 = vmatpush1.msra.mxu0 0.0
    %5028 = vmatprep.subr.mxu0 0.0
    %5029 = vmatpush1.msra.mxu0 0.0
    %5030 = vmatprep.subr.mxu0 0.0
    %5031 = vmatpush1.msra.mxu0 0.0
    %5032 = vmatprep.subr.mxu0 0.0
    %5033 = vmatpush1.msra.mxu0 0.0
    %5034 = vmatprep.subr.mxu0 0.0
    %5035 = vmatpush1.msra.mxu0 0.0
    %5036 = vmatprep.subr.mxu0 0.0
    %5037 = vmatpush1.msra.mxu0 0.0
    %5038 = vmatprep.subr.mxu0 0.0
    %5039 = vmatpush1.msra.mxu0 0.0
    %5040 = vmatprep.subr.mxu0 0.0
    %5041 = vmatpush1.msra.mxu0 0.0
    %5042 = vmatprep.subr.mxu0 0.0
    %5043 = vmatpush1.msra.mxu0 0.0
    %5044 = vmatprep.subr.mxu0 0.0
    %5045 = vmatpush1.msra.mxu0 0.0
    %5046 = vmatprep.subr.mxu0 0.0
    %5047 = vmatpush1.msra.mxu0 0.0
    %5048 = vmatprep.subr.mxu0 0.0
    %5049 = vmatpush1.msra.mxu0 0.0
    %5050 = vmatprep.subr.mxu0 0.0
    %5051 = vmatpush1.msra.mxu0 0.0
    %5052 = vmatprep.subr.mxu0 0.0
    %5053 = vmatpush1.msra.mxu0 0.0
    %5054 = vmatprep.subr.mxu0 0.0
    %5055 = vmatpush1.msra.mxu0 0.0
    %5056 = vmatprep.subr.mxu0 0.0
    %5057 = vmatpush1.msra.mxu0 0.0
    %5058 = vmatprep.subr.mxu0 0.0
    %5059 = vmatpush1.msra.mxu0 0.0
    %5060 = vmatprep.mubr.f32.mxu0 0.0
    %5061 = vmatmul.mubr.f32.gmra.mrb[0].mxu0 %v4985
    %v5062 = vpop.f32.mrb[0].mxu0
    %v5063 = vadd.f32 0.0, %v5062
    %v5064 = vpop.f32.mrb[0].mxu0
    %5065 = vmatprep.mubr.f32.mxu0 0.0
    %5066 = vmatmul.mubr.f32.gmra.mrb[0].mxu0 %v4988
    %v5067 = vpop.f32.mrb[0].mxu0
    %v5068 = vadd.f32 0.0, %v5067
    %v5069 = vpop.f32.mrb[0].mxu0
    %5070 = vmatprep.mubr.f32.mxu0 0.0
    %5071 = vmatmul.mubr.f32.gmra.mrb[0].mxu0 %v4991
    %v5072 = vpop.f32.mrb[0].mxu0
    %v5073 = vadd.f32 0.0, %v5072
    %v5074 = vpop.f32.mrb[0].mxu0
    %5075 = vmatprep.mubr.f32.mxu0 0.0
    %5076 = vmatmul.mubr.f32.gmra.mrb[0].mxu0 %v4994
    %v5077 = vpop.f32.mrb[0].mxu0
    %v5078 = vadd.f32 0.0, %v5077
    %v5079 = vpop.f32.mrb[0].mxu0
    %5080 = vdwg.mxu0
    %v5081 = vmul.f32 %v5063, 1.442695
    %v5082 = vpow.pop %v5081
    %v5083 = vmul.f32 %v5068, 1.442695
    %v5084 = vpow.pop %v5083
    %v5085 = vmul.f32 %v5073, 1.442695
    %v5086 = vpow.pop %v5085
    %v5087 = vmul.f32 %v5078, 1.442695
    %v5088 = vpow.pop %v5087
    %v5089 = vld [vmem:[%s5] sm:$0xff]
    %v5090 = vld [vmem:[%s5 + $0x8] sm:$0xff]
    %v5091 = vld [vmem:[%s5 + $0x10] sm:$0xff]
    %v5092 = vld [vmem:[%s5 + $0x18] sm:$0xff]
    %5097 = vrot.lane.b32.xlu0 %v5089, 32
    %v5098 = vpop.permute.xlu0 %5097
    %5099 = vrot.lane.b32.xlu0 %v5090, 32
    %v5100 = vpop.permute.xlu0 %5099
    %5101 = vrot.lane.b32.xlu0 %v5091, 32
    %v5102 = vpop.permute.xlu0 %5101
    %5103 = vrot.lane.b32.xlu0 %v5092, 32
    %v5104 = vpop.permute.xlu0 %5103
    %v5109 = vmul.f32 %v5082, %v5098
    %v5110 = vmul.f32 %v5084, %v5100
    %v5111 = vmul.f32 %v5086, %v5102
    %v5112 = vmul.f32 %v5088, %v5104
    %5117 = vrot.lane.b32.xlu0 %v5109, 96
    %v5118 = vpop.permute.xlu0 %5117
    %5119 = vrot.lane.b32.xlu0 %v5110, 96
    %v5120 = vpop.permute.xlu0 %5119
    %5121 = vrot.lane.b32.xlu0 %v5111, 96
    %v5122 = vpop.permute.xlu0 %5121
    %5123 = vrot.lane.b32.xlu0 %v5112, 96
    %v5124 = vpop.permute.xlu0 %5123
    %v5129 = vadd.f32 %v5063, %v5118
    %v5130 = vadd.f32 %v5068, %v5120
    %v5131 = vadd.f32 %v5073, %v5122
    %v5132 = vadd.f32 %v5078, %v5124
    %v5133 = vmul.f32 %v5129, %v115
    %v5134 = vmul.f32 %v5130, %v116
    %v5135 = vmul.f32 %v5131, %v117
    %v5136 = vmul.f32 %v5132, %v118
    %5137 = vst.msk [vmem:[#allocation2] sm:$0xff] %vm245, %v5133
    %5138 = vst.msk [vmem:[#allocation2 + $0x8] sm:$0xff] %vm245, %v5134
    %5139 = vst.msk [vmem:[#allocation2 + $0x10] sm:$0xff] %vm245, %v5135
    %5140 = vst.msk [vmem:[#allocation2 + $0x18] sm:$0xff] %vm245, %v5136
    // Predicated region
    $region62: #{encoder_forward.1} parent=1 // pred_check
      _
    $region63: #{encoder_forward.1} parent=1 // pred_check_branch
      %5142 = sbr.rel (0) target = $region65
    $region64: #{encoder_forward.1} parent=1 // pred_region
      %s5144 = ssub.s32 512, 512
      %5145 = vsyncadd [#allocation3], %s5144
      %s5146 = sshll.u32 [#allocation2], 4
      %s5147 = int_to_ptr.vmem [resolvable:$true] %s5146
      %5152 = dma.vmem_to_hbm [thread:$0]  %s5147, 512, %s15, [#allocation3], 128, 128, 8
    $region65: #{encoder_forward.1} parent=1 // pred_fallthru
      _
    // Predicated region
    $region66: #{encoder_forward.1} parent=1 // pred_check
      _
    $region67: #{encoder_forward.1} parent=1 // pred_check_branch
      %5154 = sbr.rel (0) target = $region69
    $region68: #{encoder_forward.1} parent=1 // pred_region
      %5155 = dma.done [#allocation3], 512
    $region69: #{encoder_forward.1} parent=1 // pred_fallthru
      _
    %5156 = vsyncpa [#allocation3], 1

</llo_original>
